<compile_context>
chip_gen: v5e
topology: v5e:2x2
jax: 0.10.0
libtpu: 0.0.40
codegen_flags: <defaults>
</compile_context>

<pallas_src>
import functools

import jax
import jax.numpy as jnp
from jax.experimental import pallas as pl
from jax.experimental.pallas import tpu as pltpu


# ----------------------------------------------------------------------------
# Fused kernel (one grid step = NB batch elements):
#   conv3x3(pad=1) -> GN(groups==C) -> GELU   (layer 1, im2col from wrapper)
#   conv3x3(pad=1) -> GN(groups==C) -> GELU   (layer 2, im2col in VMEM)  => skip
#   maxpool 2x2 stride 2 of skip                                         => pooled
# Outputs are stored channel-major: skip (NB, C, H*W), pooled (NB, C, Ho*Wo).
# ----------------------------------------------------------------------------
def _spec_encoder_kernel(p1_ref, w1_ref, w2_ref, g1_ref, be1_ref, g2_ref, be2_ref,
                         skip_ref, pool_ref, pad_ref,
                         *, NB, H, W, Cout, eps, approx_gelu):
    HW = H * W
    Ho, Wo = H // 2, W // 2
    M = NB * HW
    inv_hw = 1.0 / HW

    def gn_gelu(acc, gamma, beta):
        # GroupNorm with groups == channels: per-(sample, channel) stats over H*W.
        # The conv bias was dropped upstream: the per-channel mean subtraction
        # cancels it exactly (valid only because groups == out_channels).
        a = acc.reshape(NB, HW, Cout)
        mean = jnp.sum(a, axis=1, keepdims=True) * inv_hw               # (NB, 1, C)
        d = a - mean
        var = jnp.sum(d * d, axis=1, keepdims=True) * inv_hw            # (NB, 1, C)
        scale = gamma * jax.lax.rsqrt(var + eps)                        # gamma folded in
        y = d * scale + beta
        if approx_gelu:
            c = 0.7978845608028654                                      # sqrt(2/pi) (tanh -> EUP)
            return 0.5 * y * (1.0 + jnp.tanh(c * (y + 0.044715 * y * y * y)))
        # exact erf-based GELU, matching torch.nn.GELU() default
        return 0.5 * y * (1.0 + jax.lax.erf(y * 0.7071067811865476))

    # ---- layer 1: single matmul over the wrapper-built im2col patches (K = 9*Cin) ----
    lhs1 = p1_ref[...].reshape(M, p1_ref.shape[-1])
    acc1 = jnp.dot(lhs1, w1_ref[...], preferred_element_type=jnp.float32)
    y1 = gn_gelu(acc1, g1_ref[...], be1_ref[...])                       # (NB, HW, C) f32

    # ---- stage y1 zero-padded in VMEM for the second conv ----
    # Invariant: the interior [1:H+1, 1:W+1] is fully rewritten every step; only the
    # 1-px border relies on the zero fill (done every step; see header for why it is
    # not hoisted behind program_id(0)==0 on a "parallel" grid axis).
    pad_ref[...] = jnp.zeros(pad_ref.shape, pad_ref.dtype)
    pad_ref[:, pl.ds(1, H), pl.ds(1, W), :] = (
        y1.reshape(NB, H, W, Cout).astype(pad_ref.dtype))

    # ---- layer 2: in-kernel im2col (9 shifted windows concatenated along K = 9*C) ----
    wins = [pad_ref[:, pl.ds(dy, H), pl.ds(dx, W), :].reshape(M, Cout)
            for dy in range(3) for dx in range(3)]                      # order matches w2 rows
    lhs2 = jnp.concatenate(wins, axis=-1)                               # (M, 9*C)
    acc2 = jnp.dot(lhs2, w2_ref[...], preferred_element_type=jnp.float32)
    y2 = gn_gelu(acc2, g2_ref[...], be2_ref[...])                       # (NB, HW, C) f32

    # ---- 2x2 max-pool, vectorized (rows of y2 are p = h*W + w) ----
    v = y2.reshape(NB, Ho, 2, W, Cout)                                  # free leading-dim split
    mh = jnp.maximum(v[:, :, 0], v[:, :, 1])                            # (NB, Ho, W, C) h-pool
    mw = jnp.max(mh.reshape(NB, Ho, Wo, 2, Cout), axis=3)               # (NB, Ho, Wo, C) w-pool
    mw = mw.reshape(NB, Ho * Wo, Cout)

    # ---- channel-major, lane-dense stores (wrapper only reshapes afterwards) ----
    for b in range(NB):                                                 # static unroll
        skip_ref[b] = jnp.transpose(y2[b], (1, 0)).astype(skip_ref.dtype)   # (C, HW)
        pool_ref[b] = jnp.transpose(mw[b], (1, 0)).astype(pool_ref.dtype)   # (C, Ho*Wo)


# ----------------------------------------------------------------------------
# SpecEncoder forward (NCHW in, (pooled, skip) NCHW out — PyTorch semantics)
# ----------------------------------------------------------------------------
def spec_encoder_forward(x_nchw, params, groups, eps=1e-5,
                         matmul_dtype=jnp.float32, nb=None, approx_gelu=False):
    N, Cin, H, W = x_nchw.shape
    Cout = params["w1"].shape[0]
    Ho, Wo = H // 2, W // 2
    HW = H * W
    K1, K2 = 9 * Cin, 9 * Cout
    assert H % 2 == 0 and W % 2 == 0
    # DeepSamplerV2's first encoder stage uses groups == out_channels (= base_ch).
    assert Cout == groups, "fused kernel assumes per-channel GroupNorm (groups == out_channels)"
    # TODO(synk): deeper encoder stages (channels-per-group > 1) need an in-kernel
    # grouped reduction and the conv bias re-added (it no longer cancels exactly).

    if nb is None:
        # Keep the grid length >= 2 (and even) so both v7x TensorCores get work,
        # while batching several N per step to amortize per-step grid overhead.
        nb = N // 2 if (N >= 2 and N % 2 == 0) else 1
    assert N % nb == 0
    grid_len = N // nb

    # ---- layer-1 im2col in the wrapper (tiny: N * HW * 9*Cin elements) ----
    x_nhwc = jnp.transpose(x_nchw, (0, 2, 3, 1)).astype(jnp.float32)
    xpad = jnp.pad(x_nhwc, ((0, 0), (1, 1), (1, 1), (0, 0)))            # pad=1
    patches = jnp.concatenate(
        [xpad[:, dy:dy + H, dx:dx + W, :] for dy in range(3) for dx in range(3)],
        axis=-1).reshape(N, HW, K1).astype(matmul_dtype)

    # OIHW -> (ky, kx, in, out) -> (9*in, out); row order matches the im2col column order.
    w1 = jnp.transpose(params["w1"], (2, 3, 1, 0)).reshape(K1, Cout).astype(matmul_dtype)
    w2 = jnp.transpose(params["w2"], (2, 3, 1, 0)).reshape(K2, Cout).astype(matmul_dtype)
    g1 = params["g1"].reshape(1, Cout).astype(jnp.float32)
    be1 = params["be1"].reshape(1, Cout).astype(jnp.float32)
    g2 = params["g2"].reshape(1, Cout).astype(jnp.float32)
    be2 = params["be2"].reshape(1, Cout).astype(jnp.float32)
    # NOTE: conv biases params["b1"]/["b2"] are deliberately NOT passed: with
    # groups == out_channels they are cancelled exactly by the GN mean subtraction.

    kernel = functools.partial(_spec_encoder_kernel, NB=nb, H=H, W=W, Cout=Cout,
                               eps=float(eps), approx_gelu=approx_gelu)

    flops = 2 * N * HW * (K1 * Cout + K2 * Cout)
    transcendentals = 2 * N * HW * Cout
    bytes_accessed = (patches.size * patches.dtype.itemsize
                      + w1.size * w1.dtype.itemsize + w2.size * w2.dtype.itemsize
                      + 4 * Cout * 4
                      + (N * HW * Cout + N * Ho * Wo * Cout) * 4)

    skip_f, pool_f = pl.pallas_call(
        kernel,
        out_shape=(
            jax.ShapeDtypeStruct((N, Cout, HW), jnp.float32),           # skip, channel-major
            jax.ShapeDtypeStruct((N, Cout, Ho * Wo), jnp.float32),      # pooled, channel-major
        ),
        grid=(grid_len,),
        in_specs=[
            pl.BlockSpec((nb, HW, K1), lambda n: (n, 0, 0)),
            pl.BlockSpec((K1, Cout), lambda n: (0, 0)),
            pl.BlockSpec((K2, Cout), lambda n: (0, 0)),
            pl.BlockSpec((1, Cout), lambda n: (0, 0)),
            pl.BlockSpec((1, Cout), lambda n: (0, 0)),
            pl.BlockSpec((1, Cout), lambda n: (0, 0)),
            pl.BlockSpec((1, Cout), lambda n: (0, 0)),
        ],
        out_specs=(
            pl.BlockSpec((nb, Cout, HW), lambda n: (n, 0, 0)),
            pl.BlockSpec((nb, Cout, Ho * Wo), lambda n: (n, 0, 0)),
        ),
        scratch_shapes=[pltpu.VMEM((nb, H + 2, W + 2, Cout), matmul_dtype)],
        compiler_params=pltpu.CompilerParams(dimension_semantics=("parallel",)),
        cost_estimate=pl.CostEstimate(flops=flops,
                                      transcendentals=transcendentals,
                                      bytes_accessed=bytes_accessed),
    )(patches, w1, w2, g1, be1, g2, be2)

    # Channel-major -> NCHW is a pure reshape: no transpose pass over HBM.
    skip = skip_f.reshape(N, Cout, H, W)
    pooled = pool_f.reshape(N, Cout, Ho, Wo)
    return pooled, skip


# ----------------------------------------------------------------------------
# Pure-JAX reference (for correctness check)
# ----------------------------------------------------------------------------
def ref_forward(x_nchw, params, groups, eps=1e-5):
    def block(x, w, b, g, be):
        y = jax.lax.conv_general_dilated(
            x, w, (1, 1), ((1, 1), (1, 1)),
            dimension_numbers=("NCHW", "OIHW", "NCHW"),
            precision=jax.lax.Precision.HIGHEST)
        y = y + b[None, :, None, None]
        N, C, H, W = y.shape
        yr = y.reshape(N, groups, (C // groups) * H * W)
        mean = yr.mean(axis=2, keepdims=True)
        var = ((yr - mean) ** 2).mean(axis=2, keepdims=True)
        yr = (yr - mean) * jax.lax.rsqrt(var + eps)
        y = yr.reshape(N, C, H, W) * g[None, :, None, None] + be[None, :, None, None]
        return jax.nn.gelu(y, approximate=False)

    x = block(x_nchw, params["w1"], params["b1"], params["g1"], params["be1"])
    x = block(x, params["w2"], params["b2"], params["g2"], params["be2"])
    skip = x
    pooled = jax.lax.reduce_window(x, -jnp.inf, jax.lax.max,
                                   (1, 1, 2, 2), (1, 1, 2, 2), "VALID")
    return pooled, skip


if __name__ == "__main__":
    # Small shapes consistent with the module's first encoder stage:
    # batch=2, in_channels=4, out_channels=32, groups=32, spatial 16x16.
    N, Cin, Cout, G, H, W = 2, 4, 32, 32, 16, 16

    key = jax.random.PRNGKey(0)
    k_x, k_w1, k_b1, k_w2, k_b2, k_g1, k_be1, k_g2, k_be2 = jax.random.split(key, 9)

    x = jax.random.normal(k_x, (N, Cin, H, W), dtype=jnp.float32)
    params = {
        "w1": 0.1 * jax.random.normal(k_w1, (Cout, Cin, 3, 3), dtype=jnp.float32),
        "b1": 0.1 * jax.random.normal(k_b1, (Cout,), dtype=jnp.float32),
        "g1": 1.0 + 0.05 * jax.random.normal(k_g1, (Cout,), dtype=jnp.float32),
        "be1": 0.05 * jax.random.normal(k_be1, (Cout,), dtype=jnp.float32),
        "w2": 0.1 * jax.random.normal(k_w2, (Cout, Cout, 3, 3), dtype=jnp.float32),
        "b2": 0.1 * jax.random.normal(k_b2, (Cout,), dtype=jnp.float32),
        "g2": 1.0 + 0.05 * jax.random.normal(k_g2, (Cout,), dtype=jnp.float32),
        "be2": 0.05 * jax.random.normal(k_be2, (Cout,), dtype=jnp.float32),
    }

    pooled, skip = jax.jit(spec_encoder_forward, static_argnums=2)(x, params, G)
    jax.block_until_ready((pooled, skip))

    assert pooled.shape == (N, Cout, H // 2, W // 2), pooled.shape
    assert skip.shape == (N, Cout, H, W), skip.shape

    pooled_gold, skip_gold = ref_forward(x, params, G)
    assert jnp.allclose(pooled, pooled_gold, atol=2e-3, rtol=2e-3), \
        float(jnp.max(jnp.abs(pooled - pooled_gold)))
    assert jnp.allclose(skip, skip_gold, atol=2e-3, rtol=2e-3), \
        float(jnp.max(jnp.abs(skip - skip_gold)))

    print("KERNEL_OK")
</pallas_src>

<mosaic_0001>
module attributes {stable_mosaic.version = 11 : i64} {
  func.func @_spec_encoder_kernel(%arg0: i32, %arg1: memref<1x256x36xf32, #tpu.memory_space<vmem>>, %arg2: memref<36x32xf32, #tpu.memory_space<vmem>>, %arg3: memref<288x32xf32, #tpu.memory_space<vmem>>, %arg4: memref<1x32xf32, #tpu.memory_space<vmem>>, %arg5: memref<1x32xf32, #tpu.memory_space<vmem>>, %arg6: memref<1x32xf32, #tpu.memory_space<vmem>>, %arg7: memref<1x32xf32, #tpu.memory_space<vmem>>, %arg8: memref<1x32x256xf32, #tpu.memory_space<vmem>>, %arg9: memref<1x32x64xf32, #tpu.memory_space<vmem>>, %arg10: memref<1x18x18x32xf32, #tpu.memory_space<vmem>>) attributes {dimension_semantics = [#tpu.dimension_semantics<parallel>], iteration_bounds = array<i64: 2>, scalar_prefetch = 0 : i64, scratch_operands = 1 : i64, tpu.core_type = #tpu.core_type<tc>, window_params = [{transform_indices = @transform_0, window_bounds = array<i64: 1, 256, 36>}, {pipeline_mode = #tpu.pipeline_mode<synchronous>, transform_indices = @transform_1, window_bounds = array<i64: 36, 32>}, {pipeline_mode = #tpu.pipeline_mode<synchronous>, transform_indices = @transform_2, window_bounds = array<i64: 288, 32>}, {pipeline_mode = #tpu.pipeline_mode<synchronous>, transform_indices = @transform_3, window_bounds = array<i64: 1, 32>}, {pipeline_mode = #tpu.pipeline_mode<synchronous>, transform_indices = @transform_4, window_bounds = array<i64: 1, 32>}, {pipeline_mode = #tpu.pipeline_mode<synchronous>, transform_indices = @transform_5, window_bounds = array<i64: 1, 32>}, {pipeline_mode = #tpu.pipeline_mode<synchronous>, transform_indices = @transform_6, window_bounds = array<i64: 1, 32>}, {transform_indices = @transform_7, window_bounds = array<i64: 1, 32, 256>}, {transform_indices = @transform_8, window_bounds = array<i64: 1, 32, 64>}]} {
    %c0 = arith.constant 0 : index
    %c0_0 = arith.constant 0 : index
    %c0_1 = arith.constant 0 : index
    %0 = vector.load %arg1[%c0, %c0_0, %c0_1] : memref<1x256x36xf32, #tpu.memory_space<vmem>>, vector<1x256x36xf32>
    %1 = vector.shape_cast %0 : vector<1x256x36xf32> to vector<256x36xf32>
    %c0_2 = arith.constant 0 : index
    %c0_3 = arith.constant 0 : index
    %2 = vector.load %arg2[%c0_2, %c0_3] : memref<36x32xf32, #tpu.memory_space<vmem>>, vector<36x32xf32>
    %cst = arith.constant dense<0.000000e+00> : vector<256x32xf32>
    %3 = tpu.matmul %1, %2, %cst {dimension_numbers = #tpu.dot_dimension_numbers<[1], [0], [0], [1], [0, 0, 1, 1], [], []>} : vector<256x36xf32>, vector<36x32xf32>, vector<256x32xf32> -> vector<256x32xf32>
    %c0_4 = arith.constant 0 : index
    %c0_5 = arith.constant 0 : index
    %4 = vector.load %arg4[%c0_4, %c0_5] : memref<1x32xf32, #tpu.memory_space<vmem>>, vector<1x32xf32>
    %c0_6 = arith.constant 0 : index
    %c0_7 = arith.constant 0 : index
    %5 = vector.load %arg5[%c0_6, %c0_7] : memref<1x32xf32, #tpu.memory_space<vmem>>, vector<1x32xf32>
    %6 = vector.shape_cast %3 : vector<256x32xf32> to vector<1x256x32xf32>
    %cst_8 = arith.constant dense<0.000000e+00> : vector<1x32xf32>
    %7 = vector.multi_reduction <add>, %6, %cst_8 [1] : vector<1x256x32xf32> to vector<1x32xf32>
    %8 = vector.shape_cast %7 : vector<1x32xf32> to vector<1x1x32xf32>
    %cst_9 = arith.constant 3.906250e-03 : f32
    %9 = vector.broadcast %cst_9 : f32 to vector<1x1x32xf32>
    %10 = arith.mulf %8, %9 : vector<1x1x32xf32>
    %11 = vector.broadcast %10 : vector<1x1x32xf32> to vector<1x256x32xf32>
    %12 = arith.subf %6, %11 : vector<1x256x32xf32>
    %13 = arith.mulf %12, %12 : vector<1x256x32xf32>
    %cst_10 = arith.constant dense<0.000000e+00> : vector<1x32xf32>
    %14 = vector.multi_reduction <add>, %13, %cst_10 [1] : vector<1x256x32xf32> to vector<1x32xf32>
    %15 = vector.shape_cast %14 : vector<1x32xf32> to vector<1x1x32xf32>
    %cst_11 = arith.constant 3.906250e-03 : f32
    %16 = vector.broadcast %cst_11 : f32 to vector<1x1x32xf32>
    %17 = arith.mulf %15, %16 : vector<1x1x32xf32>
    %cst_12 = arith.constant 9.99999974E-6 : f32
    %18 = vector.broadcast %cst_12 : f32 to vector<1x1x32xf32>
    %19 = arith.addf %17, %18 : vector<1x1x32xf32>
    %20 = math.rsqrt %19 : vector<1x1x32xf32>
    %21 = vector.shape_cast %4 : vector<1x32xf32> to vector<1x1x32xf32>
    %22 = arith.mulf %21, %20 : vector<1x1x32xf32>
    %23 = vector.broadcast %22 : vector<1x1x32xf32> to vector<1x256x32xf32>
    %24 = arith.mulf %12, %23 : vector<1x256x32xf32>
    %25 = vector.shape_cast %5 : vector<1x32xf32> to vector<1x1x32xf32>
    %26 = vector.broadcast %25 : vector<1x1x32xf32> to vector<1x256x32xf32>
    %27 = arith.addf %24, %26 : vector<1x256x32xf32>
    %cst_13 = arith.constant 5.000000e-01 : f32
    %28 = vector.broadcast %cst_13 : f32 to vector<1x256x32xf32>
    %29 = arith.mulf %28, %27 : vector<1x256x32xf32>
    %cst_14 = arith.constant 0.707106769 : f32
    %30 = vector.broadcast %cst_14 : f32 to vector<1x256x32xf32>
    %31 = arith.mulf %27, %30 : vector<1x256x32xf32>
    %32 = math.erf %31 : vector<1x256x32xf32>
    %cst_15 = arith.constant 1.000000e+00 : f32
    %33 = vector.broadcast %cst_15 : f32 to vector<1x256x32xf32>
    %34 = arith.addf %33, %32 : vector<1x256x32xf32>
    %35 = arith.mulf %29, %34 : vector<1x256x32xf32>
    %cst_16 = arith.constant 0.000000e+00 : f32
    %36 = vector.broadcast %cst_16 : f32 to vector<1x18x18x32xf32>
    %c0_17 = arith.constant 0 : index
    %c0_18 = arith.constant 0 : index
    %c0_19 = arith.constant 0 : index
    %c0_20 = arith.constant 0 : index
    %37 = vector.load %arg10[%c0_17, %c0_18, %c0_19, %c0_20] : memref<1x18x18x32xf32, #tpu.memory_space<vmem>>, vector<1x18x18x32xf32>
    tpu.vector_store %arg10[%c0_17, %c0_18, %c0_19, %c0_20], %36 {strides = array<i32>} : memref<1x18x18x32xf32, #tpu.memory_space<vmem>>, vector<1x18x18x32xf32>,
    %38 = vector.shape_cast %35 : vector<1x256x32xf32> to vector<1x16x16x32xf32>
    %c0_21 = arith.constant 0 : index
    %c1 = arith.constant 1 : index
    %c1_22 = arith.constant 1 : index
    %c0_23 = arith.constant 0 : index
    %39 = vector.load %arg10[%c0_21, %c1, %c1_22, %c0_23] : memref<1x18x18x32xf32, #tpu.memory_space<vmem>>, vector<1x16x16x32xf32>
    tpu.vector_store %arg10[%c0_21, %c1, %c1_22, %c0_23], %38 {strides = array<i32>} : memref<1x18x18x32xf32, #tpu.memory_space<vmem>>, vector<1x16x16x32xf32>,
    %c0_24 = arith.constant 0 : index
    %c0_25 = arith.constant 0 : index
    %c0_26 = arith.constant 0 : index
    %c0_27 = arith.constant 0 : index
    %40 = vector.load %arg10[%c0_24, %c0_25, %c0_26, %c0_27] : memref<1x18x18x32xf32, #tpu.memory_space<vmem>>, vector<1x16x16x32xf32>
    %41 = vector.shape_cast %40 : vector<1x16x16x32xf32> to vector<256x32xf32>
    %c0_28 = arith.constant 0 : index
    %c0_29 = arith.constant 0 : index
    %c1_30 = arith.constant 1 : index
    %c0_31 = arith.constant 0 : index
    %42 = vector.load %arg10[%c0_28, %c0_29, %c1_30, %c0_31] : memref<1x18x18x32xf32, #tpu.memory_space<vmem>>, vector<1x16x16x32xf32>
    %43 = vector.shape_cast %42 : vector<1x16x16x32xf32> to vector<256x32xf32>
    %c0_32 = arith.constant 0 : index
    %c0_33 = arith.constant 0 : index
    %c2 = arith.constant 2 : index
    %c0_34 = arith.constant 0 : index
    %44 = vector.load %arg10[%c0_32, %c0_33, %c2, %c0_34] : memref<1x18x18x32xf32, #tpu.memory_space<vmem>>, vector<1x16x16x32xf32>
    %45 = vector.shape_cast %44 : vector<1x16x16x32xf32> to vector<256x32xf32>
    %c0_35 = arith.constant 0 : index
    %c1_36 = arith.constant 1 : index
    %c0_37 = arith.constant 0 : index
    %c0_38 = arith.constant 0 : index
    %46 = vector.load %arg10[%c0_35, %c1_36, %c0_37, %c0_38] : memref<1x18x18x32xf32, #tpu.memory_space<vmem>>, vector<1x16x16x32xf32>
    %47 = vector.shape_cast %46 : vector<1x16x16x32xf32> to vector<256x32xf32>
    %c0_39 = arith.constant 0 : index
    %c1_40 = arith.constant 1 : index
    %c1_41 = arith.constant 1 : index
    %c0_42 = arith.constant 0 : index
    %48 = vector.load %arg10[%c0_39, %c1_40, %c1_41, %c0_42] : memref<1x18x18x32xf32, #tpu.memory_space<vmem>>, vector<1x16x16x32xf32>
    %49 = vector.shape_cast %48 : vector<1x16x16x32xf32> to vector<256x32xf32>
    %c0_43 = arith.constant 0 : index
    %c1_44 = arith.constant 1 : index
    %c2_45 = arith.constant 2 : index
    %c0_46 = arith.constant 0 : index
    %50 = vector.load %arg10[%c0_43, %c1_44, %c2_45, %c0_46] : memref<1x18x18x32xf32, #tpu.memory_space<vmem>>, vector<1x16x16x32xf32>
    %51 = vector.shape_cast %50 : vector<1x16x16x32xf32> to vector<256x32xf32>
    %c0_47 = arith.constant 0 : index
    %c2_48 = arith.constant 2 : index
    %c0_49 = arith.constant 0 : index
    %c0_50 = arith.constant 0 : index
    %52 = vector.load %arg10[%c0_47, %c2_48, %c0_49, %c0_50] : memref<1x18x18x32xf32, #tpu.memory_space<vmem>>, vector<1x16x16x32xf32>
    %53 = vector.shape_cast %52 : vector<1x16x16x32xf32> to vector<256x32xf32>
    %c0_51 = arith.constant 0 : index
    %c2_52 = arith.constant 2 : index
    %c1_53 = arith.constant 1 : index
    %c0_54 = arith.constant 0 : index
    %54 = vector.load %arg10[%c0_51, %c2_52, %c1_53, %c0_54] : memref<1x18x18x32xf32, #tpu.memory_space<vmem>>, vector<1x16x16x32xf32>
    %55 = vector.shape_cast %54 : vector<1x16x16x32xf32> to vector<256x32xf32>
    %c0_55 = arith.constant 0 : index
    %c2_56 = arith.constant 2 : index
    %c2_57 = arith.constant 2 : index
    %c0_58 = arith.constant 0 : index
    %56 = vector.load %arg10[%c0_55, %c2_56, %c2_57, %c0_58] : memref<1x18x18x32xf32, #tpu.memory_space<vmem>>, vector<1x16x16x32xf32>
    %57 = vector.shape_cast %56 : vector<1x16x16x32xf32> to vector<256x32xf32>
    %58 = tpu.concatenate %41, %43, %45, %47, %49, %51, %53, %55, %57 in 1 : vector<256x32xf32>, vector<256x32xf32>, vector<256x32xf32>, vector<256x32xf32>, vector<256x32xf32>, vector<256x32xf32>, vector<256x32xf32>, vector<256x32xf32>, vector<256x32xf32> -> vector<256x288xf32>
    %c0_59 = arith.constant 0 : index
    %c0_60 = arith.constant 0 : index
    %59 = vector.load %arg3[%c0_59, %c0_60] : memref<288x32xf32, #tpu.memory_space<vmem>>, vector<288x32xf32>
    %cst_61 = arith.constant dense<0.000000e+00> : vector<256x32xf32>
    %60 = tpu.matmul %58, %59, %cst_61 {dimension_numbers = #tpu.dot_dimension_numbers<[1], [0], [0], [1], [0, 0, 1, 1], [], []>} : vector<256x288xf32>, vector<288x32xf32>, vector<256x32xf32> -> vector<256x32xf32>
    %c0_62 = arith.constant 0 : index
    %c0_63 = arith.constant 0 : index
    %61 = vector.load %arg6[%c0_62, %c0_63] : memref<1x32xf32, #tpu.memory_space<vmem>>, vector<1x32xf32>
    %c0_64 = arith.constant 0 : index
    %c0_65 = arith.constant 0 : index
    %62 = vector.load %arg7[%c0_64, %c0_65] : memref<1x32xf32, #tpu.memory_space<vmem>>, vector<1x32xf32>
    %63 = vector.shape_cast %60 : vector<256x32xf32> to vector<1x256x32xf32>
    %cst_66 = arith.constant dense<0.000000e+00> : vector<1x32xf32>
    %64 = vector.multi_reduction <add>, %63, %cst_66 [1] : vector<1x256x32xf32> to vector<1x32xf32>
    %65 = vector.shape_cast %64 : vector<1x32xf32> to vector<1x1x32xf32>
    %cst_67 = arith.constant 3.906250e-03 : f32
    %66 = vector.broadcast %cst_67 : f32 to vector<1x1x32xf32>
    %67 = arith.mulf %65, %66 : vector<1x1x32xf32>
    %68 = vector.broadcast %67 : vector<1x1x32xf32> to vector<1x256x32xf32>
    %69 = arith.subf %63, %68 : vector<1x256x32xf32>
    %70 = arith.mulf %69, %69 : vector<1x256x32xf32>
    %cst_68 = arith.constant dense<0.000000e+00> : vector<1x32xf32>
    %71 = vector.multi_reduction <add>, %70, %cst_68 [1] : vector<1x256x32xf32> to vector<1x32xf32>
    %72 = vector.shape_cast %71 : vector<1x32xf32> to vector<1x1x32xf32>
    %cst_69 = arith.constant 3.906250e-03 : f32
    %73 = vector.broadcast %cst_69 : f32 to vector<1x1x32xf32>
    %74 = arith.mulf %72, %73 : vector<1x1x32xf32>
    %cst_70 = arith.constant 9.99999974E-6 : f32
    %75 = vector.broadcast %cst_70 : f32 to vector<1x1x32xf32>
    %76 = arith.addf %74, %75 : vector<1x1x32xf32>
    %77 = math.rsqrt %76 : vector<1x1x32xf32>
    %78 = vector.shape_cast %61 : vector<1x32xf32> to vector<1x1x32xf32>
    %79 = arith.mulf %78, %77 : vector<1x1x32xf32>
    %80 = vector.broadcast %79 : vector<1x1x32xf32> to vector<1x256x32xf32>
    %81 = arith.mulf %69, %80 : vector<1x256x32xf32>
    %82 = vector.shape_cast %62 : vector<1x32xf32> to vector<1x1x32xf32>
    %83 = vector.broadcast %82 : vector<1x1x32xf32> to vector<1x256x32xf32>
    %84 = arith.addf %81, %83 : vector<1x256x32xf32>
    %cst_71 = arith.constant 5.000000e-01 : f32
    %85 = vector.broadcast %cst_71 : f32 to vector<1x256x32xf32>
    %86 = arith.mulf %85, %84 : vector<1x256x32xf32>
    %cst_72 = arith.constant 0.707106769 : f32
    %87 = vector.broadcast %cst_72 : f32 to vector<1x256x32xf32>
    %88 = arith.mulf %84, %87 : vector<1x256x32xf32>
    %89 = math.erf %88 : vector<1x256x32xf32>
    %cst_73 = arith.constant 1.000000e+00 : f32
    %90 = vector.broadcast %cst_73 : f32 to vector<1x256x32xf32>
    %91 = arith.addf %90, %89 : vector<1x256x32xf32>
    %92 = arith.mulf %86, %91 : vector<1x256x32xf32>
    %93 = vector.shape_cast %92 : vector<1x256x32xf32> to vector<1x8x2x16x32xf32>
    %94 = vector.extract_strided_slice %93 {offsets = [0, 0, 0, 0, 0], sizes = [1, 8, 1, 16, 32], strides = [1, 1, 1, 1, 1]} : vector<1x8x2x16x32xf32> to vector<1x8x1x16x32xf32>
    %95 = vector.shape_cast %94 : vector<1x8x1x16x32xf32> to vector<1x8x16x32xf32>
    %96 = vector.extract_strided_slice %93 {offsets = [0, 0, 1, 0, 0], sizes = [1, 8, 1, 16, 32], strides = [1, 1, 1, 1, 1]} : vector<1x8x2x16x32xf32> to vector<1x8x1x16x32xf32>
    %97 = vector.shape_cast %96 : vector<1x8x1x16x32xf32> to vector<1x8x16x32xf32>
    %98 = arith.maximumf %95, %97 : vector<1x8x16x32xf32>
    %99 = vector.shape_cast %98 : vector<1x8x16x32xf32> to vector<1x8x8x2x32xf32>
    %cst_74 = arith.constant dense<0xFF800000> : vector<1x8x8x32xf32>
    %100 = vector.multi_reduction <maximumf>, %99, %cst_74 [3] : vector<1x8x8x2x32xf32> to vector<1x8x8x32xf32>
    %101 = vector.shape_cast %100 : vector<1x8x8x32xf32> to vector<1x64x32xf32>
    %102 = vector.shape_cast %92 : vector<1x256x32xf32> to vector<256x32xf32>
    %103 = tpu.transpose %102, [1, 0] : vector<256x32xf32> -> vector<32x256xf32>
    %c0_75 = arith.constant 0 : index
    %c0_76 = arith.constant 0 : index
    %c0_77 = arith.constant 0 : index
    %104 = vector.load %arg8[%c0_75, %c0_76, %c0_77] : memref<1x32x256xf32, #tpu.memory_space<vmem>>, vector<1x32x256xf32>
    %105 = vector.shape_cast %104 : vector<1x32x256xf32> to vector<32x256xf32>
    %106 = vector.shape_cast %103 : vector<32x256xf32> to vector<1x32x256xf32>
    tpu.vector_store %arg8[%c0_75, %c0_76, %c0_77], %106 {strides = array<i32>} : memref<1x32x256xf32, #tpu.memory_space<vmem>>, vector<1x32x256xf32>,
    %107 = vector.shape_cast %101 : vector<1x64x32xf32> to vector<64x32xf32>
    %108 = tpu.transpose %107, [1, 0] : vector<64x32xf32> -> vector<32x64xf32>
    %c0_78 = arith.constant 0 : index
    %c0_79 = arith.constant 0 : index
    %c0_80 = arith.constant 0 : index
    %109 = vector.load %arg9[%c0_78, %c0_79, %c0_80] : memref<1x32x64xf32, #tpu.memory_space<vmem>>, vector<1x32x64xf32>
    %110 = vector.shape_cast %109 : vector<1x32x64xf32> to vector<32x64xf32>
    %111 = vector.shape_cast %108 : vector<32x64xf32> to vector<1x32x64xf32>
    tpu.vector_store %arg9[%c0_78, %c0_79, %c0_80], %111 {strides = array<i32>} : memref<1x32x64xf32, #tpu.memory_space<vmem>>, vector<1x32x64xf32>,
    return
  }
  func.func @transform_0(%arg0: i32) -> (i32, i32, i32) {
    %c0_i32 = arith.constant 0 : i32
    %c0_i32_0 = arith.constant 0 : i32
    %c0_i32_1 = arith.constant 0 : i32
    return %arg0, %c0_i32, %c0_i32_0 : i32, i32, i32
  }
  func.func @transform_1(%arg0: i32) -> (i32, i32) {
    %c0_i32 = arith.constant 0 : i32
    %c0_i32_0 = arith.constant 0 : i32
    %c0_i32_1 = arith.constant 0 : i32
    return %c0_i32, %c0_i32_0 : i32, i32
  }
  func.func @transform_2(%arg0: i32) -> (i32, i32) {
    %c0_i32 = arith.constant 0 : i32
    %c0_i32_0 = arith.constant 0 : i32
    %c0_i32_1 = arith.constant 0 : i32
    return %c0_i32, %c0_i32_0 : i32, i32
  }
  func.func @transform_3(%arg0: i32) -> (i32, i32) {
    %c0_i32 = arith.constant 0 : i32
    %c0_i32_0 = arith.constant 0 : i32
    %c0_i32_1 = arith.constant 0 : i32
    return %c0_i32, %c0_i32_0 : i32, i32
  }
  func.func @transform_4(%arg0: i32) -> (i32, i32) {
    %c0_i32 = arith.constant 0 : i32
    %c0_i32_0 = arith.constant 0 : i32
    %c0_i32_1 = arith.constant 0 : i32
    return %c0_i32, %c0_i32_0 : i32, i32
  }
  func.func @transform_5(%arg0: i32) -> (i32, i32) {
    %c0_i32 = arith.constant 0 : i32
    %c0_i32_0 = arith.constant 0 : i32
    %c0_i32_1 = arith.constant 0 : i32
    return %c0_i32, %c0_i32_0 : i32, i32
  }
  func.func @transform_6(%arg0: i32) -> (i32, i32) {
    %c0_i32 = arith.constant 0 : i32
    %c0_i32_0 = arith.constant 0 : i32
    %c0_i32_1 = arith.constant 0 : i32
    return %c0_i32, %c0_i32_0 : i32, i32
  }
  func.func @transform_7(%arg0: i32) -> (i32, i32, i32) {
    %c0_i32 = arith.constant 0 : i32
    %c0_i32_0 = arith.constant 0 : i32
    %c0_i32_1 = arith.constant 0 : i32
    return %arg0, %c0_i32, %c0_i32_0 : i32, i32, i32
  }
  func.func @transform_8(%arg0: i32) -> (i32, i32, i32) {
    %c0_i32 = arith.constant 0 : i32
    %c0_i32_0 = arith.constant 0 : i32
    %c0_i32_1 = arith.constant 0 : i32
    return %arg0, %c0_i32, %c0_i32_0 : i32, i32, i32
  }
}

</mosaic_0001>

<llo_original>
// kernel: spec_encoder_forward.1
$region0: #{spec_encoder_forward.1}
  #allocation0 [shape = 'u32[]', space=smem, size = 0x4, offset = 0x4, fixed_abs, tag = 'smem constant byte address 0x4 - core index']
  #allocation1 [shape = 'u32[72,128]{1,0:T(1,128)}', space=vmem, size = 0x9000, scoped, tag = 'internal scratch']
  #allocation2 [shape = 'f32[1,18,18,32]{3,2,1,0:T(8,128)}', space=vmem, size = 0x36000, scoped, tag = 'scratch operand']
  %s0 = inlined_call_operand.vmem [shape: f32[2,256,36], index: 0, kind: input, shape index: {}]
  %s1 = inlined_call_operand.vmem [shape: f32[36,32], index: 1, kind: input, shape index: {}]
  %s2 = inlined_call_operand.vmem [shape: f32[288,32], index: 2, kind: input, shape index: {}]
  %s3 = inlined_call_operand.vmem [shape: f32[1,32], index: 3, kind: input, shape index: {}]
  %s4 = inlined_call_operand.vmem [shape: f32[1,32], index: 4, kind: input, shape index: {}]
  %s5 = inlined_call_operand.vmem [shape: f32[1,32], index: 5, kind: input, shape index: {}]
  %s6 = inlined_call_operand.vmem [shape: f32[1,32], index: 6, kind: input, shape index: {}]
  %s7 = inlined_call_operand.vmem [shape: f32[2,32,256], index: 7, kind: output, shape index: {0}]
  %s8 = inlined_call_operand.vmem [shape: f32[2,32,64], index: 8, kind: output, shape index: {1}]
  %9 = xla_tuple %s7, %s8
  %s10 = sld [smem:[#allocation0]]
  $region69: #{spec_encoder_forward.1} parent=0
    _
  %s12 = ssub.s32 1, %s10
  %s13 = scalar_select 0, %s12, %s10
  loop: start=0, step=1, limit=4
  $region2: #{spec_encoder_forward.1} parent=0 // loop_pre_header
    _
  $region3: #{spec_encoder_forward.1} parent=0 // loop_header
    %s15 = sphi 0, %s19
    %p16 = scmp.ge.s32.totalorder %s15, 4
    %s25 = sphi 0, %s27
    %s28 = sphi 0, %s25
    %s29 = sphi 0, %s28
    %s45 = sphi 0, %s29
    %s49 = sphi 0, %s49
    %s51 = sphi 0, %s49
    %s52 = sphi 0, %s51
    %s66 = sphi 0, %s52
    %s70 = sphi 0, %s70
    %s72 = sphi 0, %s70
    %s73 = sphi 0, %s72
    %s87 = sphi 0, %s73
    %s91 = sphi 0, %s91
    %s93 = sphi 0, %s91
    %s94 = sphi 0, %s93
    %s108 = sphi 0, %s94
    %s112 = sphi 0, %s112
    %s114 = sphi 0, %s112
    %s115 = sphi 0, %s114
    %s129 = sphi 0, %s115
    %s133 = sphi 0, %s133
    %s135 = sphi 0, %s133
    %s136 = sphi 0, %s135
    %s150 = sphi 0, %s136
    %s154 = sphi 0, %s154
    %s156 = sphi 0, %s154
    %s157 = sphi 0, %s156
    %s171 = sphi 0, %s157
    %s177 = sphi 0, %s179
    %s180 = sphi 0, %s177
    %s181 = sphi 0, %s180
    %s197 = sphi 0, %s181
    %s203 = sphi 0, %s205
    %s206 = sphi 0, %s203
    %s207 = sphi 0, %s206
    %s223 = sphi 0, %s207
  $region4: #{spec_encoder_forward.1} parent=0 // loop_header_branch
    %18 = sbr.rel (%p16) target = $region8
  $region5: #{spec_encoder_forward.1} parent=0 // loop_body
    %s20 = ssub.s32 %s15, 1
    %s21 = ssub.s32 %s15, 2
    %s22 = sadd.s32 %s15, 1
    %s23 = ssub.s32 %s15, %s22
    %p24 = scmp.eq.s32.totalorder %s23, 0
    %s26 = sadd.s32 %s25, 1
    %s27 = scalar_select %p24, %s25, %s26
    %p30 = pneg %p24
    %p31 = scmp.eq.s32.totalorder %s15, 1
    %p32 = por %p30, %p31
    %p33 = scmp.ne.s32.totalorder %s25, %s28
    %p34 = scmp.eq.s32.totalorder %s15, 0
    %p35 = por %p33, %p34
    %p36 = scmp.ne.s32.totalorder %s25, %s28
    %p37 = scmp.eq.s32.totalorder %s20, 1
    %p38 = por %p36, %p37
    %p39 = scmp.ne.s32.totalorder %s28, %s29
    %p40 = scmp.eq.s32.totalorder %s20, 0
    %p41 = por %p39, %p40
    %p42 = scmp.ne.s32.totalorder %s28, %s29
    %p43 = scmp.eq.s32.totalorder %s21, 1
    %p44 = por %p42, %p43
    %p46 = scmp.ne.s32.totalorder %s29, %s45
    %p47 = scmp.eq.s32.totalorder %s21, 0
    %p48 = por %p46, %p47
    %s50 = sadd.s32 %s49, 1
    %p53 = scmp.eq.s32.totalorder %s15, 1
    %p54 = scmp.ne.s32.totalorder %s49, %s51
    %p55 = scmp.eq.s32.totalorder %s15, 0
    %p56 = por %p54, %p55
    %p57 = scmp.ne.s32.totalorder %s49, %s51
    %p58 = scmp.eq.s32.totalorder %s20, 1
    %p59 = por %p57, %p58
    %p60 = scmp.ne.s32.totalorder %s51, %s52
    %p61 = scmp.eq.s32.totalorder %s20, 0
    %p62 = por %p60, %p61
    %p63 = scmp.ne.s32.totalorder %s51, %s52
    %p64 = scmp.eq.s32.totalorder %s21, 1
    %p65 = por %p63, %p64
    %p67 = scmp.ne.s32.totalorder %s52, %s66
    %p68 = scmp.eq.s32.totalorder %s21, 0
    %p69 = por %p67, %p68
    %s71 = sadd.s32 %s70, 1
    %p74 = scmp.eq.s32.totalorder %s15, 1
    %p75 = scmp.ne.s32.totalorder %s70, %s72
    %p76 = scmp.eq.s32.totalorder %s15, 0
    %p77 = por %p75, %p76
    %p78 = scmp.ne.s32.totalorder %s70, %s72
    %p79 = scmp.eq.s32.totalorder %s20, 1
    %p80 = por %p78, %p79
    %p81 = scmp.ne.s32.totalorder %s72, %s73
    %p82 = scmp.eq.s32.totalorder %s20, 0
    %p83 = por %p81, %p82
    %p84 = scmp.ne.s32.totalorder %s72, %s73
    %p85 = scmp.eq.s32.totalorder %s21, 1
    %p86 = por %p84, %p85
    %p88 = scmp.ne.s32.totalorder %s73, %s87
    %p89 = scmp.eq.s32.totalorder %s21, 0
    %p90 = por %p88, %p89
    %s92 = sadd.s32 %s91, 1
    %p95 = scmp.eq.s32.totalorder %s15, 1
    %p96 = scmp.ne.s32.totalorder %s91, %s93
    %p97 = scmp.eq.s32.totalorder %s15, 0
    %p98 = por %p96, %p97
    %p99 = scmp.ne.s32.totalorder %s91, %s93
    %p100 = scmp.eq.s32.totalorder %s20, 1
    %p101 = por %p99, %p100
    %p102 = scmp.ne.s32.totalorder %s93, %s94
    %p103 = scmp.eq.s32.totalorder %s20, 0
    %p104 = por %p102, %p103
    %p105 = scmp.ne.s32.totalorder %s93, %s94
    %p106 = scmp.eq.s32.totalorder %s21, 1
    %p107 = por %p105, %p106
    %p109 = scmp.ne.s32.totalorder %s94, %s108
    %p110 = scmp.eq.s32.totalorder %s21, 0
    %p111 = por %p109, %p110
    %s113 = sadd.s32 %s112, 1
    %p116 = scmp.eq.s32.totalorder %s15, 1
    %p117 = scmp.ne.s32.totalorder %s112, %s114
    %p118 = scmp.eq.s32.totalorder %s15, 0
    %p119 = por %p117, %p118
    %p120 = scmp.ne.s32.totalorder %s112, %s114
    %p121 = scmp.eq.s32.totalorder %s20, 1
    %p122 = por %p120, %p121
    %p123 = scmp.ne.s32.totalorder %s114, %s115
    %p124 = scmp.eq.s32.totalorder %s20, 0
    %p125 = por %p123, %p124
    %p126 = scmp.ne.s32.totalorder %s114, %s115
    %p127 = scmp.eq.s32.totalorder %s21, 1
    %p128 = por %p126, %p127
    %p130 = scmp.ne.s32.totalorder %s115, %s129
    %p131 = scmp.eq.s32.totalorder %s21, 0
    %p132 = por %p130, %p131
    %s134 = sadd.s32 %s133, 1
    %p137 = scmp.eq.s32.totalorder %s15, 1
    %p138 = scmp.ne.s32.totalorder %s133, %s135
    %p139 = scmp.eq.s32.totalorder %s15, 0
    %p140 = por %p138, %p139
    %p141 = scmp.ne.s32.totalorder %s133, %s135
    %p142 = scmp.eq.s32.totalorder %s20, 1
    %p143 = por %p141, %p142
    %p144 = scmp.ne.s32.totalorder %s135, %s136
    %p145 = scmp.eq.s32.totalorder %s20, 0
    %p146 = por %p144, %p145
    %p147 = scmp.ne.s32.totalorder %s135, %s136
    %p148 = scmp.eq.s32.totalorder %s21, 1
    %p149 = por %p147, %p148
    %p151 = scmp.ne.s32.totalorder %s136, %s150
    %p152 = scmp.eq.s32.totalorder %s21, 0
    %p153 = por %p151, %p152
    %s155 = sadd.s32 %s154, 1
    %p158 = scmp.eq.s32.totalorder %s15, 1
    %p159 = scmp.ne.s32.totalorder %s154, %s156
    %p160 = scmp.eq.s32.totalorder %s15, 0
    %p161 = por %p159, %p160
    %p162 = scmp.ne.s32.totalorder %s154, %s156
    %p163 = scmp.eq.s32.totalorder %s20, 1
    %p164 = por %p162, %p163
    %p165 = scmp.ne.s32.totalorder %s156, %s157
    %p166 = scmp.eq.s32.totalorder %s20, 0
    %p167 = por %p165, %p166
    %p168 = scmp.ne.s32.totalorder %s156, %s157
    %p169 = scmp.eq.s32.totalorder %s21, 1
    %p170 = por %p168, %p169
    %p172 = scmp.ne.s32.totalorder %s157, %s171
    %p173 = scmp.eq.s32.totalorder %s21, 0
    %p174 = por %p172, %p173
    %s175 = ssub.s32 %s15, %s22
    %p176 = scmp.eq.s32.totalorder %s175, 0
    %s178 = sadd.s32 %s177, 1
    %s179 = scalar_select %p176, %s177, %s178
    %p182 = pneg %p176
    %p183 = scmp.eq.s32.totalorder %s15, 1
    %p184 = por %p182, %p183
    %p185 = scmp.ne.s32.totalorder %s177, %s180
    %p186 = scmp.eq.s32.totalorder %s15, 0
    %p187 = por %p185, %p186
    %p188 = scmp.ne.s32.totalorder %s177, %s180
    %p189 = scmp.eq.s32.totalorder %s20, 1
    %p190 = por %p188, %p189
    %p191 = scmp.ne.s32.totalorder %s180, %s181
    %p192 = scmp.eq.s32.totalorder %s20, 0
    %p193 = por %p191, %p192
    %p194 = scmp.ne.s32.totalorder %s180, %s181
    %p195 = scmp.eq.s32.totalorder %s21, 1
    %p196 = por %p194, %p195
    %p198 = scmp.ne.s32.totalorder %s181, %s197
    %p199 = scmp.eq.s32.totalorder %s21, 0
    %p200 = por %p198, %p199
    %s201 = ssub.s32 %s15, %s22
    %p202 = scmp.eq.s32.totalorder %s201, 0
    %s204 = sadd.s32 %s203, 1
    %s205 = scalar_select %p202, %s203, %s204
    %p208 = pneg %p202
    %p209 = scmp.eq.s32.totalorder %s15, 1
    %p210 = por %p208, %p209
    %p211 = scmp.ne.s32.totalorder %s203, %s206
    %p212 = scmp.eq.s32.totalorder %s15, 0
    %p213 = por %p211, %p212
    %p214 = scmp.ne.s32.totalorder %s203, %s206
    %p215 = scmp.eq.s32.totalorder %s20, 1
    %p216 = por %p214, %p215
    %p217 = scmp.ne.s32.totalorder %s206, %s207
    %p218 = scmp.eq.s32.totalorder %s20, 0
    %p219 = por %p217, %p218
    %p220 = scmp.ne.s32.totalorder %s206, %s207
    %p221 = scmp.eq.s32.totalorder %s21, 1
    %p222 = por %p220, %p221
    %p224 = scmp.ne.s32.totalorder %s207, %s223
    %p225 = scmp.eq.s32.totalorder %s21, 0
    %p226 = por %p224, %p225
    %p227 = scmp.le.s32.totalorder 1, %s15
    %p228 = scmp.lt.s32.totalorder %s15, 3
    %p229 = pnand %p227, %p228
    %p230 = pneg %p229
    // Predicated region
    $region9: #{spec_encoder_forward.1} parent=5 // pred_check
      _
    $region10: #{spec_encoder_forward.1} parent=5 // pred_check_branch
      %232 = sbr.rel (%p229) target = $region12
    $region11: #{spec_encoder_forward.1} parent=5 // pred_region
      %s233 = ssub.s32 %s15, 1
      // Predicated region
      $region13: #{spec_encoder_forward.1} parent=11 // pred_check
        %p234 = pneg %p62
      $region14: #{spec_encoder_forward.1} parent=11 // pred_check_branch
        %236 = sbr.rel (%p234) target = $region16
      $region15: #{spec_encoder_forward.1} parent=11 // pred_region
        _
      $region16: #{spec_encoder_forward.1} parent=11 // pred_fallthru
        _
      // Predicated region
      $region17: #{spec_encoder_forward.1} parent=11 // pred_check
        %p237 = pneg %p83
      $region18: #{spec_encoder_forward.1} parent=11 // pred_check_branch
        %239 = sbr.rel (%p237) target = $region20
      $region19: #{spec_encoder_forward.1} parent=11 // pred_region
        _
      $region20: #{spec_encoder_forward.1} parent=11 // pred_fallthru
        _
      // Predicated region
      $region21: #{spec_encoder_forward.1} parent=11 // pred_check
        %p240 = pneg %p104
      $region22: #{spec_encoder_forward.1} parent=11 // pred_check_branch
        %242 = sbr.rel (%p240) target = $region24
      $region23: #{spec_encoder_forward.1} parent=11 // pred_region
        _
      $region24: #{spec_encoder_forward.1} parent=11 // pred_fallthru
        _
      // Predicated region
      $region25: #{spec_encoder_forward.1} parent=11 // pred_check
        %p243 = pneg %p125
      $region26: #{spec_encoder_forward.1} parent=11 // pred_check_branch
        %245 = sbr.rel (%p243) target = $region28
      $region27: #{spec_encoder_forward.1} parent=11 // pred_region
        _
      $region28: #{spec_encoder_forward.1} parent=11 // pred_fallthru
        _
      // Predicated region
      $region29: #{spec_encoder_forward.1} parent=11 // pred_check
        %p246 = pneg %p146
      $region30: #{spec_encoder_forward.1} parent=11 // pred_check_branch
        %248 = sbr.rel (%p246) target = $region32
      $region31: #{spec_encoder_forward.1} parent=11 // pred_region
        _
      $region32: #{spec_encoder_forward.1} parent=11 // pred_fallthru
        _
      // Predicated region
      $region33: #{spec_encoder_forward.1} parent=11 // pred_check
        %p249 = pneg %p167
      $region34: #{spec_encoder_forward.1} parent=11 // pred_check_branch
        %251 = sbr.rel (%p249) target = $region36
      $region35: #{spec_encoder_forward.1} parent=11 // pred_region
        _
      $region36: #{spec_encoder_forward.1} parent=11 // pred_fallthru
        _
    $region12: #{spec_encoder_forward.1} parent=5 // pred_fallthru
      _
    %p252 = scmp.lt.s32.totalorder %s15, 2
    // Predicated region
    $region37: #{spec_encoder_forward.1} parent=5 // pred_check
      %p253 = pneg %p252
    $region38: #{spec_encoder_forward.1} parent=5 // pred_check_branch
      %255 = sbr.rel (%p253) target = $region40
    $region39: #{spec_encoder_forward.1} parent=5 // pred_region
      // Predicated region
      $region41: #{spec_encoder_forward.1} parent=39 // pred_check
        %p256 = pneg %p35
      $region42: #{spec_encoder_forward.1} parent=39 // pred_check_branch
        %258 = sbr.rel (%p256) target = $region44
      $region43: #{spec_encoder_forward.1} parent=39 // pred_region
        %p259 = scmp.lt.s32.totalorder %s15, 1
        %s260 = scalar_select %p259, %s15, 1
        %s261 = smul.addr %s260, 32
        %s262 = smul.addr %s261, 8
        %s263 = scalar_lea.vmem %s0, %s262
      $region44: #{spec_encoder_forward.1} parent=39 // pred_fallthru
        _
    $region40: #{spec_encoder_forward.1} parent=5 // pred_fallthru
      _
    %p264 = scmp.le.s32.totalorder 1, %s15
    %p265 = scmp.lt.s32.totalorder %s15, 3
    %p266 = pnand %p264, %p265
    %p267 = pneg %p266
    // Predicated region
    $region45: #{spec_encoder_forward.1} parent=5 // pred_check
      _
    $region46: #{spec_encoder_forward.1} parent=5 // pred_check_branch
      %269 = sbr.rel (%p266) target = $region48
    $region47: #{spec_encoder_forward.1} parent=5 // pred_region
      %s270 = ssub.s32 %s15, 1
      %p271 = scmp.lt.s32.totalorder %s20, 1
      %s272 = scalar_select %p271, %s20, 1
      %s273 = smul.addr %s272, 32
      %s274 = smul.addr %s273, 8
      %s275 = scalar_lea.vmem %s0, %s274
      %p276 = pneg %p41
      %p277 = pneg %p38
      %p278 = pneg %p62
      %p279 = pneg %p59
      %p280 = pneg %p83
      %p281 = pneg %p80
      %p282 = pneg %p104
      %p283 = pneg %p101
      %p284 = pneg %p125
      %p285 = pneg %p122
      %p286 = pneg %p146
      %p287 = pneg %p143
      %p288 = pneg %p167
      %p289 = pneg %p164
      %p290 = pneg %p193
      %p291 = pneg %p190
      %p292 = scmp.lt.s32.totalorder %s20, 1
      %s293 = scalar_select %p292, %s20, 1
      %s294 = smul.addr %s293, 8
      %s295 = smul.addr %s294, 8
      %s296 = scalar_lea.vmem %s7, %s295
      %p297 = pneg %p219
      %p298 = pneg %p216
      %p299 = scmp.lt.s32.totalorder %s20, 1
      %s300 = scalar_select %p299, %s20, 1
      %s301 = smul.addr %s300, 4
      %s302 = smul.addr %s301, 8
      %s303 = scalar_lea.vmem %s8, %s302
      %p304 = scmp.lt.s32.totalorder %s20, 1
      %s305 = scalar_select %p304, %s20, 1
      %s306 = smul.addr %s305, 32
      %s307 = smul.addr %s306, 8
      %s308 = scalar_lea.vmem %s0, %s307
      %p309 = scmp.lt.s32.totalorder %s20, 1
      %s310 = scalar_select %p309, %s20, 1
      %s311 = smul.addr %s310, 8
      %s312 = smul.addr %s311, 8
      %s313 = scalar_lea.vmem %s7, %s312
      %p314 = scmp.lt.s32.totalorder %s20, 1
      %s315 = scalar_select %p314, %s20, 1
      %s316 = smul.addr %s315, 4
      %s317 = smul.addr %s316, 8
      %s318 = scalar_lea.vmem %s8, %s317
      %v319 = vld [vmem:[%s308] sm:$0xff]
      %v320 = vld [vmem:[%s308 + $0x8] sm:$0xff]
      %v321 = vld [vmem:[%s308 + $0x10] sm:$0xff]
      %v322 = vld [vmem:[%s308 + $0x18] sm:$0xff]
      %v323 = vld [vmem:[%s308 + $0x20] sm:$0xff]
      %v324 = vld [vmem:[%s308 + $0x28] sm:$0xff]
      %v325 = vld [vmem:[%s308 + $0x30] sm:$0xff]
      %v326 = vld [vmem:[%s308 + $0x38] sm:$0xff]
      %v327 = vld [vmem:[%s308 + $0x40] sm:$0xff]
      %v328 = vld [vmem:[%s308 + $0x48] sm:$0xff]
      %v329 = vld [vmem:[%s308 + $0x50] sm:$0xff]
      %v330 = vld [vmem:[%s308 + $0x58] sm:$0xff]
      %v331 = vld [vmem:[%s308 + $0x60] sm:$0xff]
      %v332 = vld [vmem:[%s308 + $0x68] sm:$0xff]
      %v333 = vld [vmem:[%s308 + $0x70] sm:$0xff]
      %v334 = vld [vmem:[%s308 + $0x78] sm:$0xff]
      %v335 = vld [vmem:[%s308 + $0x80] sm:$0xff]
      %v336 = vld [vmem:[%s308 + $0x88] sm:$0xff]
      %v337 = vld [vmem:[%s308 + $0x90] sm:$0xff]
      %v338 = vld [vmem:[%s308 + $0x98] sm:$0xff]
      %v339 = vld [vmem:[%s308 + $0xa0] sm:$0xff]
      %v340 = vld [vmem:[%s308 + $0xa8] sm:$0xff]
      %v341 = vld [vmem:[%s308 + $0xb0] sm:$0xff]
      %v342 = vld [vmem:[%s308 + $0xb8] sm:$0xff]
      %v343 = vld [vmem:[%s308 + $0xc0] sm:$0xff]
      %v344 = vld [vmem:[%s308 + $0xc8] sm:$0xff]
      %v345 = vld [vmem:[%s308 + $0xd0] sm:$0xff]
      %v346 = vld [vmem:[%s308 + $0xd8] sm:$0xff]
      %v347 = vld [vmem:[%s308 + $0xe0] sm:$0xff]
      %v348 = vld [vmem:[%s308 + $0xe8] sm:$0xff]
      %v349 = vld [vmem:[%s308 + $0xf0] sm:$0xff]
      %v350 = vld [vmem:[%s308 + $0xf8] sm:$0xff]
      %v351 = vld [vmem:[%s1] sm:$0xff]
      %v352 = vld [vmem:[%s1 + $0x8] sm:$0xff]
      %v353 = vld [vmem:[%s1 + $0x10] sm:$0xff]
      %v354 = vld [vmem:[%s1 + $0x18] sm:$0xff]
      %v355 = vld [vmem:[%s1 + $0x20] sm:$0xf]
      %vm356 = vcmask 293888
      %v358 = vsel %vm356, %v319, 0
      %v361 = vsel %vm356, %v320, 0
      %v364 = vsel %vm356, %v321, 0
      %v367 = vsel %vm356, %v322, 0
      %v370 = vsel %vm356, %v323, 0
      %v373 = vsel %vm356, %v324, 0
      %v376 = vsel %vm356, %v325, 0
      %v379 = vsel %vm356, %v326, 0
      %v382 = vsel %vm356, %v327, 0
      %v385 = vsel %vm356, %v328, 0
      %v388 = vsel %vm356, %v329, 0
      %v391 = vsel %vm356, %v330, 0
      %v394 = vsel %vm356, %v331, 0
      %v397 = vsel %vm356, %v332, 0
      %v400 = vsel %vm356, %v333, 0
      %v403 = vsel %vm356, %v334, 0
      %v406 = vsel %vm356, %v335, 0
      %v409 = vsel %vm356, %v336, 0
      %v412 = vsel %vm356, %v337, 0
      %v415 = vsel %vm356, %v338, 0
      %v418 = vsel %vm356, %v339, 0
      %v421 = vsel %vm356, %v340, 0
      %v424 = vsel %vm356, %v341, 0
      %v427 = vsel %vm356, %v342, 0
      %v430 = vsel %vm356, %v343, 0
      %v433 = vsel %vm356, %v344, 0
      %v436 = vsel %vm356, %v345, 0
      %v439 = vsel %vm356, %v346, 0
      %v442 = vsel %vm356, %v347, 0
      %v445 = vsel %vm356, %v348, 0
      %v448 = vsel %vm356, %v349, 0
      %v451 = vsel %vm356, %v350, 0
      %vm453 = vcmask 1043456
      %v455 = vsel %vm453, %v355, 0
      %457 = vmatpush.msra.mxu0 0.0
      %458 = vmatpush.msra.mxu0 0.0
      %459 = vmatpush.msra.mxu0 0.0
      %460 = vmatpush.msra.mxu0 0.0
      %461 = vmatpush.msra.mxu0 0.0
      %462 = vmatpush.msra.mxu0 0.0
      %463 = vmatpush.msra.mxu0 0.0
      %464 = vmatpush.msra.mxu0 0.0
      %465 = vmatpush.msra.mxu0 0.0
      %466 = vmatpush.msra.mxu0 0.0
      %467 = vmatpush.msra.mxu0 0.0
      %468 = vmatpush.msra.mxu0 %v455
      %469 = vmatpush.msra.mxu0 %v354
      %470 = vmatpush.msra.mxu0 %v353
      %471 = vmatpush.msra.mxu0 %v352
      %472 = vmatpush.msra.mxu0 %v351
      %473 = vmatmul.f32.gmra.mxu0 %v358
      %v474 = vpop.f32.mrf.mxu0
      %v475 = vadd.f32 0.0, %v474
      %476 = vmatmul.f32.gmra.mxu0 %v361
      %v477 = vpop.f32.mrf.mxu0
      %v478 = vadd.f32 0.0, %v477
      %479 = vmatmul.f32.gmra.mxu0 %v364
      %v480 = vpop.f32.mrf.mxu0
      %v481 = vadd.f32 0.0, %v480
      %482 = vmatmul.f32.gmra.mxu0 %v367
      %v483 = vpop.f32.mrf.mxu0
      %v484 = vadd.f32 0.0, %v483
      %485 = vmatmul.f32.gmra.mxu0 %v370
      %v486 = vpop.f32.mrf.mxu0
      %v487 = vadd.f32 0.0, %v486
      %488 = vmatmul.f32.gmra.mxu0 %v373
      %v489 = vpop.f32.mrf.mxu0
      %v490 = vadd.f32 0.0, %v489
      %491 = vmatmul.f32.gmra.mxu0 %v376
      %v492 = vpop.f32.mrf.mxu0
      %v493 = vadd.f32 0.0, %v492
      %494 = vmatmul.f32.gmra.mxu0 %v379
      %v495 = vpop.f32.mrf.mxu0
      %v496 = vadd.f32 0.0, %v495
      %497 = vmatmul.f32.gmra.mxu0 %v382
      %v498 = vpop.f32.mrf.mxu0
      %v499 = vadd.f32 0.0, %v498
      %500 = vmatmul.f32.gmra.mxu0 %v385
      %v501 = vpop.f32.mrf.mxu0
      %v502 = vadd.f32 0.0, %v501
      %503 = vmatmul.f32.gmra.mxu0 %v388
      %v504 = vpop.f32.mrf.mxu0
      %v505 = vadd.f32 0.0, %v504
      %506 = vmatmul.f32.gmra.mxu0 %v391
      %v507 = vpop.f32.mrf.mxu0
      %v508 = vadd.f32 0.0, %v507
      %509 = vmatmul.f32.gmra.mxu0 %v394
      %v510 = vpop.f32.mrf.mxu0
      %v511 = vadd.f32 0.0, %v510
      %512 = vmatmul.f32.gmra.mxu0 %v397
      %v513 = vpop.f32.mrf.mxu0
      %v514 = vadd.f32 0.0, %v513
      %515 = vmatmul.f32.gmra.mxu0 %v400
      %v516 = vpop.f32.mrf.mxu0
      %v517 = vadd.f32 0.0, %v516
      %518 = vmatmul.f32.gmra.mxu0 %v403
      %v519 = vpop.f32.mrf.mxu0
      %v520 = vadd.f32 0.0, %v519
      %521 = vmatmul.f32.gmra.mxu0 %v406
      %v522 = vpop.f32.mrf.mxu0
      %v523 = vadd.f32 0.0, %v522
      %524 = vmatmul.f32.gmra.mxu0 %v409
      %v525 = vpop.f32.mrf.mxu0
      %v526 = vadd.f32 0.0, %v525
      %527 = vmatmul.f32.gmra.mxu0 %v412
      %v528 = vpop.f32.mrf.mxu0
      %v529 = vadd.f32 0.0, %v528
      %530 = vmatmul.f32.gmra.mxu0 %v415
      %v531 = vpop.f32.mrf.mxu0
      %v532 = vadd.f32 0.0, %v531
      %533 = vmatmul.f32.gmra.mxu0 %v418
      %v534 = vpop.f32.mrf.mxu0
      %v535 = vadd.f32 0.0, %v534
      %536 = vmatmul.f32.gmra.mxu0 %v421
      %v537 = vpop.f32.mrf.mxu0
      %v538 = vadd.f32 0.0, %v537
      %539 = vmatmul.f32.gmra.mxu0 %v424
      %v540 = vpop.f32.mrf.mxu0
      %v541 = vadd.f32 0.0, %v540
      %542 = vmatmul.f32.gmra.mxu0 %v427
      %v543 = vpop.f32.mrf.mxu0
      %v544 = vadd.f32 0.0, %v543
      %545 = vmatmul.f32.gmra.mxu0 %v430
      %v546 = vpop.f32.mrf.mxu0
      %v547 = vadd.f32 0.0, %v546
      %548 = vmatmul.f32.gmra.mxu0 %v433
      %v549 = vpop.f32.mrf.mxu0
      %v550 = vadd.f32 0.0, %v549
      %551 = vmatmul.f32.gmra.mxu0 %v436
      %v552 = vpop.f32.mrf.mxu0
      %v553 = vadd.f32 0.0, %v552
      %554 = vmatmul.f32.gmra.mxu0 %v439
      %v555 = vpop.f32.mrf.mxu0
      %v556 = vadd.f32 0.0, %v555
      %557 = vmatmul.f32.gmra.mxu0 %v442
      %v558 = vpop.f32.mrf.mxu0
      %v559 = vadd.f32 0.0, %v558
      %560 = vmatmul.f32.gmra.mxu0 %v445
      %v561 = vpop.f32.mrf.mxu0
      %v562 = vadd.f32 0.0, %v561
      %563 = vmatmul.f32.gmra.mxu0 %v448
      %v564 = vpop.f32.mrf.mxu0
      %v565 = vadd.f32 0.0, %v564
      %566 = vmatmul.f32.gmra.mxu0 %v451
      %v567 = vpop.f32.mrf.mxu0
      %v568 = vadd.f32 0.0, %v567
      %569 = vdwg.mxu0
      %v570 = vld [vmem:[%s3] sm:$0x1]
      %v571 = vld [vmem:[%s4] sm:$0x1]
      %vm572 = vcmask 261120
      %v573 = vsel %vm572, %v475, 0.0
      %v574 = vsel %vm572, %v478, 0.0
      %v575 = vadd.f32 %v573, %v574
      %v576 = vsel %vm572, %v481, 0.0
      %v577 = vadd.f32 %v575, %v576
      %v578 = vsel %vm572, %v484, 0.0
      %v579 = vadd.f32 %v577, %v578
      %v580 = vsel %vm572, %v487, 0.0
      %v581 = vadd.f32 %v579, %v580
      %v582 = vsel %vm572, %v490, 0.0
      %v583 = vadd.f32 %v581, %v582
      %v584 = vsel %vm572, %v493, 0.0
      %v585 = vadd.f32 %v583, %v584
      %v586 = vsel %vm572, %v496, 0.0
      %v587 = vadd.f32 %v585, %v586
      %v588 = vsel %vm572, %v499, 0.0
      %v589 = vadd.f32 %v587, %v588
      %v590 = vsel %vm572, %v502, 0.0
      %v591 = vadd.f32 %v589, %v590
      %v592 = vsel %vm572, %v505, 0.0
      %v593 = vadd.f32 %v591, %v592
      %v594 = vsel %vm572, %v508, 0.0
      %v595 = vadd.f32 %v593, %v594
      %v596 = vsel %vm572, %v511, 0.0
      %v597 = vadd.f32 %v595, %v596
      %v598 = vsel %vm572, %v514, 0.0
      %v599 = vadd.f32 %v597, %v598
      %v600 = vsel %vm572, %v517, 0.0
      %v601 = vadd.f32 %v599, %v600
      %v602 = vsel %vm572, %v520, 0.0
      %v603 = vadd.f32 %v601, %v602
      %v604 = vsel %vm572, %v523, 0.0
      %v605 = vadd.f32 %v603, %v604
      %v606 = vsel %vm572, %v526, 0.0
      %v607 = vadd.f32 %v605, %v606
      %v608 = vsel %vm572, %v529, 0.0
      %v609 = vadd.f32 %v607, %v608
      %v610 = vsel %vm572, %v532, 0.0
      %v611 = vadd.f32 %v609, %v610
      %v612 = vsel %vm572, %v535, 0.0
      %v613 = vadd.f32 %v611, %v612
      %v614 = vsel %vm572, %v538, 0.0
      %v615 = vadd.f32 %v613, %v614
      %v616 = vsel %vm572, %v541, 0.0
      %v617 = vadd.f32 %v615, %v616
      %v618 = vsel %vm572, %v544, 0.0
      %v619 = vadd.f32 %v617, %v618
      %v620 = vsel %vm572, %v547, 0.0
      %v621 = vadd.f32 %v619, %v620
      %v622 = vsel %vm572, %v550, 0.0
      %v623 = vadd.f32 %v621, %v622
      %v624 = vsel %vm572, %v553, 0.0
      %v625 = vadd.f32 %v623, %v624
      %v626 = vsel %vm572, %v556, 0.0
      %v627 = vadd.f32 %v625, %v626
      %v628 = vsel %vm572, %v559, 0.0
      %v629 = vadd.f32 %v627, %v628
      %v630 = vsel %vm572, %v562, 0.0
      %v631 = vadd.f32 %v629, %v630
      %v632 = vsel %vm572, %v565, 0.0
      %v633 = vadd.f32 %v631, %v632
      %v634 = vsel %vm572, %v568, 0.0
      %v635 = vadd.f32 %v633, %v634
      %v636 = vrot.slane %v635, 4
      %v637 = vadd.f32 %v635, %v636
      %v638 = vrot.slane %v637, 2
      %v639 = vadd.f32 %v637, %v638
      %v640 = vrot.slane %v639, 1
      %v641 = vadd.f32 %v639, %v640
      %v642 = vmul.f32 %v641, 0.00390625
      %v643 = vsub.f32 %v475, %v642
      %v644 = vsub.f32 %v478, %v642
      %v645 = vsub.f32 %v481, %v642
      %v646 = vsub.f32 %v484, %v642
      %v647 = vsub.f32 %v487, %v642
      %v648 = vsub.f32 %v490, %v642
      %v649 = vsub.f32 %v493, %v642
      %v650 = vsub.f32 %v496, %v642
      %v651 = vsub.f32 %v499, %v642
      %v652 = vsub.f32 %v502, %v642
      %v653 = vsub.f32 %v505, %v642
      %v654 = vsub.f32 %v508, %v642
      %v655 = vsub.f32 %v511, %v642
      %v656 = vsub.f32 %v514, %v642
      %v657 = vsub.f32 %v517, %v642
      %v658 = vsub.f32 %v520, %v642
      %v659 = vsub.f32 %v523, %v642
      %v660 = vsub.f32 %v526, %v642
      %v661 = vsub.f32 %v529, %v642
      %v662 = vsub.f32 %v532, %v642
      %v663 = vsub.f32 %v535, %v642
      %v664 = vsub.f32 %v538, %v642
      %v665 = vsub.f32 %v541, %v642
      %v666 = vsub.f32 %v544, %v642
      %v667 = vsub.f32 %v547, %v642
      %v668 = vsub.f32 %v550, %v642
      %v669 = vsub.f32 %v553, %v642
      %v670 = vsub.f32 %v556, %v642
      %v671 = vsub.f32 %v559, %v642
      %v672 = vsub.f32 %v562, %v642
      %v673 = vsub.f32 %v565, %v642
      %v674 = vsub.f32 %v568, %v642
      %v675 = vmul.f32 %v643, %v643
      %v676 = vmul.f32 %v644, %v644
      %v677 = vmul.f32 %v645, %v645
      %v678 = vmul.f32 %v646, %v646
      %v679 = vmul.f32 %v647, %v647
      %v680 = vmul.f32 %v648, %v648
      %v681 = vmul.f32 %v649, %v649
      %v682 = vmul.f32 %v650, %v650
      %v683 = vmul.f32 %v651, %v651
      %v684 = vmul.f32 %v652, %v652
      %v685 = vmul.f32 %v653, %v653
      %v686 = vmul.f32 %v654, %v654
      %v687 = vmul.f32 %v655, %v655
      %v688 = vmul.f32 %v656, %v656
      %v689 = vmul.f32 %v657, %v657
      %v690 = vmul.f32 %v658, %v658
      %v691 = vmul.f32 %v659, %v659
      %v692 = vmul.f32 %v660, %v660
      %v693 = vmul.f32 %v661, %v661
      %v694 = vmul.f32 %v662, %v662
      %v695 = vmul.f32 %v663, %v663
      %v696 = vmul.f32 %v664, %v664
      %v697 = vmul.f32 %v665, %v665
      %v698 = vmul.f32 %v666, %v666
      %v699 = vmul.f32 %v667, %v667
      %v700 = vmul.f32 %v668, %v668
      %v701 = vmul.f32 %v669, %v669
      %v702 = vmul.f32 %v670, %v670
      %v703 = vmul.f32 %v671, %v671
      %v704 = vmul.f32 %v672, %v672
      %v705 = vmul.f32 %v673, %v673
      %v706 = vmul.f32 %v674, %v674
      %v707 = vsel %vm572, %v675, 0.0
      %v708 = vsel %vm572, %v676, 0.0
      %v709 = vadd.f32 %v707, %v708
      %v710 = vsel %vm572, %v677, 0.0
      %v711 = vadd.f32 %v709, %v710
      %v712 = vsel %vm572, %v678, 0.0
      %v713 = vadd.f32 %v711, %v712
      %v714 = vsel %vm572, %v679, 0.0
      %v715 = vadd.f32 %v713, %v714
      %v716 = vsel %vm572, %v680, 0.0
      %v717 = vadd.f32 %v715, %v716
      %v718 = vsel %vm572, %v681, 0.0
      %v719 = vadd.f32 %v717, %v718
      %v720 = vsel %vm572, %v682, 0.0
      %v721 = vadd.f32 %v719, %v720
      %v722 = vsel %vm572, %v683, 0.0
      %v723 = vadd.f32 %v721, %v722
      %v724 = vsel %vm572, %v684, 0.0
      %v725 = vadd.f32 %v723, %v724
      %v726 = vsel %vm572, %v685, 0.0
      %v727 = vadd.f32 %v725, %v726
      %v728 = vsel %vm572, %v686, 0.0
      %v729 = vadd.f32 %v727, %v728
      %v730 = vsel %vm572, %v687, 0.0
      %v731 = vadd.f32 %v729, %v730
      %v732 = vsel %vm572, %v688, 0.0
      %v733 = vadd.f32 %v731, %v732
      %v734 = vsel %vm572, %v689, 0.0
      %v735 = vadd.f32 %v733, %v734
      %v736 = vsel %vm572, %v690, 0.0
      %v737 = vadd.f32 %v735, %v736
      %v738 = vsel %vm572, %v691, 0.0
      %v739 = vadd.f32 %v737, %v738
      %v740 = vsel %vm572, %v692, 0.0
      %v741 = vadd.f32 %v739, %v740
      %v742 = vsel %vm572, %v693, 0.0
      %v743 = vadd.f32 %v741, %v742
      %v744 = vsel %vm572, %v694, 0.0
      %v745 = vadd.f32 %v743, %v744
      %v746 = vsel %vm572, %v695, 0.0
      %v747 = vadd.f32 %v745, %v746
      %v748 = vsel %vm572, %v696, 0.0
      %v749 = vadd.f32 %v747, %v748
      %v750 = vsel %vm572, %v697, 0.0
      %v751 = vadd.f32 %v749, %v750
      %v752 = vsel %vm572, %v698, 0.0
      %v753 = vadd.f32 %v751, %v752
      %v754 = vsel %vm572, %v699, 0.0
      %v755 = vadd.f32 %v753, %v754
      %v756 = vsel %vm572, %v700, 0.0
      %v757 = vadd.f32 %v755, %v756
      %v758 = vsel %vm572, %v701, 0.0
      %v759 = vadd.f32 %v757, %v758
      %v760 = vsel %vm572, %v702, 0.0
      %v761 = vadd.f32 %v759, %v760
      %v762 = vsel %vm572, %v703, 0.0
      %v763 = vadd.f32 %v761, %v762
      %v764 = vsel %vm572, %v704, 0.0
      %v765 = vadd.f32 %v763, %v764
      %v766 = vsel %vm572, %v705, 0.0
      %v767 = vadd.f32 %v765, %v766
      %v768 = vsel %vm572, %v706, 0.0
      %v769 = vadd.f32 %v767, %v768
      %v770 = vrot.slane %v769, 4
      %v771 = vadd.f32 %v769, %v770
      %v772 = vrot.slane %v771, 2
      %v773 = vadd.f32 %v771, %v772
      %v774 = vrot.slane %v773, 1
      %v775 = vadd.f32 %v773, %v774
      %v776 = vmul.f32 %v775, 0.00390625
      %v777 = vadd.f32 %v776, 1e-05
      %v778 = vrsqrt.pop %v777
      %v779 = vmul.f32 %v778, %v777
      %v780 = vmul.f32 %v779, %v778
      %v781 = vmul.f32 0.5, %v780
      %v782 = vsub.f32 1.5, %v781
      %v783 = vmul.f32 %v778, %v782
      %vm784 = vweird.f32 %v777
      %vm785 = vweird.f32 %v778
      %vm786 = vmor %vm784, %vm785
      %v787 = vsel %vm786, %v778, %v783
      %v788 = vmul.f32 %v570, %v787
      %v790 = vperm.slane %v788, 0
      %v792 = vmul.f32 %v643, %v790
      %v793 = vmul.f32 %v644, %v790
      %v794 = vmul.f32 %v645, %v790
      %v795 = vmul.f32 %v646, %v790
      %v796 = vmul.f32 %v647, %v790
      %v797 = vmul.f32 %v648, %v790
      %v798 = vmul.f32 %v649, %v790
      %v799 = vmul.f32 %v650, %v790
      %v800 = vmul.f32 %v651, %v790
      %v801 = vmul.f32 %v652, %v790
      %v802 = vmul.f32 %v653, %v790
      %v803 = vmul.f32 %v654, %v790
      %v804 = vmul.f32 %v655, %v790
      %v805 = vmul.f32 %v656, %v790
      %v806 = vmul.f32 %v657, %v790
      %v807 = vmul.f32 %v658, %v790
      %v808 = vmul.f32 %v659, %v790
      %v809 = vmul.f32 %v660, %v790
      %v810 = vmul.f32 %v661, %v790
      %v811 = vmul.f32 %v662, %v790
      %v812 = vmul.f32 %v663, %v790
      %v813 = vmul.f32 %v664, %v790
      %v814 = vmul.f32 %v665, %v790
      %v815 = vmul.f32 %v666, %v790
      %v816 = vmul.f32 %v667, %v790
      %v817 = vmul.f32 %v668, %v790
      %v818 = vmul.f32 %v669, %v790
      %v819 = vmul.f32 %v670, %v790
      %v820 = vmul.f32 %v671, %v790
      %v821 = vmul.f32 %v672, %v790
      %v822 = vmul.f32 %v673, %v790
      %v823 = vmul.f32 %v674, %v790
      %v825 = vperm.slane %v571, 0
      %v827 = vadd.f32 %v792, %v825
      %v828 = vadd.f32 %v793, %v825
      %v829 = vadd.f32 %v794, %v825
      %v830 = vadd.f32 %v795, %v825
      %v831 = vadd.f32 %v796, %v825
      %v832 = vadd.f32 %v797, %v825
      %v833 = vadd.f32 %v798, %v825
      %v834 = vadd.f32 %v799, %v825
      %v835 = vadd.f32 %v800, %v825
      %v836 = vadd.f32 %v801, %v825
      %v837 = vadd.f32 %v802, %v825
      %v838 = vadd.f32 %v803, %v825
      %v839 = vadd.f32 %v804, %v825
      %v840 = vadd.f32 %v805, %v825
      %v841 = vadd.f32 %v806, %v825
      %v842 = vadd.f32 %v807, %v825
      %v843 = vadd.f32 %v808, %v825
      %v844 = vadd.f32 %v809, %v825
      %v845 = vadd.f32 %v810, %v825
      %v846 = vadd.f32 %v811, %v825
      %v847 = vadd.f32 %v812, %v825
      %v848 = vadd.f32 %v813, %v825
      %v849 = vadd.f32 %v814, %v825
      %v850 = vadd.f32 %v815, %v825
      %v851 = vadd.f32 %v816, %v825
      %v852 = vadd.f32 %v817, %v825
      %v853 = vadd.f32 %v818, %v825
      %v854 = vadd.f32 %v819, %v825
      %v855 = vadd.f32 %v820, %v825
      %v856 = vadd.f32 %v821, %v825
      %v857 = vadd.f32 %v822, %v825
      %v858 = vadd.f32 %v823, %v825
      %v859 = vmul.f32 %v827, 0.5
      %v860 = vmul.f32 %v828, 0.5
      %v861 = vmul.f32 %v829, 0.5
      %v862 = vmul.f32 %v830, 0.5
      %v863 = vmul.f32 %v831, 0.5
      %v864 = vmul.f32 %v832, 0.5
      %v865 = vmul.f32 %v833, 0.5
      %v866 = vmul.f32 %v834, 0.5
      %v867 = vmul.f32 %v835, 0.5
      %v868 = vmul.f32 %v836, 0.5
      %v869 = vmul.f32 %v837, 0.5
      %v870 = vmul.f32 %v838, 0.5
      %v871 = vmul.f32 %v839, 0.5
      %v872 = vmul.f32 %v840, 0.5
      %v873 = vmul.f32 %v841, 0.5
      %v874 = vmul.f32 %v842, 0.5
      %v875 = vmul.f32 %v843, 0.5
      %v876 = vmul.f32 %v844, 0.5
      %v877 = vmul.f32 %v845, 0.5
      %v878 = vmul.f32 %v846, 0.5
      %v879 = vmul.f32 %v847, 0.5
      %v880 = vmul.f32 %v848, 0.5
      %v881 = vmul.f32 %v849, 0.5
      %v882 = vmul.f32 %v850, 0.5
      %v883 = vmul.f32 %v851, 0.5
      %v884 = vmul.f32 %v852, 0.5
      %v885 = vmul.f32 %v853, 0.5
      %v886 = vmul.f32 %v854, 0.5
      %v887 = vmul.f32 %v855, 0.5
      %v888 = vmul.f32 %v856, 0.5
      %v889 = vmul.f32 %v857, 0.5
      %v890 = vmul.f32 %v858, 0.5
      %v891 = vmul.f32 %v827, 0.70710677
      %v892 = vmul.f32 %v828, 0.70710677
      %v893 = vmul.f32 %v829, 0.70710677
      %v894 = vmul.f32 %v830, 0.70710677
      %v895 = vmul.f32 %v831, 0.70710677
      %v896 = vmul.f32 %v832, 0.70710677
      %v897 = vmul.f32 %v833, 0.70710677
      %v898 = vmul.f32 %v834, 0.70710677
      %v899 = vmul.f32 %v835, 0.70710677
      %v900 = vmul.f32 %v836, 0.70710677
      %v901 = vmul.f32 %v837, 0.70710677
      %v902 = vmul.f32 %v838, 0.70710677
      %v903 = vmul.f32 %v839, 0.70710677
      %v904 = vmul.f32 %v840, 0.70710677
      %v905 = vmul.f32 %v841, 0.70710677
      %v906 = vmul.f32 %v842, 0.70710677
      %v907 = vmul.f32 %v843, 0.70710677
      %v908 = vmul.f32 %v844, 0.70710677
      %v909 = vmul.f32 %v845, 0.70710677
      %v910 = vmul.f32 %v846, 0.70710677
      %v911 = vmul.f32 %v847, 0.70710677
      %v912 = vmul.f32 %v848, 0.70710677
      %v913 = vmul.f32 %v849, 0.70710677
      %v914 = vmul.f32 %v850, 0.70710677
      %v915 = vmul.f32 %v851, 0.70710677
      %v916 = vmul.f32 %v852, 0.70710677
      %v917 = vmul.f32 %v853, 0.70710677
      %v918 = vmul.f32 %v854, 0.70710677
      %v919 = vmul.f32 %v855, 0.70710677
      %v920 = vmul.f32 %v856, 0.70710677
      %v921 = vmul.f32 %v857, 0.70710677
      %v922 = vmul.f32 %v858, 0.70710677
      %v923 = vmul.f32 %v891, %v891
      %v924 = vmin.f32 16.0, %v923
      %v925 = vmul.f32 %v924, 2.1237322e-06
      %v926 = vadd.f32 %v925, 0.00028619796
      %v927 = vmul.f32 %v924, %v926
      %v928 = vadd.f32 %v927, 0.0036580483
      %v929 = vmul.f32 %v924, %v928
      %v930 = vadd.f32 %v929, 0.05243302
      %v931 = vmul.f32 %v924, %v930
      %v932 = vadd.f32 %v931, 0.18741608
      %v933 = vmul.f32 %v924, %v932
      %v934 = vadd.f32 %v933, 1.1283791
      %v935 = vmul.f32 %v891, %v934
      %v936 = vmul.f32 %v924, 3.8918573e-05
      %v937 = vadd.f32 %v936, 0.001143296
      %v938 = vmul.f32 %v924, %v937
      %v939 = vadd.f32 %v938, 0.014752088
      %v940 = vmul.f32 %v924, %v939
      %v941 = vadd.f32 %v940, 0.112945676
      %v942 = vmul.f32 %v924, %v941
      %v943 = vadd.f32 %v942, 0.4994258
      %v944 = vmul.f32 %v924, %v943
      %v945 = vadd.f32 %v944, 1.0
      %v946 = vrcp.pop %v945
      %v947 = vmul.f32 %v945, %v946
      %v948 = vsub.f32 1.0, %v947
      %v949 = vmul.f32 %v946, %v948
      %v950 = vadd.f32 %v946, %v949
      %vm951 = vweird.f32 %v945
      %vm952 = vweird.f32 %v946
      %vm953 = vmor %vm951, %vm952
      %v954 = vsel %vm953, %v946, %v950
      %v955 = vand.u32 2147483647, %v945
      %vm956 = vcmp.eq.f32.partialorder %v955, 8.507059e+37
      %v957 = vand.u32 %v945, 2147483648
      %v958 = vor.u32 1.1754944e-38, %v957
      %v959 = vsel %vm956, %v958, %v954
      %v960 = vmul.f32 %v935, %v959
      %v961 = vmin.f32 %v960, 1.0
      %v962 = vmax.f32 %v961, -1.0
      %v963 = vmul.f32 %v892, %v892
      %v964 = vmin.f32 16.0, %v963
      %v965 = vmul.f32 %v964, 2.1237322e-06
      %v966 = vadd.f32 %v965, 0.00028619796
      %v967 = vmul.f32 %v964, %v966
      %v968 = vadd.f32 %v967, 0.0036580483
      %v969 = vmul.f32 %v964, %v968
      %v970 = vadd.f32 %v969, 0.05243302
      %v971 = vmul.f32 %v964, %v970
      %v972 = vadd.f32 %v971, 0.18741608
      %v973 = vmul.f32 %v964, %v972
      %v974 = vadd.f32 %v973, 1.1283791
      %v975 = vmul.f32 %v892, %v974
      %v976 = vmul.f32 %v964, 3.8918573e-05
      %v977 = vadd.f32 %v976, 0.001143296
      %v978 = vmul.f32 %v964, %v977
      %v979 = vadd.f32 %v978, 0.014752088
      %v980 = vmul.f32 %v964, %v979
      %v981 = vadd.f32 %v980, 0.112945676
      %v982 = vmul.f32 %v964, %v981
      %v983 = vadd.f32 %v982, 0.4994258
      %v984 = vmul.f32 %v964, %v983
      %v985 = vadd.f32 %v984, 1.0
      %v986 = vrcp.pop %v985
      %v987 = vmul.f32 %v985, %v986
      %v988 = vsub.f32 1.0, %v987
      %v989 = vmul.f32 %v986, %v988
      %v990 = vadd.f32 %v986, %v989
      %vm991 = vweird.f32 %v985
      %vm992 = vweird.f32 %v986
      %vm993 = vmor %vm991, %vm992
      %v994 = vsel %vm993, %v986, %v990
      %v995 = vand.u32 2147483647, %v985
      %vm996 = vcmp.eq.f32.partialorder %v995, 8.507059e+37
      %v997 = vand.u32 %v985, 2147483648
      %v998 = vor.u32 1.1754944e-38, %v997
      %v999 = vsel %vm996, %v998, %v994
      %v1000 = vmul.f32 %v975, %v999
      %v1001 = vmin.f32 %v1000, 1.0
      %v1002 = vmax.f32 %v1001, -1.0
      %v1003 = vmul.f32 %v893, %v893
      %v1004 = vmin.f32 16.0, %v1003
      %v1005 = vmul.f32 %v1004, 2.1237322e-06
      %v1006 = vadd.f32 %v1005, 0.00028619796
      %v1007 = vmul.f32 %v1004, %v1006
      %v1008 = vadd.f32 %v1007, 0.0036580483
      %v1009 = vmul.f32 %v1004, %v1008
      %v1010 = vadd.f32 %v1009, 0.05243302
      %v1011 = vmul.f32 %v1004, %v1010
      %v1012 = vadd.f32 %v1011, 0.18741608
      %v1013 = vmul.f32 %v1004, %v1012
      %v1014 = vadd.f32 %v1013, 1.1283791
      %v1015 = vmul.f32 %v893, %v1014
      %v1016 = vmul.f32 %v1004, 3.8918573e-05
      %v1017 = vadd.f32 %v1016, 0.001143296
      %v1018 = vmul.f32 %v1004, %v1017
      %v1019 = vadd.f32 %v1018, 0.014752088
      %v1020 = vmul.f32 %v1004, %v1019
      %v1021 = vadd.f32 %v1020, 0.112945676
      %v1022 = vmul.f32 %v1004, %v1021
      %v1023 = vadd.f32 %v1022, 0.4994258
      %v1024 = vmul.f32 %v1004, %v1023
      %v1025 = vadd.f32 %v1024, 1.0
      %v1026 = vrcp.pop %v1025
      %v1027 = vmul.f32 %v1025, %v1026
      %v1028 = vsub.f32 1.0, %v1027
      %v1029 = vmul.f32 %v1026, %v1028
      %v1030 = vadd.f32 %v1026, %v1029
      %vm1031 = vweird.f32 %v1025
      %vm1032 = vweird.f32 %v1026
      %vm1033 = vmor %vm1031, %vm1032
      %v1034 = vsel %vm1033, %v1026, %v1030
      %v1035 = vand.u32 2147483647, %v1025
      %vm1036 = vcmp.eq.f32.partialorder %v1035, 8.507059e+37
      %v1037 = vand.u32 %v1025, 2147483648
      %v1038 = vor.u32 1.1754944e-38, %v1037
      %v1039 = vsel %vm1036, %v1038, %v1034
      %v1040 = vmul.f32 %v1015, %v1039
      %v1041 = vmin.f32 %v1040, 1.0
      %v1042 = vmax.f32 %v1041, -1.0
      %v1043 = vmul.f32 %v894, %v894
      %v1044 = vmin.f32 16.0, %v1043
      %v1045 = vmul.f32 %v1044, 2.1237322e-06
      %v1046 = vadd.f32 %v1045, 0.00028619796
      %v1047 = vmul.f32 %v1044, %v1046
      %v1048 = vadd.f32 %v1047, 0.0036580483
      %v1049 = vmul.f32 %v1044, %v1048
      %v1050 = vadd.f32 %v1049, 0.05243302
      %v1051 = vmul.f32 %v1044, %v1050
      %v1052 = vadd.f32 %v1051, 0.18741608
      %v1053 = vmul.f32 %v1044, %v1052
      %v1054 = vadd.f32 %v1053, 1.1283791
      %v1055 = vmul.f32 %v894, %v1054
      %v1056 = vmul.f32 %v1044, 3.8918573e-05
      %v1057 = vadd.f32 %v1056, 0.001143296
      %v1058 = vmul.f32 %v1044, %v1057
      %v1059 = vadd.f32 %v1058, 0.014752088
      %v1060 = vmul.f32 %v1044, %v1059
      %v1061 = vadd.f32 %v1060, 0.112945676
      %v1062 = vmul.f32 %v1044, %v1061
      %v1063 = vadd.f32 %v1062, 0.4994258
      %v1064 = vmul.f32 %v1044, %v1063
      %v1065 = vadd.f32 %v1064, 1.0
      %v1066 = vrcp.pop %v1065
      %v1067 = vmul.f32 %v1065, %v1066
      %v1068 = vsub.f32 1.0, %v1067
      %v1069 = vmul.f32 %v1066, %v1068
      %v1070 = vadd.f32 %v1066, %v1069
      %vm1071 = vweird.f32 %v1065
      %vm1072 = vweird.f32 %v1066
      %vm1073 = vmor %vm1071, %vm1072
      %v1074 = vsel %vm1073, %v1066, %v1070
      %v1075 = vand.u32 2147483647, %v1065
      %vm1076 = vcmp.eq.f32.partialorder %v1075, 8.507059e+37
      %v1077 = vand.u32 %v1065, 2147483648
      %v1078 = vor.u32 1.1754944e-38, %v1077
      %v1079 = vsel %vm1076, %v1078, %v1074
      %v1080 = vmul.f32 %v1055, %v1079
      %v1081 = vmin.f32 %v1080, 1.0
      %v1082 = vmax.f32 %v1081, -1.0
      %v1083 = vmul.f32 %v895, %v895
      %v1084 = vmin.f32 16.0, %v1083
      %v1085 = vmul.f32 %v1084, 2.1237322e-06
      %v1086 = vadd.f32 %v1085, 0.00028619796
      %v1087 = vmul.f32 %v1084, %v1086
      %v1088 = vadd.f32 %v1087, 0.0036580483
      %v1089 = vmul.f32 %v1084, %v1088
      %v1090 = vadd.f32 %v1089, 0.05243302
      %v1091 = vmul.f32 %v1084, %v1090
      %v1092 = vadd.f32 %v1091, 0.18741608
      %v1093 = vmul.f32 %v1084, %v1092
      %v1094 = vadd.f32 %v1093, 1.1283791
      %v1095 = vmul.f32 %v895, %v1094
      %v1096 = vmul.f32 %v1084, 3.8918573e-05
      %v1097 = vadd.f32 %v1096, 0.001143296
      %v1098 = vmul.f32 %v1084, %v1097
      %v1099 = vadd.f32 %v1098, 0.014752088
      %v1100 = vmul.f32 %v1084, %v1099
      %v1101 = vadd.f32 %v1100, 0.112945676
      %v1102 = vmul.f32 %v1084, %v1101
      %v1103 = vadd.f32 %v1102, 0.4994258
      %v1104 = vmul.f32 %v1084, %v1103
      %v1105 = vadd.f32 %v1104, 1.0
      %v1106 = vrcp.pop %v1105
      %v1107 = vmul.f32 %v1105, %v1106
      %v1108 = vsub.f32 1.0, %v1107
      %v1109 = vmul.f32 %v1106, %v1108
      %v1110 = vadd.f32 %v1106, %v1109
      %vm1111 = vweird.f32 %v1105
      %vm1112 = vweird.f32 %v1106
      %vm1113 = vmor %vm1111, %vm1112
      %v1114 = vsel %vm1113, %v1106, %v1110
      %v1115 = vand.u32 2147483647, %v1105
      %vm1116 = vcmp.eq.f32.partialorder %v1115, 8.507059e+37
      %v1117 = vand.u32 %v1105, 2147483648
      %v1118 = vor.u32 1.1754944e-38, %v1117
      %v1119 = vsel %vm1116, %v1118, %v1114
      %v1120 = vmul.f32 %v1095, %v1119
      %v1121 = vmin.f32 %v1120, 1.0
      %v1122 = vmax.f32 %v1121, -1.0
      %v1123 = vmul.f32 %v896, %v896
      %v1124 = vmin.f32 16.0, %v1123
      %v1125 = vmul.f32 %v1124, 2.1237322e-06
      %v1126 = vadd.f32 %v1125, 0.00028619796
      %v1127 = vmul.f32 %v1124, %v1126
      %v1128 = vadd.f32 %v1127, 0.0036580483
      %v1129 = vmul.f32 %v1124, %v1128
      %v1130 = vadd.f32 %v1129, 0.05243302
      %v1131 = vmul.f32 %v1124, %v1130
      %v1132 = vadd.f32 %v1131, 0.18741608
      %v1133 = vmul.f32 %v1124, %v1132
      %v1134 = vadd.f32 %v1133, 1.1283791
      %v1135 = vmul.f32 %v896, %v1134
      %v1136 = vmul.f32 %v1124, 3.8918573e-05
      %v1137 = vadd.f32 %v1136, 0.001143296
      %v1138 = vmul.f32 %v1124, %v1137
      %v1139 = vadd.f32 %v1138, 0.014752088
      %v1140 = vmul.f32 %v1124, %v1139
      %v1141 = vadd.f32 %v1140, 0.112945676
      %v1142 = vmul.f32 %v1124, %v1141
      %v1143 = vadd.f32 %v1142, 0.4994258
      %v1144 = vmul.f32 %v1124, %v1143
      %v1145 = vadd.f32 %v1144, 1.0
      %v1146 = vrcp.pop %v1145
      %v1147 = vmul.f32 %v1145, %v1146
      %v1148 = vsub.f32 1.0, %v1147
      %v1149 = vmul.f32 %v1146, %v1148
      %v1150 = vadd.f32 %v1146, %v1149
      %vm1151 = vweird.f32 %v1145
      %vm1152 = vweird.f32 %v1146
      %vm1153 = vmor %vm1151, %vm1152
      %v1154 = vsel %vm1153, %v1146, %v1150
      %v1155 = vand.u32 2147483647, %v1145
      %vm1156 = vcmp.eq.f32.partialorder %v1155, 8.507059e+37
      %v1157 = vand.u32 %v1145, 2147483648
      %v1158 = vor.u32 1.1754944e-38, %v1157
      %v1159 = vsel %vm1156, %v1158, %v1154
      %v1160 = vmul.f32 %v1135, %v1159
      %v1161 = vmin.f32 %v1160, 1.0
      %v1162 = vmax.f32 %v1161, -1.0
      %v1163 = vmul.f32 %v897, %v897
      %v1164 = vmin.f32 16.0, %v1163
      %v1165 = vmul.f32 %v1164, 2.1237322e-06
      %v1166 = vadd.f32 %v1165, 0.00028619796
      %v1167 = vmul.f32 %v1164, %v1166
      %v1168 = vadd.f32 %v1167, 0.0036580483
      %v1169 = vmul.f32 %v1164, %v1168
      %v1170 = vadd.f32 %v1169, 0.05243302
      %v1171 = vmul.f32 %v1164, %v1170
      %v1172 = vadd.f32 %v1171, 0.18741608
      %v1173 = vmul.f32 %v1164, %v1172
      %v1174 = vadd.f32 %v1173, 1.1283791
      %v1175 = vmul.f32 %v897, %v1174
      %v1176 = vmul.f32 %v1164, 3.8918573e-05
      %v1177 = vadd.f32 %v1176, 0.001143296
      %v1178 = vmul.f32 %v1164, %v1177
      %v1179 = vadd.f32 %v1178, 0.014752088
      %v1180 = vmul.f32 %v1164, %v1179
      %v1181 = vadd.f32 %v1180, 0.112945676
      %v1182 = vmul.f32 %v1164, %v1181
      %v1183 = vadd.f32 %v1182, 0.4994258
      %v1184 = vmul.f32 %v1164, %v1183
      %v1185 = vadd.f32 %v1184, 1.0
      %v1186 = vrcp.pop %v1185
      %v1187 = vmul.f32 %v1185, %v1186
      %v1188 = vsub.f32 1.0, %v1187
      %v1189 = vmul.f32 %v1186, %v1188
      %v1190 = vadd.f32 %v1186, %v1189
      %vm1191 = vweird.f32 %v1185
      %vm1192 = vweird.f32 %v1186
      %vm1193 = vmor %vm1191, %vm1192
      %v1194 = vsel %vm1193, %v1186, %v1190
      %v1195 = vand.u32 2147483647, %v1185
      %vm1196 = vcmp.eq.f32.partialorder %v1195, 8.507059e+37
      %v1197 = vand.u32 %v1185, 2147483648
      %v1198 = vor.u32 1.1754944e-38, %v1197
      %v1199 = vsel %vm1196, %v1198, %v1194
      %v1200 = vmul.f32 %v1175, %v1199
      %v1201 = vmin.f32 %v1200, 1.0
      %v1202 = vmax.f32 %v1201, -1.0
      %v1203 = vmul.f32 %v898, %v898
      %v1204 = vmin.f32 16.0, %v1203
      %v1205 = vmul.f32 %v1204, 2.1237322e-06
      %v1206 = vadd.f32 %v1205, 0.00028619796
      %v1207 = vmul.f32 %v1204, %v1206
      %v1208 = vadd.f32 %v1207, 0.0036580483
      %v1209 = vmul.f32 %v1204, %v1208
      %v1210 = vadd.f32 %v1209, 0.05243302
      %v1211 = vmul.f32 %v1204, %v1210
      %v1212 = vadd.f32 %v1211, 0.18741608
      %v1213 = vmul.f32 %v1204, %v1212
      %v1214 = vadd.f32 %v1213, 1.1283791
      %v1215 = vmul.f32 %v898, %v1214
      %v1216 = vmul.f32 %v1204, 3.8918573e-05
      %v1217 = vadd.f32 %v1216, 0.001143296
      %v1218 = vmul.f32 %v1204, %v1217
      %v1219 = vadd.f32 %v1218, 0.014752088
      %v1220 = vmul.f32 %v1204, %v1219
      %v1221 = vadd.f32 %v1220, 0.112945676
      %v1222 = vmul.f32 %v1204, %v1221
      %v1223 = vadd.f32 %v1222, 0.4994258
      %v1224 = vmul.f32 %v1204, %v1223
      %v1225 = vadd.f32 %v1224, 1.0
      %v1226 = vrcp.pop %v1225
      %v1227 = vmul.f32 %v1225, %v1226
      %v1228 = vsub.f32 1.0, %v1227
      %v1229 = vmul.f32 %v1226, %v1228
      %v1230 = vadd.f32 %v1226, %v1229
      %vm1231 = vweird.f32 %v1225
      %vm1232 = vweird.f32 %v1226
      %vm1233 = vmor %vm1231, %vm1232
      %v1234 = vsel %vm1233, %v1226, %v1230
      %v1235 = vand.u32 2147483647, %v1225
      %vm1236 = vcmp.eq.f32.partialorder %v1235, 8.507059e+37
      %v1237 = vand.u32 %v1225, 2147483648
      %v1238 = vor.u32 1.1754944e-38, %v1237
      %v1239 = vsel %vm1236, %v1238, %v1234
      %v1240 = vmul.f32 %v1215, %v1239
      %v1241 = vmin.f32 %v1240, 1.0
      %v1242 = vmax.f32 %v1241, -1.0
      %v1243 = vmul.f32 %v899, %v899
      %v1244 = vmin.f32 16.0, %v1243
      %v1245 = vmul.f32 %v1244, 2.1237322e-06
      %v1246 = vadd.f32 %v1245, 0.00028619796
      %v1247 = vmul.f32 %v1244, %v1246
      %v1248 = vadd.f32 %v1247, 0.0036580483
      %v1249 = vmul.f32 %v1244, %v1248
      %v1250 = vadd.f32 %v1249, 0.05243302
      %v1251 = vmul.f32 %v1244, %v1250
      %v1252 = vadd.f32 %v1251, 0.18741608
      %v1253 = vmul.f32 %v1244, %v1252
      %v1254 = vadd.f32 %v1253, 1.1283791
      %v1255 = vmul.f32 %v899, %v1254
      %v1256 = vmul.f32 %v1244, 3.8918573e-05
      %v1257 = vadd.f32 %v1256, 0.001143296
      %v1258 = vmul.f32 %v1244, %v1257
      %v1259 = vadd.f32 %v1258, 0.014752088
      %v1260 = vmul.f32 %v1244, %v1259
      %v1261 = vadd.f32 %v1260, 0.112945676
      %v1262 = vmul.f32 %v1244, %v1261
      %v1263 = vadd.f32 %v1262, 0.4994258
      %v1264 = vmul.f32 %v1244, %v1263
      %v1265 = vadd.f32 %v1264, 1.0
      %v1266 = vrcp.pop %v1265
      %v1267 = vmul.f32 %v1265, %v1266
      %v1268 = vsub.f32 1.0, %v1267
      %v1269 = vmul.f32 %v1266, %v1268
      %v1270 = vadd.f32 %v1266, %v1269
      %vm1271 = vweird.f32 %v1265
      %vm1272 = vweird.f32 %v1266
      %vm1273 = vmor %vm1271, %vm1272
      %v1274 = vsel %vm1273, %v1266, %v1270
      %v1275 = vand.u32 2147483647, %v1265
      %vm1276 = vcmp.eq.f32.partialorder %v1275, 8.507059e+37
      %v1277 = vand.u32 %v1265, 2147483648
      %v1278 = vor.u32 1.1754944e-38, %v1277
      %v1279 = vsel %vm1276, %v1278, %v1274
      %v1280 = vmul.f32 %v1255, %v1279
      %v1281 = vmin.f32 %v1280, 1.0
      %v1282 = vmax.f32 %v1281, -1.0
      %v1283 = vmul.f32 %v900, %v900
      %v1284 = vmin.f32 16.0, %v1283
      %v1285 = vmul.f32 %v1284, 2.1237322e-06
      %v1286 = vadd.f32 %v1285, 0.00028619796
      %v1287 = vmul.f32 %v1284, %v1286
      %v1288 = vadd.f32 %v1287, 0.0036580483
      %v1289 = vmul.f32 %v1284, %v1288
      %v1290 = vadd.f32 %v1289, 0.05243302
      %v1291 = vmul.f32 %v1284, %v1290
      %v1292 = vadd.f32 %v1291, 0.18741608
      %v1293 = vmul.f32 %v1284, %v1292
      %v1294 = vadd.f32 %v1293, 1.1283791
      %v1295 = vmul.f32 %v900, %v1294
      %v1296 = vmul.f32 %v1284, 3.8918573e-05
      %v1297 = vadd.f32 %v1296, 0.001143296
      %v1298 = vmul.f32 %v1284, %v1297
      %v1299 = vadd.f32 %v1298, 0.014752088
      %v1300 = vmul.f32 %v1284, %v1299
      %v1301 = vadd.f32 %v1300, 0.112945676
      %v1302 = vmul.f32 %v1284, %v1301
      %v1303 = vadd.f32 %v1302, 0.4994258
      %v1304 = vmul.f32 %v1284, %v1303
      %v1305 = vadd.f32 %v1304, 1.0
      %v1306 = vrcp.pop %v1305
      %v1307 = vmul.f32 %v1305, %v1306
      %v1308 = vsub.f32 1.0, %v1307
      %v1309 = vmul.f32 %v1306, %v1308
      %v1310 = vadd.f32 %v1306, %v1309
      %vm1311 = vweird.f32 %v1305
      %vm1312 = vweird.f32 %v1306
      %vm1313 = vmor %vm1311, %vm1312
      %v1314 = vsel %vm1313, %v1306, %v1310
      %v1315 = vand.u32 2147483647, %v1305
      %vm1316 = vcmp.eq.f32.partialorder %v1315, 8.507059e+37
      %v1317 = vand.u32 %v1305, 2147483648
      %v1318 = vor.u32 1.1754944e-38, %v1317
      %v1319 = vsel %vm1316, %v1318, %v1314
      %v1320 = vmul.f32 %v1295, %v1319
      %v1321 = vmin.f32 %v1320, 1.0
      %v1322 = vmax.f32 %v1321, -1.0
      %v1323 = vmul.f32 %v901, %v901
      %v1324 = vmin.f32 16.0, %v1323
      %v1325 = vmul.f32 %v1324, 2.1237322e-06
      %v1326 = vadd.f32 %v1325, 0.00028619796
      %v1327 = vmul.f32 %v1324, %v1326
      %v1328 = vadd.f32 %v1327, 0.0036580483
      %v1329 = vmul.f32 %v1324, %v1328
      %v1330 = vadd.f32 %v1329, 0.05243302
      %v1331 = vmul.f32 %v1324, %v1330
      %v1332 = vadd.f32 %v1331, 0.18741608
      %v1333 = vmul.f32 %v1324, %v1332
      %v1334 = vadd.f32 %v1333, 1.1283791
      %v1335 = vmul.f32 %v901, %v1334
      %v1336 = vmul.f32 %v1324, 3.8918573e-05
      %v1337 = vadd.f32 %v1336, 0.001143296
      %v1338 = vmul.f32 %v1324, %v1337
      %v1339 = vadd.f32 %v1338, 0.014752088
      %v1340 = vmul.f32 %v1324, %v1339
      %v1341 = vadd.f32 %v1340, 0.112945676
      %v1342 = vmul.f32 %v1324, %v1341
      %v1343 = vadd.f32 %v1342, 0.4994258
      %v1344 = vmul.f32 %v1324, %v1343
      %v1345 = vadd.f32 %v1344, 1.0
      %v1346 = vrcp.pop %v1345
      %v1347 = vmul.f32 %v1345, %v1346
      %v1348 = vsub.f32 1.0, %v1347
      %v1349 = vmul.f32 %v1346, %v1348
      %v1350 = vadd.f32 %v1346, %v1349
      %vm1351 = vweird.f32 %v1345
      %vm1352 = vweird.f32 %v1346
      %vm1353 = vmor %vm1351, %vm1352
      %v1354 = vsel %vm1353, %v1346, %v1350
      %v1355 = vand.u32 2147483647, %v1345
      %vm1356 = vcmp.eq.f32.partialorder %v1355, 8.507059e+37
      %v1357 = vand.u32 %v1345, 2147483648
      %v1358 = vor.u32 1.1754944e-38, %v1357
      %v1359 = vsel %vm1356, %v1358, %v1354
      %v1360 = vmul.f32 %v1335, %v1359
      %v1361 = vmin.f32 %v1360, 1.0
      %v1362 = vmax.f32 %v1361, -1.0
      %v1363 = vmul.f32 %v902, %v902
      %v1364 = vmin.f32 16.0, %v1363
      %v1365 = vmul.f32 %v1364, 2.1237322e-06
      %v1366 = vadd.f32 %v1365, 0.00028619796
      %v1367 = vmul.f32 %v1364, %v1366
      %v1368 = vadd.f32 %v1367, 0.0036580483
      %v1369 = vmul.f32 %v1364, %v1368
      %v1370 = vadd.f32 %v1369, 0.05243302
      %v1371 = vmul.f32 %v1364, %v1370
      %v1372 = vadd.f32 %v1371, 0.18741608
      %v1373 = vmul.f32 %v1364, %v1372
      %v1374 = vadd.f32 %v1373, 1.1283791
      %v1375 = vmul.f32 %v902, %v1374
      %v1376 = vmul.f32 %v1364, 3.8918573e-05
      %v1377 = vadd.f32 %v1376, 0.001143296
      %v1378 = vmul.f32 %v1364, %v1377
      %v1379 = vadd.f32 %v1378, 0.014752088
      %v1380 = vmul.f32 %v1364, %v1379
      %v1381 = vadd.f32 %v1380, 0.112945676
      %v1382 = vmul.f32 %v1364, %v1381
      %v1383 = vadd.f32 %v1382, 0.4994258
      %v1384 = vmul.f32 %v1364, %v1383
      %v1385 = vadd.f32 %v1384, 1.0
      %v1386 = vrcp.pop %v1385
      %v1387 = vmul.f32 %v1385, %v1386
      %v1388 = vsub.f32 1.0, %v1387
      %v1389 = vmul.f32 %v1386, %v1388
      %v1390 = vadd.f32 %v1386, %v1389
      %vm1391 = vweird.f32 %v1385
      %vm1392 = vweird.f32 %v1386
      %vm1393 = vmor %vm1391, %vm1392
      %v1394 = vsel %vm1393, %v1386, %v1390
      %v1395 = vand.u32 2147483647, %v1385
      %vm1396 = vcmp.eq.f32.partialorder %v1395, 8.507059e+37
      %v1397 = vand.u32 %v1385, 2147483648
      %v1398 = vor.u32 1.1754944e-38, %v1397
      %v1399 = vsel %vm1396, %v1398, %v1394
      %v1400 = vmul.f32 %v1375, %v1399
      %v1401 = vmin.f32 %v1400, 1.0
      %v1402 = vmax.f32 %v1401, -1.0
      %v1403 = vmul.f32 %v903, %v903
      %v1404 = vmin.f32 16.0, %v1403
      %v1405 = vmul.f32 %v1404, 2.1237322e-06
      %v1406 = vadd.f32 %v1405, 0.00028619796
      %v1407 = vmul.f32 %v1404, %v1406
      %v1408 = vadd.f32 %v1407, 0.0036580483
      %v1409 = vmul.f32 %v1404, %v1408
      %v1410 = vadd.f32 %v1409, 0.05243302
      %v1411 = vmul.f32 %v1404, %v1410
      %v1412 = vadd.f32 %v1411, 0.18741608
      %v1413 = vmul.f32 %v1404, %v1412
      %v1414 = vadd.f32 %v1413, 1.1283791
      %v1415 = vmul.f32 %v903, %v1414
      %v1416 = vmul.f32 %v1404, 3.8918573e-05
      %v1417 = vadd.f32 %v1416, 0.001143296
      %v1418 = vmul.f32 %v1404, %v1417
      %v1419 = vadd.f32 %v1418, 0.014752088
      %v1420 = vmul.f32 %v1404, %v1419
      %v1421 = vadd.f32 %v1420, 0.112945676
      %v1422 = vmul.f32 %v1404, %v1421
      %v1423 = vadd.f32 %v1422, 0.4994258
      %v1424 = vmul.f32 %v1404, %v1423
      %v1425 = vadd.f32 %v1424, 1.0
      %v1426 = vrcp.pop %v1425
      %v1427 = vmul.f32 %v1425, %v1426
      %v1428 = vsub.f32 1.0, %v1427
      %v1429 = vmul.f32 %v1426, %v1428
      %v1430 = vadd.f32 %v1426, %v1429
      %vm1431 = vweird.f32 %v1425
      %vm1432 = vweird.f32 %v1426
      %vm1433 = vmor %vm1431, %vm1432
      %v1434 = vsel %vm1433, %v1426, %v1430
      %v1435 = vand.u32 2147483647, %v1425
      %vm1436 = vcmp.eq.f32.partialorder %v1435, 8.507059e+37
      %v1437 = vand.u32 %v1425, 2147483648
      %v1438 = vor.u32 1.1754944e-38, %v1437
      %v1439 = vsel %vm1436, %v1438, %v1434
      %v1440 = vmul.f32 %v1415, %v1439
      %v1441 = vmin.f32 %v1440, 1.0
      %v1442 = vmax.f32 %v1441, -1.0
      %v1443 = vmul.f32 %v904, %v904
      %v1444 = vmin.f32 16.0, %v1443
      %v1445 = vmul.f32 %v1444, 2.1237322e-06
      %v1446 = vadd.f32 %v1445, 0.00028619796
      %v1447 = vmul.f32 %v1444, %v1446
      %v1448 = vadd.f32 %v1447, 0.0036580483
      %v1449 = vmul.f32 %v1444, %v1448
      %v1450 = vadd.f32 %v1449, 0.05243302
      %v1451 = vmul.f32 %v1444, %v1450
      %v1452 = vadd.f32 %v1451, 0.18741608
      %v1453 = vmul.f32 %v1444, %v1452
      %v1454 = vadd.f32 %v1453, 1.1283791
      %v1455 = vmul.f32 %v904, %v1454
      %v1456 = vmul.f32 %v1444, 3.8918573e-05
      %v1457 = vadd.f32 %v1456, 0.001143296
      %v1458 = vmul.f32 %v1444, %v1457
      %v1459 = vadd.f32 %v1458, 0.014752088
      %v1460 = vmul.f32 %v1444, %v1459
      %v1461 = vadd.f32 %v1460, 0.112945676
      %v1462 = vmul.f32 %v1444, %v1461
      %v1463 = vadd.f32 %v1462, 0.4994258
      %v1464 = vmul.f32 %v1444, %v1463
      %v1465 = vadd.f32 %v1464, 1.0
      %v1466 = vrcp.pop %v1465
      %v1467 = vmul.f32 %v1465, %v1466
      %v1468 = vsub.f32 1.0, %v1467
      %v1469 = vmul.f32 %v1466, %v1468
      %v1470 = vadd.f32 %v1466, %v1469
      %vm1471 = vweird.f32 %v1465
      %vm1472 = vweird.f32 %v1466
      %vm1473 = vmor %vm1471, %vm1472
      %v1474 = vsel %vm1473, %v1466, %v1470
      %v1475 = vand.u32 2147483647, %v1465
      %vm1476 = vcmp.eq.f32.partialorder %v1475, 8.507059e+37
      %v1477 = vand.u32 %v1465, 2147483648
      %v1478 = vor.u32 1.1754944e-38, %v1477
      %v1479 = vsel %vm1476, %v1478, %v1474
      %v1480 = vmul.f32 %v1455, %v1479
      %v1481 = vmin.f32 %v1480, 1.0
      %v1482 = vmax.f32 %v1481, -1.0
      %v1483 = vmul.f32 %v905, %v905
      %v1484 = vmin.f32 16.0, %v1483
      %v1485 = vmul.f32 %v1484, 2.1237322e-06
      %v1486 = vadd.f32 %v1485, 0.00028619796
      %v1487 = vmul.f32 %v1484, %v1486
      %v1488 = vadd.f32 %v1487, 0.0036580483
      %v1489 = vmul.f32 %v1484, %v1488
      %v1490 = vadd.f32 %v1489, 0.05243302
      %v1491 = vmul.f32 %v1484, %v1490
      %v1492 = vadd.f32 %v1491, 0.18741608
      %v1493 = vmul.f32 %v1484, %v1492
      %v1494 = vadd.f32 %v1493, 1.1283791
      %v1495 = vmul.f32 %v905, %v1494
      %v1496 = vmul.f32 %v1484, 3.8918573e-05
      %v1497 = vadd.f32 %v1496, 0.001143296
      %v1498 = vmul.f32 %v1484, %v1497
      %v1499 = vadd.f32 %v1498, 0.014752088
      %v1500 = vmul.f32 %v1484, %v1499
      %v1501 = vadd.f32 %v1500, 0.112945676
      %v1502 = vmul.f32 %v1484, %v1501
      %v1503 = vadd.f32 %v1502, 0.4994258
      %v1504 = vmul.f32 %v1484, %v1503
      %v1505 = vadd.f32 %v1504, 1.0
      %v1506 = vrcp.pop %v1505
      %v1507 = vmul.f32 %v1505, %v1506
      %v1508 = vsub.f32 1.0, %v1507
      %v1509 = vmul.f32 %v1506, %v1508
      %v1510 = vadd.f32 %v1506, %v1509
      %vm1511 = vweird.f32 %v1505
      %vm1512 = vweird.f32 %v1506
      %vm1513 = vmor %vm1511, %vm1512
      %v1514 = vsel %vm1513, %v1506, %v1510
      %v1515 = vand.u32 2147483647, %v1505
      %vm1516 = vcmp.eq.f32.partialorder %v1515, 8.507059e+37
      %v1517 = vand.u32 %v1505, 2147483648
      %v1518 = vor.u32 1.1754944e-38, %v1517
      %v1519 = vsel %vm1516, %v1518, %v1514
      %v1520 = vmul.f32 %v1495, %v1519
      %v1521 = vmin.f32 %v1520, 1.0
      %v1522 = vmax.f32 %v1521, -1.0
      %v1523 = vmul.f32 %v906, %v906
      %v1524 = vmin.f32 16.0, %v1523
      %v1525 = vmul.f32 %v1524, 2.1237322e-06
      %v1526 = vadd.f32 %v1525, 0.00028619796
      %v1527 = vmul.f32 %v1524, %v1526
      %v1528 = vadd.f32 %v1527, 0.0036580483
      %v1529 = vmul.f32 %v1524, %v1528
      %v1530 = vadd.f32 %v1529, 0.05243302
      %v1531 = vmul.f32 %v1524, %v1530
      %v1532 = vadd.f32 %v1531, 0.18741608
      %v1533 = vmul.f32 %v1524, %v1532
      %v1534 = vadd.f32 %v1533, 1.1283791
      %v1535 = vmul.f32 %v906, %v1534
      %v1536 = vmul.f32 %v1524, 3.8918573e-05
      %v1537 = vadd.f32 %v1536, 0.001143296
      %v1538 = vmul.f32 %v1524, %v1537
      %v1539 = vadd.f32 %v1538, 0.014752088
      %v1540 = vmul.f32 %v1524, %v1539
      %v1541 = vadd.f32 %v1540, 0.112945676
      %v1542 = vmul.f32 %v1524, %v1541
      %v1543 = vadd.f32 %v1542, 0.4994258
      %v1544 = vmul.f32 %v1524, %v1543
      %v1545 = vadd.f32 %v1544, 1.0
      %v1546 = vrcp.pop %v1545
      %v1547 = vmul.f32 %v1545, %v1546
      %v1548 = vsub.f32 1.0, %v1547
      %v1549 = vmul.f32 %v1546, %v1548
      %v1550 = vadd.f32 %v1546, %v1549
      %vm1551 = vweird.f32 %v1545
      %vm1552 = vweird.f32 %v1546
      %vm1553 = vmor %vm1551, %vm1552
      %v1554 = vsel %vm1553, %v1546, %v1550
      %v1555 = vand.u32 2147483647, %v1545
      %vm1556 = vcmp.eq.f32.partialorder %v1555, 8.507059e+37
      %v1557 = vand.u32 %v1545, 2147483648
      %v1558 = vor.u32 1.1754944e-38, %v1557
      %v1559 = vsel %vm1556, %v1558, %v1554
      %v1560 = vmul.f32 %v1535, %v1559
      %v1561 = vmin.f32 %v1560, 1.0
      %v1562 = vmax.f32 %v1561, -1.0
      %v1563 = vmul.f32 %v907, %v907
      %v1564 = vmin.f32 16.0, %v1563
      %v1565 = vmul.f32 %v1564, 2.1237322e-06
      %v1566 = vadd.f32 %v1565, 0.00028619796
      %v1567 = vmul.f32 %v1564, %v1566
      %v1568 = vadd.f32 %v1567, 0.0036580483
      %v1569 = vmul.f32 %v1564, %v1568
      %v1570 = vadd.f32 %v1569, 0.05243302
      %v1571 = vmul.f32 %v1564, %v1570
      %v1572 = vadd.f32 %v1571, 0.18741608
      %v1573 = vmul.f32 %v1564, %v1572
      %v1574 = vadd.f32 %v1573, 1.1283791
      %v1575 = vmul.f32 %v907, %v1574
      %v1576 = vmul.f32 %v1564, 3.8918573e-05
      %v1577 = vadd.f32 %v1576, 0.001143296
      %v1578 = vmul.f32 %v1564, %v1577
      %v1579 = vadd.f32 %v1578, 0.014752088
      %v1580 = vmul.f32 %v1564, %v1579
      %v1581 = vadd.f32 %v1580, 0.112945676
      %v1582 = vmul.f32 %v1564, %v1581
      %v1583 = vadd.f32 %v1582, 0.4994258
      %v1584 = vmul.f32 %v1564, %v1583
      %v1585 = vadd.f32 %v1584, 1.0
      %v1586 = vrcp.pop %v1585
      %v1587 = vmul.f32 %v1585, %v1586
      %v1588 = vsub.f32 1.0, %v1587
      %v1589 = vmul.f32 %v1586, %v1588
      %v1590 = vadd.f32 %v1586, %v1589
      %vm1591 = vweird.f32 %v1585
      %vm1592 = vweird.f32 %v1586
      %vm1593 = vmor %vm1591, %vm1592
      %v1594 = vsel %vm1593, %v1586, %v1590
      %v1595 = vand.u32 2147483647, %v1585
      %vm1596 = vcmp.eq.f32.partialorder %v1595, 8.507059e+37
      %v1597 = vand.u32 %v1585, 2147483648
      %v1598 = vor.u32 1.1754944e-38, %v1597
      %v1599 = vsel %vm1596, %v1598, %v1594
      %v1600 = vmul.f32 %v1575, %v1599
      %v1601 = vmin.f32 %v1600, 1.0
      %v1602 = vmax.f32 %v1601, -1.0
      %v1603 = vmul.f32 %v908, %v908
      %v1604 = vmin.f32 16.0, %v1603
      %v1605 = vmul.f32 %v1604, 2.1237322e-06
      %v1606 = vadd.f32 %v1605, 0.00028619796
      %v1607 = vmul.f32 %v1604, %v1606
      %v1608 = vadd.f32 %v1607, 0.0036580483
      %v1609 = vmul.f32 %v1604, %v1608
      %v1610 = vadd.f32 %v1609, 0.05243302
      %v1611 = vmul.f32 %v1604, %v1610
      %v1612 = vadd.f32 %v1611, 0.18741608
      %v1613 = vmul.f32 %v1604, %v1612
      %v1614 = vadd.f32 %v1613, 1.1283791
      %v1615 = vmul.f32 %v908, %v1614
      %v1616 = vmul.f32 %v1604, 3.8918573e-05
      %v1617 = vadd.f32 %v1616, 0.001143296
      %v1618 = vmul.f32 %v1604, %v1617
      %v1619 = vadd.f32 %v1618, 0.014752088
      %v1620 = vmul.f32 %v1604, %v1619
      %v1621 = vadd.f32 %v1620, 0.112945676
      %v1622 = vmul.f32 %v1604, %v1621
      %v1623 = vadd.f32 %v1622, 0.4994258
      %v1624 = vmul.f32 %v1604, %v1623
      %v1625 = vadd.f32 %v1624, 1.0
      %v1626 = vrcp.pop %v1625
      %v1627 = vmul.f32 %v1625, %v1626
      %v1628 = vsub.f32 1.0, %v1627
      %v1629 = vmul.f32 %v1626, %v1628
      %v1630 = vadd.f32 %v1626, %v1629
      %vm1631 = vweird.f32 %v1625
      %vm1632 = vweird.f32 %v1626
      %vm1633 = vmor %vm1631, %vm1632
      %v1634 = vsel %vm1633, %v1626, %v1630
      %v1635 = vand.u32 2147483647, %v1625
      %vm1636 = vcmp.eq.f32.partialorder %v1635, 8.507059e+37
      %v1637 = vand.u32 %v1625, 2147483648
      %v1638 = vor.u32 1.1754944e-38, %v1637
      %v1639 = vsel %vm1636, %v1638, %v1634
      %v1640 = vmul.f32 %v1615, %v1639
      %v1641 = vmin.f32 %v1640, 1.0
      %v1642 = vmax.f32 %v1641, -1.0
      %v1643 = vmul.f32 %v909, %v909
      %v1644 = vmin.f32 16.0, %v1643
      %v1645 = vmul.f32 %v1644, 2.1237322e-06
      %v1646 = vadd.f32 %v1645, 0.00028619796
      %v1647 = vmul.f32 %v1644, %v1646
      %v1648 = vadd.f32 %v1647, 0.0036580483
      %v1649 = vmul.f32 %v1644, %v1648
      %v1650 = vadd.f32 %v1649, 0.05243302
      %v1651 = vmul.f32 %v1644, %v1650
      %v1652 = vadd.f32 %v1651, 0.18741608
      %v1653 = vmul.f32 %v1644, %v1652
      %v1654 = vadd.f32 %v1653, 1.1283791
      %v1655 = vmul.f32 %v909, %v1654
      %v1656 = vmul.f32 %v1644, 3.8918573e-05
      %v1657 = vadd.f32 %v1656, 0.001143296
      %v1658 = vmul.f32 %v1644, %v1657
      %v1659 = vadd.f32 %v1658, 0.014752088
      %v1660 = vmul.f32 %v1644, %v1659
      %v1661 = vadd.f32 %v1660, 0.112945676
      %v1662 = vmul.f32 %v1644, %v1661
      %v1663 = vadd.f32 %v1662, 0.4994258
      %v1664 = vmul.f32 %v1644, %v1663
      %v1665 = vadd.f32 %v1664, 1.0
      %v1666 = vrcp.pop %v1665
      %v1667 = vmul.f32 %v1665, %v1666
      %v1668 = vsub.f32 1.0, %v1667
      %v1669 = vmul.f32 %v1666, %v1668
      %v1670 = vadd.f32 %v1666, %v1669
      %vm1671 = vweird.f32 %v1665
      %vm1672 = vweird.f32 %v1666
      %vm1673 = vmor %vm1671, %vm1672
      %v1674 = vsel %vm1673, %v1666, %v1670
      %v1675 = vand.u32 2147483647, %v1665
      %vm1676 = vcmp.eq.f32.partialorder %v1675, 8.507059e+37
      %v1677 = vand.u32 %v1665, 2147483648
      %v1678 = vor.u32 1.1754944e-38, %v1677
      %v1679 = vsel %vm1676, %v1678, %v1674
      %v1680 = vmul.f32 %v1655, %v1679
      %v1681 = vmin.f32 %v1680, 1.0
      %v1682 = vmax.f32 %v1681, -1.0
      %v1683 = vmul.f32 %v910, %v910
      %v1684 = vmin.f32 16.0, %v1683
      %v1685 = vmul.f32 %v1684, 2.1237322e-06
      %v1686 = vadd.f32 %v1685, 0.00028619796
      %v1687 = vmul.f32 %v1684, %v1686
      %v1688 = vadd.f32 %v1687, 0.0036580483
      %v1689 = vmul.f32 %v1684, %v1688
      %v1690 = vadd.f32 %v1689, 0.05243302
      %v1691 = vmul.f32 %v1684, %v1690
      %v1692 = vadd.f32 %v1691, 0.18741608
      %v1693 = vmul.f32 %v1684, %v1692
      %v1694 = vadd.f32 %v1693, 1.1283791
      %v1695 = vmul.f32 %v910, %v1694
      %v1696 = vmul.f32 %v1684, 3.8918573e-05
      %v1697 = vadd.f32 %v1696, 0.001143296
      %v1698 = vmul.f32 %v1684, %v1697
      %v1699 = vadd.f32 %v1698, 0.014752088
      %v1700 = vmul.f32 %v1684, %v1699
      %v1701 = vadd.f32 %v1700, 0.112945676
      %v1702 = vmul.f32 %v1684, %v1701
      %v1703 = vadd.f32 %v1702, 0.4994258
      %v1704 = vmul.f32 %v1684, %v1703
      %v1705 = vadd.f32 %v1704, 1.0
      %v1706 = vrcp.pop %v1705
      %v1707 = vmul.f32 %v1705, %v1706
      %v1708 = vsub.f32 1.0, %v1707
      %v1709 = vmul.f32 %v1706, %v1708
      %v1710 = vadd.f32 %v1706, %v1709
      %vm1711 = vweird.f32 %v1705
      %vm1712 = vweird.f32 %v1706
      %vm1713 = vmor %vm1711, %vm1712
      %v1714 = vsel %vm1713, %v1706, %v1710
      %v1715 = vand.u32 2147483647, %v1705
      %vm1716 = vcmp.eq.f32.partialorder %v1715, 8.507059e+37
      %v1717 = vand.u32 %v1705, 2147483648
      %v1718 = vor.u32 1.1754944e-38, %v1717
      %v1719 = vsel %vm1716, %v1718, %v1714
      %v1720 = vmul.f32 %v1695, %v1719
      %v1721 = vmin.f32 %v1720, 1.0
      %v1722 = vmax.f32 %v1721, -1.0
      %v1723 = vmul.f32 %v911, %v911
      %v1724 = vmin.f32 16.0, %v1723
      %v1725 = vmul.f32 %v1724, 2.1237322e-06
      %v1726 = vadd.f32 %v1725, 0.00028619796
      %v1727 = vmul.f32 %v1724, %v1726
      %v1728 = vadd.f32 %v1727, 0.0036580483
      %v1729 = vmul.f32 %v1724, %v1728
      %v1730 = vadd.f32 %v1729, 0.05243302
      %v1731 = vmul.f32 %v1724, %v1730
      %v1732 = vadd.f32 %v1731, 0.18741608
      %v1733 = vmul.f32 %v1724, %v1732
      %v1734 = vadd.f32 %v1733, 1.1283791
      %v1735 = vmul.f32 %v911, %v1734
      %v1736 = vmul.f32 %v1724, 3.8918573e-05
      %v1737 = vadd.f32 %v1736, 0.001143296
      %v1738 = vmul.f32 %v1724, %v1737
      %v1739 = vadd.f32 %v1738, 0.014752088
      %v1740 = vmul.f32 %v1724, %v1739
      %v1741 = vadd.f32 %v1740, 0.112945676
      %v1742 = vmul.f32 %v1724, %v1741
      %v1743 = vadd.f32 %v1742, 0.4994258
      %v1744 = vmul.f32 %v1724, %v1743
      %v1745 = vadd.f32 %v1744, 1.0
      %v1746 = vrcp.pop %v1745
      %v1747 = vmul.f32 %v1745, %v1746
      %v1748 = vsub.f32 1.0, %v1747
      %v1749 = vmul.f32 %v1746, %v1748
      %v1750 = vadd.f32 %v1746, %v1749
      %vm1751 = vweird.f32 %v1745
      %vm1752 = vweird.f32 %v1746
      %vm1753 = vmor %vm1751, %vm1752
      %v1754 = vsel %vm1753, %v1746, %v1750
      %v1755 = vand.u32 2147483647, %v1745
      %vm1756 = vcmp.eq.f32.partialorder %v1755, 8.507059e+37
      %v1757 = vand.u32 %v1745, 2147483648
      %v1758 = vor.u32 1.1754944e-38, %v1757
      %v1759 = vsel %vm1756, %v1758, %v1754
      %v1760 = vmul.f32 %v1735, %v1759
      %v1761 = vmin.f32 %v1760, 1.0
      %v1762 = vmax.f32 %v1761, -1.0
      %v1763 = vmul.f32 %v912, %v912
      %v1764 = vmin.f32 16.0, %v1763
      %v1765 = vmul.f32 %v1764, 2.1237322e-06
      %v1766 = vadd.f32 %v1765, 0.00028619796
      %v1767 = vmul.f32 %v1764, %v1766
      %v1768 = vadd.f32 %v1767, 0.0036580483
      %v1769 = vmul.f32 %v1764, %v1768
      %v1770 = vadd.f32 %v1769, 0.05243302
      %v1771 = vmul.f32 %v1764, %v1770
      %v1772 = vadd.f32 %v1771, 0.18741608
      %v1773 = vmul.f32 %v1764, %v1772
      %v1774 = vadd.f32 %v1773, 1.1283791
      %v1775 = vmul.f32 %v912, %v1774
      %v1776 = vmul.f32 %v1764, 3.8918573e-05
      %v1777 = vadd.f32 %v1776, 0.001143296
      %v1778 = vmul.f32 %v1764, %v1777
      %v1779 = vadd.f32 %v1778, 0.014752088
      %v1780 = vmul.f32 %v1764, %v1779
      %v1781 = vadd.f32 %v1780, 0.112945676
      %v1782 = vmul.f32 %v1764, %v1781
      %v1783 = vadd.f32 %v1782, 0.4994258
      %v1784 = vmul.f32 %v1764, %v1783
      %v1785 = vadd.f32 %v1784, 1.0
      %v1786 = vrcp.pop %v1785
      %v1787 = vmul.f32 %v1785, %v1786
      %v1788 = vsub.f32 1.0, %v1787
      %v1789 = vmul.f32 %v1786, %v1788
      %v1790 = vadd.f32 %v1786, %v1789
      %vm1791 = vweird.f32 %v1785
      %vm1792 = vweird.f32 %v1786
      %vm1793 = vmor %vm1791, %vm1792
      %v1794 = vsel %vm1793, %v1786, %v1790
      %v1795 = vand.u32 2147483647, %v1785
      %vm1796 = vcmp.eq.f32.partialorder %v1795, 8.507059e+37
      %v1797 = vand.u32 %v1785, 2147483648
      %v1798 = vor.u32 1.1754944e-38, %v1797
      %v1799 = vsel %vm1796, %v1798, %v1794
      %v1800 = vmul.f32 %v1775, %v1799
      %v1801 = vmin.f32 %v1800, 1.0
      %v1802 = vmax.f32 %v1801, -1.0
      %v1803 = vmul.f32 %v913, %v913
      %v1804 = vmin.f32 16.0, %v1803
      %v1805 = vmul.f32 %v1804, 2.1237322e-06
      %v1806 = vadd.f32 %v1805, 0.00028619796
      %v1807 = vmul.f32 %v1804, %v1806
      %v1808 = vadd.f32 %v1807, 0.0036580483
      %v1809 = vmul.f32 %v1804, %v1808
      %v1810 = vadd.f32 %v1809, 0.05243302
      %v1811 = vmul.f32 %v1804, %v1810
      %v1812 = vadd.f32 %v1811, 0.18741608
      %v1813 = vmul.f32 %v1804, %v1812
      %v1814 = vadd.f32 %v1813, 1.1283791
      %v1815 = vmul.f32 %v913, %v1814
      %v1816 = vmul.f32 %v1804, 3.8918573e-05
      %v1817 = vadd.f32 %v1816, 0.001143296
      %v1818 = vmul.f32 %v1804, %v1817
      %v1819 = vadd.f32 %v1818, 0.014752088
      %v1820 = vmul.f32 %v1804, %v1819
      %v1821 = vadd.f32 %v1820, 0.112945676
      %v1822 = vmul.f32 %v1804, %v1821
      %v1823 = vadd.f32 %v1822, 0.4994258
      %v1824 = vmul.f32 %v1804, %v1823
      %v1825 = vadd.f32 %v1824, 1.0
      %v1826 = vrcp.pop %v1825
      %v1827 = vmul.f32 %v1825, %v1826
      %v1828 = vsub.f32 1.0, %v1827
      %v1829 = vmul.f32 %v1826, %v1828
      %v1830 = vadd.f32 %v1826, %v1829
      %vm1831 = vweird.f32 %v1825
      %vm1832 = vweird.f32 %v1826
      %vm1833 = vmor %vm1831, %vm1832
      %v1834 = vsel %vm1833, %v1826, %v1830
      %v1835 = vand.u32 2147483647, %v1825
      %vm1836 = vcmp.eq.f32.partialorder %v1835, 8.507059e+37
      %v1837 = vand.u32 %v1825, 2147483648
      %v1838 = vor.u32 1.1754944e-38, %v1837
      %v1839 = vsel %vm1836, %v1838, %v1834
      %v1840 = vmul.f32 %v1815, %v1839
      %v1841 = vmin.f32 %v1840, 1.0
      %v1842 = vmax.f32 %v1841, -1.0
      %v1843 = vmul.f32 %v914, %v914
      %v1844 = vmin.f32 16.0, %v1843
      %v1845 = vmul.f32 %v1844, 2.1237322e-06
      %v1846 = vadd.f32 %v1845, 0.00028619796
      %v1847 = vmul.f32 %v1844, %v1846
      %v1848 = vadd.f32 %v1847, 0.0036580483
      %v1849 = vmul.f32 %v1844, %v1848
      %v1850 = vadd.f32 %v1849, 0.05243302
      %v1851 = vmul.f32 %v1844, %v1850
      %v1852 = vadd.f32 %v1851, 0.18741608
      %v1853 = vmul.f32 %v1844, %v1852
      %v1854 = vadd.f32 %v1853, 1.1283791
      %v1855 = vmul.f32 %v914, %v1854
      %v1856 = vmul.f32 %v1844, 3.8918573e-05
      %v1857 = vadd.f32 %v1856, 0.001143296
      %v1858 = vmul.f32 %v1844, %v1857
      %v1859 = vadd.f32 %v1858, 0.014752088
      %v1860 = vmul.f32 %v1844, %v1859
      %v1861 = vadd.f32 %v1860, 0.112945676
      %v1862 = vmul.f32 %v1844, %v1861
      %v1863 = vadd.f32 %v1862, 0.4994258
      %v1864 = vmul.f32 %v1844, %v1863
      %v1865 = vadd.f32 %v1864, 1.0
      %v1866 = vrcp.pop %v1865
      %v1867 = vmul.f32 %v1865, %v1866
      %v1868 = vsub.f32 1.0, %v1867
      %v1869 = vmul.f32 %v1866, %v1868
      %v1870 = vadd.f32 %v1866, %v1869
      %vm1871 = vweird.f32 %v1865
      %vm1872 = vweird.f32 %v1866
      %vm1873 = vmor %vm1871, %vm1872
      %v1874 = vsel %vm1873, %v1866, %v1870
      %v1875 = vand.u32 2147483647, %v1865
      %vm1876 = vcmp.eq.f32.partialorder %v1875, 8.507059e+37
      %v1877 = vand.u32 %v1865, 2147483648
      %v1878 = vor.u32 1.1754944e-38, %v1877
      %v1879 = vsel %vm1876, %v1878, %v1874
      %v1880 = vmul.f32 %v1855, %v1879
      %v1881 = vmin.f32 %v1880, 1.0
      %v1882 = vmax.f32 %v1881, -1.0
      %v1883 = vmul.f32 %v915, %v915
      %v1884 = vmin.f32 16.0, %v1883
      %v1885 = vmul.f32 %v1884, 2.1237322e-06
      %v1886 = vadd.f32 %v1885, 0.00028619796
      %v1887 = vmul.f32 %v1884, %v1886
      %v1888 = vadd.f32 %v1887, 0.0036580483
      %v1889 = vmul.f32 %v1884, %v1888
      %v1890 = vadd.f32 %v1889, 0.05243302
      %v1891 = vmul.f32 %v1884, %v1890
      %v1892 = vadd.f32 %v1891, 0.18741608
      %v1893 = vmul.f32 %v1884, %v1892
      %v1894 = vadd.f32 %v1893, 1.1283791
      %v1895 = vmul.f32 %v915, %v1894
      %v1896 = vmul.f32 %v1884, 3.8918573e-05
      %v1897 = vadd.f32 %v1896, 0.001143296
      %v1898 = vmul.f32 %v1884, %v1897
      %v1899 = vadd.f32 %v1898, 0.014752088
      %v1900 = vmul.f32 %v1884, %v1899
      %v1901 = vadd.f32 %v1900, 0.112945676
      %v1902 = vmul.f32 %v1884, %v1901
      %v1903 = vadd.f32 %v1902, 0.4994258
      %v1904 = vmul.f32 %v1884, %v1903
      %v1905 = vadd.f32 %v1904, 1.0
      %v1906 = vrcp.pop %v1905
      %v1907 = vmul.f32 %v1905, %v1906
      %v1908 = vsub.f32 1.0, %v1907
      %v1909 = vmul.f32 %v1906, %v1908
      %v1910 = vadd.f32 %v1906, %v1909
      %vm1911 = vweird.f32 %v1905
      %vm1912 = vweird.f32 %v1906
      %vm1913 = vmor %vm1911, %vm1912
      %v1914 = vsel %vm1913, %v1906, %v1910
      %v1915 = vand.u32 2147483647, %v1905
      %vm1916 = vcmp.eq.f32.partialorder %v1915, 8.507059e+37
      %v1917 = vand.u32 %v1905, 2147483648
      %v1918 = vor.u32 1.1754944e-38, %v1917
      %v1919 = vsel %vm1916, %v1918, %v1914
      %v1920 = vmul.f32 %v1895, %v1919
      %v1921 = vmin.f32 %v1920, 1.0
      %v1922 = vmax.f32 %v1921, -1.0
      %v1923 = vmul.f32 %v916, %v916
      %v1924 = vmin.f32 16.0, %v1923
      %v1925 = vmul.f32 %v1924, 2.1237322e-06
      %v1926 = vadd.f32 %v1925, 0.00028619796
      %v1927 = vmul.f32 %v1924, %v1926
      %v1928 = vadd.f32 %v1927, 0.0036580483
      %v1929 = vmul.f32 %v1924, %v1928
      %v1930 = vadd.f32 %v1929, 0.05243302
      %v1931 = vmul.f32 %v1924, %v1930
      %v1932 = vadd.f32 %v1931, 0.18741608
      %v1933 = vmul.f32 %v1924, %v1932
      %v1934 = vadd.f32 %v1933, 1.1283791
      %v1935 = vmul.f32 %v916, %v1934
      %v1936 = vmul.f32 %v1924, 3.8918573e-05
      %v1937 = vadd.f32 %v1936, 0.001143296
      %v1938 = vmul.f32 %v1924, %v1937
      %v1939 = vadd.f32 %v1938, 0.014752088
      %v1940 = vmul.f32 %v1924, %v1939
      %v1941 = vadd.f32 %v1940, 0.112945676
      %v1942 = vmul.f32 %v1924, %v1941
      %v1943 = vadd.f32 %v1942, 0.4994258
      %v1944 = vmul.f32 %v1924, %v1943
      %v1945 = vadd.f32 %v1944, 1.0
      %v1946 = vrcp.pop %v1945
      %v1947 = vmul.f32 %v1945, %v1946
      %v1948 = vsub.f32 1.0, %v1947
      %v1949 = vmul.f32 %v1946, %v1948
      %v1950 = vadd.f32 %v1946, %v1949
      %vm1951 = vweird.f32 %v1945
      %vm1952 = vweird.f32 %v1946
      %vm1953 = vmor %vm1951, %vm1952
      %v1954 = vsel %vm1953, %v1946, %v1950
      %v1955 = vand.u32 2147483647, %v1945
      %vm1956 = vcmp.eq.f32.partialorder %v1955, 8.507059e+37
      %v1957 = vand.u32 %v1945, 2147483648
      %v1958 = vor.u32 1.1754944e-38, %v1957
      %v1959 = vsel %vm1956, %v1958, %v1954
      %v1960 = vmul.f32 %v1935, %v1959
      %v1961 = vmin.f32 %v1960, 1.0
      %v1962 = vmax.f32 %v1961, -1.0
      %v1963 = vmul.f32 %v917, %v917
      %v1964 = vmin.f32 16.0, %v1963
      %v1965 = vmul.f32 %v1964, 2.1237322e-06
      %v1966 = vadd.f32 %v1965, 0.00028619796
      %v1967 = vmul.f32 %v1964, %v1966
      %v1968 = vadd.f32 %v1967, 0.0036580483
      %v1969 = vmul.f32 %v1964, %v1968
      %v1970 = vadd.f32 %v1969, 0.05243302
      %v1971 = vmul.f32 %v1964, %v1970
      %v1972 = vadd.f32 %v1971, 0.18741608
      %v1973 = vmul.f32 %v1964, %v1972
      %v1974 = vadd.f32 %v1973, 1.1283791
      %v1975 = vmul.f32 %v917, %v1974
      %v1976 = vmul.f32 %v1964, 3.8918573e-05
      %v1977 = vadd.f32 %v1976, 0.001143296
      %v1978 = vmul.f32 %v1964, %v1977
      %v1979 = vadd.f32 %v1978, 0.014752088
      %v1980 = vmul.f32 %v1964, %v1979
      %v1981 = vadd.f32 %v1980, 0.112945676
      %v1982 = vmul.f32 %v1964, %v1981
      %v1983 = vadd.f32 %v1982, 0.4994258
      %v1984 = vmul.f32 %v1964, %v1983
      %v1985 = vadd.f32 %v1984, 1.0
      %v1986 = vrcp.pop %v1985
      %v1987 = vmul.f32 %v1985, %v1986
      %v1988 = vsub.f32 1.0, %v1987
      %v1989 = vmul.f32 %v1986, %v1988
      %v1990 = vadd.f32 %v1986, %v1989
      %vm1991 = vweird.f32 %v1985
      %vm1992 = vweird.f32 %v1986
      %vm1993 = vmor %vm1991, %vm1992
      %v1994 = vsel %vm1993, %v1986, %v1990
      %v1995 = vand.u32 2147483647, %v1985
      %vm1996 = vcmp.eq.f32.partialorder %v1995, 8.507059e+37
      %v1997 = vand.u32 %v1985, 2147483648
      %v1998 = vor.u32 1.1754944e-38, %v1997
      %v1999 = vsel %vm1996, %v1998, %v1994
      %v2000 = vmul.f32 %v1975, %v1999
      %v2001 = vmin.f32 %v2000, 1.0
      %v2002 = vmax.f32 %v2001, -1.0
      %v2003 = vmul.f32 %v918, %v918
      %v2004 = vmin.f32 16.0, %v2003
      %v2005 = vmul.f32 %v2004, 2.1237322e-06
      %v2006 = vadd.f32 %v2005, 0.00028619796
      %v2007 = vmul.f32 %v2004, %v2006
      %v2008 = vadd.f32 %v2007, 0.0036580483
      %v2009 = vmul.f32 %v2004, %v2008
      %v2010 = vadd.f32 %v2009, 0.05243302
      %v2011 = vmul.f32 %v2004, %v2010
      %v2012 = vadd.f32 %v2011, 0.18741608
      %v2013 = vmul.f32 %v2004, %v2012
      %v2014 = vadd.f32 %v2013, 1.1283791
      %v2015 = vmul.f32 %v918, %v2014
      %v2016 = vmul.f32 %v2004, 3.8918573e-05
      %v2017 = vadd.f32 %v2016, 0.001143296
      %v2018 = vmul.f32 %v2004, %v2017
      %v2019 = vadd.f32 %v2018, 0.014752088
      %v2020 = vmul.f32 %v2004, %v2019
      %v2021 = vadd.f32 %v2020, 0.112945676
      %v2022 = vmul.f32 %v2004, %v2021
      %v2023 = vadd.f32 %v2022, 0.4994258
      %v2024 = vmul.f32 %v2004, %v2023
      %v2025 = vadd.f32 %v2024, 1.0
      %v2026 = vrcp.pop %v2025
      %v2027 = vmul.f32 %v2025, %v2026
      %v2028 = vsub.f32 1.0, %v2027
      %v2029 = vmul.f32 %v2026, %v2028
      %v2030 = vadd.f32 %v2026, %v2029
      %vm2031 = vweird.f32 %v2025
      %vm2032 = vweird.f32 %v2026
      %vm2033 = vmor %vm2031, %vm2032
      %v2034 = vsel %vm2033, %v2026, %v2030
      %v2035 = vand.u32 2147483647, %v2025
      %vm2036 = vcmp.eq.f32.partialorder %v2035, 8.507059e+37
      %v2037 = vand.u32 %v2025, 2147483648
      %v2038 = vor.u32 1.1754944e-38, %v2037
      %v2039 = vsel %vm2036, %v2038, %v2034
      %v2040 = vmul.f32 %v2015, %v2039
      %v2041 = vmin.f32 %v2040, 1.0
      %v2042 = vmax.f32 %v2041, -1.0
      %v2043 = vmul.f32 %v919, %v919
      %v2044 = vmin.f32 16.0, %v2043
      %v2045 = vmul.f32 %v2044, 2.1237322e-06
      %v2046 = vadd.f32 %v2045, 0.00028619796
      %v2047 = vmul.f32 %v2044, %v2046
      %v2048 = vadd.f32 %v2047, 0.0036580483
      %v2049 = vmul.f32 %v2044, %v2048
      %v2050 = vadd.f32 %v2049, 0.05243302
      %v2051 = vmul.f32 %v2044, %v2050
      %v2052 = vadd.f32 %v2051, 0.18741608
      %v2053 = vmul.f32 %v2044, %v2052
      %v2054 = vadd.f32 %v2053, 1.1283791
      %v2055 = vmul.f32 %v919, %v2054
      %v2056 = vmul.f32 %v2044, 3.8918573e-05
      %v2057 = vadd.f32 %v2056, 0.001143296
      %v2058 = vmul.f32 %v2044, %v2057
      %v2059 = vadd.f32 %v2058, 0.014752088
      %v2060 = vmul.f32 %v2044, %v2059
      %v2061 = vadd.f32 %v2060, 0.112945676
      %v2062 = vmul.f32 %v2044, %v2061
      %v2063 = vadd.f32 %v2062, 0.4994258
      %v2064 = vmul.f32 %v2044, %v2063
      %v2065 = vadd.f32 %v2064, 1.0
      %v2066 = vrcp.pop %v2065
      %v2067 = vmul.f32 %v2065, %v2066
      %v2068 = vsub.f32 1.0, %v2067
      %v2069 = vmul.f32 %v2066, %v2068
      %v2070 = vadd.f32 %v2066, %v2069
      %vm2071 = vweird.f32 %v2065
      %vm2072 = vweird.f32 %v2066
      %vm2073 = vmor %vm2071, %vm2072
      %v2074 = vsel %vm2073, %v2066, %v2070
      %v2075 = vand.u32 2147483647, %v2065
      %vm2076 = vcmp.eq.f32.partialorder %v2075, 8.507059e+37
      %v2077 = vand.u32 %v2065, 2147483648
      %v2078 = vor.u32 1.1754944e-38, %v2077
      %v2079 = vsel %vm2076, %v2078, %v2074
      %v2080 = vmul.f32 %v2055, %v2079
      %v2081 = vmin.f32 %v2080, 1.0
      %v2082 = vmax.f32 %v2081, -1.0
      %v2083 = vmul.f32 %v920, %v920
      %v2084 = vmin.f32 16.0, %v2083
      %v2085 = vmul.f32 %v2084, 2.1237322e-06
      %v2086 = vadd.f32 %v2085, 0.00028619796
      %v2087 = vmul.f32 %v2084, %v2086
      %v2088 = vadd.f32 %v2087, 0.0036580483
      %v2089 = vmul.f32 %v2084, %v2088
      %v2090 = vadd.f32 %v2089, 0.05243302
      %v2091 = vmul.f32 %v2084, %v2090
      %v2092 = vadd.f32 %v2091, 0.18741608
      %v2093 = vmul.f32 %v2084, %v2092
      %v2094 = vadd.f32 %v2093, 1.1283791
      %v2095 = vmul.f32 %v920, %v2094
      %v2096 = vmul.f32 %v2084, 3.8918573e-05
      %v2097 = vadd.f32 %v2096, 0.001143296
      %v2098 = vmul.f32 %v2084, %v2097
      %v2099 = vadd.f32 %v2098, 0.014752088
      %v2100 = vmul.f32 %v2084, %v2099
      %v2101 = vadd.f32 %v2100, 0.112945676
      %v2102 = vmul.f32 %v2084, %v2101
      %v2103 = vadd.f32 %v2102, 0.4994258
      %v2104 = vmul.f32 %v2084, %v2103
      %v2105 = vadd.f32 %v2104, 1.0
      %v2106 = vrcp.pop %v2105
      %v2107 = vmul.f32 %v2105, %v2106
      %v2108 = vsub.f32 1.0, %v2107
      %v2109 = vmul.f32 %v2106, %v2108
      %v2110 = vadd.f32 %v2106, %v2109
      %vm2111 = vweird.f32 %v2105
      %vm2112 = vweird.f32 %v2106
      %vm2113 = vmor %vm2111, %vm2112
      %v2114 = vsel %vm2113, %v2106, %v2110
      %v2115 = vand.u32 2147483647, %v2105
      %vm2116 = vcmp.eq.f32.partialorder %v2115, 8.507059e+37
      %v2117 = vand.u32 %v2105, 2147483648
      %v2118 = vor.u32 1.1754944e-38, %v2117
      %v2119 = vsel %vm2116, %v2118, %v2114
      %v2120 = vmul.f32 %v2095, %v2119
      %v2121 = vmin.f32 %v2120, 1.0
      %v2122 = vmax.f32 %v2121, -1.0
      %v2123 = vmul.f32 %v921, %v921
      %v2124 = vmin.f32 16.0, %v2123
      %v2125 = vmul.f32 %v2124, 2.1237322e-06
      %v2126 = vadd.f32 %v2125, 0.00028619796
      %v2127 = vmul.f32 %v2124, %v2126
      %v2128 = vadd.f32 %v2127, 0.0036580483
      %v2129 = vmul.f32 %v2124, %v2128
      %v2130 = vadd.f32 %v2129, 0.05243302
      %v2131 = vmul.f32 %v2124, %v2130
      %v2132 = vadd.f32 %v2131, 0.18741608
      %v2133 = vmul.f32 %v2124, %v2132
      %v2134 = vadd.f32 %v2133, 1.1283791
      %v2135 = vmul.f32 %v921, %v2134
      %v2136 = vmul.f32 %v2124, 3.8918573e-05
      %v2137 = vadd.f32 %v2136, 0.001143296
      %v2138 = vmul.f32 %v2124, %v2137
      %v2139 = vadd.f32 %v2138, 0.014752088
      %v2140 = vmul.f32 %v2124, %v2139
      %v2141 = vadd.f32 %v2140, 0.112945676
      %v2142 = vmul.f32 %v2124, %v2141
      %v2143 = vadd.f32 %v2142, 0.4994258
      %v2144 = vmul.f32 %v2124, %v2143
      %v2145 = vadd.f32 %v2144, 1.0
      %v2146 = vrcp.pop %v2145
      %v2147 = vmul.f32 %v2145, %v2146
      %v2148 = vsub.f32 1.0, %v2147
      %v2149 = vmul.f32 %v2146, %v2148
      %v2150 = vadd.f32 %v2146, %v2149
      %vm2151 = vweird.f32 %v2145
      %vm2152 = vweird.f32 %v2146
      %vm2153 = vmor %vm2151, %vm2152
      %v2154 = vsel %vm2153, %v2146, %v2150
      %v2155 = vand.u32 2147483647, %v2145
      %vm2156 = vcmp.eq.f32.partialorder %v2155, 8.507059e+37
      %v2157 = vand.u32 %v2145, 2147483648
      %v2158 = vor.u32 1.1754944e-38, %v2157
      %v2159 = vsel %vm2156, %v2158, %v2154
      %v2160 = vmul.f32 %v2135, %v2159
      %v2161 = vmin.f32 %v2160, 1.0
      %v2162 = vmax.f32 %v2161, -1.0
      %v2163 = vmul.f32 %v922, %v922
      %v2164 = vmin.f32 16.0, %v2163
      %v2165 = vmul.f32 %v2164, 2.1237322e-06
      %v2166 = vadd.f32 %v2165, 0.00028619796
      %v2167 = vmul.f32 %v2164, %v2166
      %v2168 = vadd.f32 %v2167, 0.0036580483
      %v2169 = vmul.f32 %v2164, %v2168
      %v2170 = vadd.f32 %v2169, 0.05243302
      %v2171 = vmul.f32 %v2164, %v2170
      %v2172 = vadd.f32 %v2171, 0.18741608
      %v2173 = vmul.f32 %v2164, %v2172
      %v2174 = vadd.f32 %v2173, 1.1283791
      %v2175 = vmul.f32 %v922, %v2174
      %v2176 = vmul.f32 %v2164, 3.8918573e-05
      %v2177 = vadd.f32 %v2176, 0.001143296
      %v2178 = vmul.f32 %v2164, %v2177
      %v2179 = vadd.f32 %v2178, 0.014752088
      %v2180 = vmul.f32 %v2164, %v2179
      %v2181 = vadd.f32 %v2180, 0.112945676
      %v2182 = vmul.f32 %v2164, %v2181
      %v2183 = vadd.f32 %v2182, 0.4994258
      %v2184 = vmul.f32 %v2164, %v2183
      %v2185 = vadd.f32 %v2184, 1.0
      %v2186 = vrcp.pop %v2185
      %v2187 = vmul.f32 %v2185, %v2186
      %v2188 = vsub.f32 1.0, %v2187
      %v2189 = vmul.f32 %v2186, %v2188
      %v2190 = vadd.f32 %v2186, %v2189
      %vm2191 = vweird.f32 %v2185
      %vm2192 = vweird.f32 %v2186
      %vm2193 = vmor %vm2191, %vm2192
      %v2194 = vsel %vm2193, %v2186, %v2190
      %v2195 = vand.u32 2147483647, %v2185
      %vm2196 = vcmp.eq.f32.partialorder %v2195, 8.507059e+37
      %v2197 = vand.u32 %v2185, 2147483648
      %v2198 = vor.u32 1.1754944e-38, %v2197
      %v2199 = vsel %vm2196, %v2198, %v2194
      %v2200 = vmul.f32 %v2175, %v2199
      %v2201 = vmin.f32 %v2200, 1.0
      %v2202 = vmax.f32 %v2201, -1.0
      %v2203 = vadd.f32 %v962, 1.0
      %v2204 = vadd.f32 %v1002, 1.0
      %v2205 = vadd.f32 %v1042, 1.0
      %v2206 = vadd.f32 %v1082, 1.0
      %v2207 = vadd.f32 %v1122, 1.0
      %v2208 = vadd.f32 %v1162, 1.0
      %v2209 = vadd.f32 %v1202, 1.0
      %v2210 = vadd.f32 %v1242, 1.0
      %v2211 = vadd.f32 %v1282, 1.0
      %v2212 = vadd.f32 %v1322, 1.0
      %v2213 = vadd.f32 %v1362, 1.0
      %v2214 = vadd.f32 %v1402, 1.0
      %v2215 = vadd.f32 %v1442, 1.0
      %v2216 = vadd.f32 %v1482, 1.0
      %v2217 = vadd.f32 %v1522, 1.0
      %v2218 = vadd.f32 %v1562, 1.0
      %v2219 = vadd.f32 %v1602, 1.0
      %v2220 = vadd.f32 %v1642, 1.0
      %v2221 = vadd.f32 %v1682, 1.0
      %v2222 = vadd.f32 %v1722, 1.0
      %v2223 = vadd.f32 %v1762, 1.0
      %v2224 = vadd.f32 %v1802, 1.0
      %v2225 = vadd.f32 %v1842, 1.0
      %v2226 = vadd.f32 %v1882, 1.0
      %v2227 = vadd.f32 %v1922, 1.0
      %v2228 = vadd.f32 %v1962, 1.0
      %v2229 = vadd.f32 %v2002, 1.0
      %v2230 = vadd.f32 %v2042, 1.0
      %v2231 = vadd.f32 %v2082, 1.0
      %v2232 = vadd.f32 %v2122, 1.0
      %v2233 = vadd.f32 %v2162, 1.0
      %v2234 = vadd.f32 %v2202, 1.0
      %v2235 = vmul.f32 %v859, %v2203
      %v2236 = vmul.f32 %v860, %v2204
      %v2237 = vmul.f32 %v861, %v2205
      %v2238 = vmul.f32 %v862, %v2206
      %v2239 = vmul.f32 %v863, %v2207
      %v2240 = vmul.f32 %v864, %v2208
      %v2241 = vmul.f32 %v865, %v2209
      %v2242 = vmul.f32 %v866, %v2210
      %v2243 = vmul.f32 %v867, %v2211
      %v2244 = vmul.f32 %v868, %v2212
      %v2245 = vmul.f32 %v869, %v2213
      %v2246 = vmul.f32 %v870, %v2214
      %v2247 = vmul.f32 %v871, %v2215
      %v2248 = vmul.f32 %v872, %v2216
      %v2249 = vmul.f32 %v873, %v2217
      %v2250 = vmul.f32 %v874, %v2218
      %v2251 = vmul.f32 %v875, %v2219
      %v2252 = vmul.f32 %v876, %v2220
      %v2253 = vmul.f32 %v877, %v2221
      %v2254 = vmul.f32 %v878, %v2222
      %v2255 = vmul.f32 %v879, %v2223
      %v2256 = vmul.f32 %v880, %v2224
      %v2257 = vmul.f32 %v881, %v2225
      %v2258 = vmul.f32 %v882, %v2226
      %v2259 = vmul.f32 %v883, %v2227
      %v2260 = vmul.f32 %v884, %v2228
      %v2261 = vmul.f32 %v885, %v2229
      %v2262 = vmul.f32 %v886, %v2230
      %v2263 = vmul.f32 %v887, %v2231
      %v2264 = vmul.f32 %v888, %v2232
      %v2265 = vmul.f32 %v889, %v2233
      %v2266 = vmul.f32 %v890, %v2234
      %2267 = vst.msk [vmem:[#allocation2] sm:$0xff] %vm572, 0.0
      %2268 = vst.msk [vmem:[#allocation2 + $0x8] sm:$0xff] %vm572, 0.0
      %vm2269 = vcmask 254976
      %2270 = vst.msk [vmem:[#allocation2 + $0x10] sm:$0x3] %vm2269, 0.0
      %2271 = vst.msk [vmem:[#allocation2 + $0x18] sm:$0xff] %vm572, 0.0
      %2272 = vst.msk [vmem:[#allocation2 + $0x20] sm:$0xff] %vm572, 0.0
      %2273 = vst.msk [vmem:[#allocation2 + $0x28] sm:$0x3] %vm2269, 0.0
      %2274 = vst.msk [vmem:[#allocation2 + $0x30] sm:$0xff] %vm572, 0.0
      %2275 = vst.msk [vmem:[#allocation2 + $0x38] sm:$0xff] %vm572, 0.0
      %2276 = vst.msk [vmem:[#allocation2 + $0x40] sm:$0x3] %vm2269, 0.0
      %2277 = vst.msk [vmem:[#allocation2 + $0x48] sm:$0xff] %vm572, 0.0
      %2278 = vst.msk [vmem:[#allocation2 + $0x50] sm:$0xff] %vm572, 0.0
      %2279 = vst.msk [vmem:[#allocation2 + $0x58] sm:$0x3] %vm2269, 0.0
      %2280 = vst.msk [vmem:[#allocation2 + $0x60] sm:$0xff] %vm572, 0.0
      %2281 = vst.msk [vmem:[#allocation2 + $0x68] sm:$0xff] %vm572, 0.0
      %2282 = vst.msk [vmem:[#allocation2 + $0x70] sm:$0x3] %vm2269, 0.0
      %2283 = vst.msk [vmem:[#allocation2 + $0x78] sm:$0xff] %vm572, 0.0
      %2284 = vst.msk [vmem:[#allocation2 + $0x80] sm:$0xff] %vm572, 0.0
      %2285 = vst.msk [vmem:[#allocation2 + $0x88] sm:$0x3] %vm2269, 0.0
      %2286 = vst.msk [vmem:[#allocation2 + $0x90] sm:$0xff] %vm572, 0.0
      %2287 = vst.msk [vmem:[#allocation2 + $0x98] sm:$0xff] %vm572, 0.0
      %2288 = vst.msk [vmem:[#allocation2 + $0xa0] sm:$0x3] %vm2269, 0.0
      %2289 = vst.msk [vmem:[#allocation2 + $0xa8] sm:$0xff] %vm572, 0.0
      %2290 = vst.msk [vmem:[#allocation2 + $0xb0] sm:$0xff] %vm572, 0.0
      %2291 = vst.msk [vmem:[#allocation2 + $0xb8] sm:$0x3] %vm2269, 0.0
      %2292 = vst.msk [vmem:[#allocation2 + $0xc0] sm:$0xff] %vm572, 0.0
      %2293 = vst.msk [vmem:[#allocation2 + $0xc8] sm:$0xff] %vm572, 0.0
      %2294 = vst.msk [vmem:[#allocation2 + $0xd0] sm:$0x3] %vm2269, 0.0
      %2295 = vst.msk [vmem:[#allocation2 + $0xd8] sm:$0xff] %vm572, 0.0
      %2296 = vst.msk [vmem:[#allocation2 + $0xe0] sm:$0xff] %vm572, 0.0
      %2297 = vst.msk [vmem:[#allocation2 + $0xe8] sm:$0x3] %vm2269, 0.0
      %2298 = vst.msk [vmem:[#allocation2 + $0xf0] sm:$0xff] %vm572, 0.0
      %2299 = vst.msk [vmem:[#allocation2 + $0xf8] sm:$0xff] %vm572, 0.0
      %2300 = vst.msk [vmem:[#allocation2 + $0x100] sm:$0x3] %vm2269, 0.0
      %2301 = vst.msk [vmem:[#allocation2 + $0x108] sm:$0xff] %vm572, 0.0
      %2302 = vst.msk [vmem:[#allocation2 + $0x110] sm:$0xff] %vm572, 0.0
      %2303 = vst.msk [vmem:[#allocation2 + $0x118] sm:$0x3] %vm2269, 0.0
      %2304 = vst.msk [vmem:[#allocation2 + $0x120] sm:$0xff] %vm572, 0.0
      %2305 = vst.msk [vmem:[#allocation2 + $0x128] sm:$0xff] %vm572, 0.0
      %2306 = vst.msk [vmem:[#allocation2 + $0x130] sm:$0x3] %vm2269, 0.0
      %2307 = vst.msk [vmem:[#allocation2 + $0x138] sm:$0xff] %vm572, 0.0
      %2308 = vst.msk [vmem:[#allocation2 + $0x140] sm:$0xff] %vm572, 0.0
      %2309 = vst.msk [vmem:[#allocation2 + $0x148] sm:$0x3] %vm2269, 0.0
      %2310 = vst.msk [vmem:[#allocation2 + $0x150] sm:$0xff] %vm572, 0.0
      %2311 = vst.msk [vmem:[#allocation2 + $0x158] sm:$0xff] %vm572, 0.0
      %2312 = vst.msk [vmem:[#allocation2 + $0x160] sm:$0x3] %vm2269, 0.0
      %2313 = vst.msk [vmem:[#allocation2 + $0x168] sm:$0xff] %vm572, 0.0
      %2314 = vst.msk [vmem:[#allocation2 + $0x170] sm:$0xff] %vm572, 0.0
      %2315 = vst.msk [vmem:[#allocation2 + $0x178] sm:$0x3] %vm2269, 0.0
      %2316 = vst.msk [vmem:[#allocation2 + $0x180] sm:$0xff] %vm572, 0.0
      %2317 = vst.msk [vmem:[#allocation2 + $0x188] sm:$0xff] %vm572, 0.0
      %2318 = vst.msk [vmem:[#allocation2 + $0x190] sm:$0x3] %vm2269, 0.0
      %2319 = vst.msk [vmem:[#allocation2 + $0x198] sm:$0xff] %vm572, 0.0
      %2320 = vst.msk [vmem:[#allocation2 + $0x1a0] sm:$0xff] %vm572, 0.0
      %2321 = vst.msk [vmem:[#allocation2 + $0x1a8] sm:$0x3] %vm2269, 0.0
      %s2322 = scalar_lea.vmem [#allocation2], 24
      %2323 = vst.msk [vmem:[%s2322 + $0x1] sm:$0xff] %vm572, %v2235
      %2324 = vst.msk [vmem:[%s2322 + $0x9] sm:$0xff] %vm572, %v2236
      %2325 = vst.msk [vmem:[%s2322 + $0x19] sm:$0xff] %vm572, %v2237
      %2326 = vst.msk [vmem:[%s2322 + $0x21] sm:$0xff] %vm572, %v2238
      %2327 = vst.msk [vmem:[%s2322 + $0x31] sm:$0xff] %vm572, %v2239
      %2328 = vst.msk [vmem:[%s2322 + $0x39] sm:$0xff] %vm572, %v2240
      %2329 = vst.msk [vmem:[%s2322 + $0x49] sm:$0xff] %vm572, %v2241
      %2330 = vst.msk [vmem:[%s2322 + $0x51] sm:$0xff] %vm572, %v2242
      %2331 = vst.msk [vmem:[%s2322 + $0x61] sm:$0xff] %vm572, %v2243
      %2332 = vst.msk [vmem:[%s2322 + $0x69] sm:$0xff] %vm572, %v2244
      %2333 = vst.msk [vmem:[%s2322 + $0x79] sm:$0xff] %vm572, %v2245
      %2334 = vst.msk [vmem:[%s2322 + $0x81] sm:$0xff] %vm572, %v2246
      %2335 = vst.msk [vmem:[%s2322 + $0x91] sm:$0xff] %vm572, %v2247
      %2336 = vst.msk [vmem:[%s2322 + $0x99] sm:$0xff] %vm572, %v2248
      %2337 = vst.msk [vmem:[%s2322 + $0xa9] sm:$0xff] %vm572, %v2249
      %2338 = vst.msk [vmem:[%s2322 + $0xb1] sm:$0xff] %vm572, %v2250
      %2339 = vst.msk [vmem:[%s2322 + $0xc1] sm:$0xff] %vm572, %v2251
      %2340 = vst.msk [vmem:[%s2322 + $0xc9] sm:$0xff] %vm572, %v2252
      %2341 = vst.msk [vmem:[%s2322 + $0xd9] sm:$0xff] %vm572, %v2253
      %2342 = vst.msk [vmem:[%s2322 + $0xe1] sm:$0xff] %vm572, %v2254
      %2343 = vst.msk [vmem:[%s2322 + $0xf1] sm:$0xff] %vm572, %v2255
      %2344 = vst.msk [vmem:[%s2322 + $0xf9] sm:$0xff] %vm572, %v2256
      %2345 = vst.msk [vmem:[%s2322 + $0x109] sm:$0xff] %vm572, %v2257
      %2346 = vst.msk [vmem:[%s2322 + $0x111] sm:$0xff] %vm572, %v2258
      %2347 = vst.msk [vmem:[%s2322 + $0x121] sm:$0xff] %vm572, %v2259
      %2348 = vst.msk [vmem:[%s2322 + $0x129] sm:$0xff] %vm572, %v2260
      %2349 = vst.msk [vmem:[%s2322 + $0x139] sm:$0xff] %vm572, %v2261
      %2350 = vst.msk [vmem:[%s2322 + $0x141] sm:$0xff] %vm572, %v2262
      %2351 = vst.msk [vmem:[%s2322 + $0x151] sm:$0xff] %vm572, %v2263
      %2352 = vst.msk [vmem:[%s2322 + $0x159] sm:$0xff] %vm572, %v2264
      %2353 = vst.msk [vmem:[%s2322 + $0x169] sm:$0xff] %vm572, %v2265
      %2354 = vst.msk [vmem:[%s2322 + $0x171] sm:$0xff] %vm572, %v2266
      %v2355 = vld [vmem:[#allocation2] sm:$0xff]
      %v2356 = vld [vmem:[#allocation2 + $0x8] sm:$0xff]
      %v2357 = vld [vmem:[#allocation2 + $0x18] sm:$0xff]
      %v2358 = vld [vmem:[#allocation2 + $0x20] sm:$0xff]
      %v2359 = vld [vmem:[#allocation2 + $0x30] sm:$0xff]
      %v2360 = vld [vmem:[#allocation2 + $0x38] sm:$0xff]
      %v2361 = vld [vmem:[#allocation2 + $0x48] sm:$0xff]
      %v2362 = vld [vmem:[#allocation2 + $0x50] sm:$0xff]
      %v2363 = vld [vmem:[#allocation2 + $0x60] sm:$0xff]
      %v2364 = vld [vmem:[#allocation2 + $0x68] sm:$0xff]
      %v2365 = vld [vmem:[#allocation2 + $0x78] sm:$0xff]
      %v2366 = vld [vmem:[#allocation2 + $0x80] sm:$0xff]
      %v2367 = vld [vmem:[#allocation2 + $0x90] sm:$0xff]
      %v2368 = vld [vmem:[#allocation2 + $0x98] sm:$0xff]
      %v2369 = vld [vmem:[#allocation2 + $0xa8] sm:$0xff]
      %v2370 = vld [vmem:[#allocation2 + $0xb0] sm:$0xff]
      %v2371 = vld [vmem:[#allocation2 + $0xc0] sm:$0xff]
      %v2372 = vld [vmem:[#allocation2 + $0xc8] sm:$0xff]
      %v2373 = vld [vmem:[#allocation2 + $0xd8] sm:$0xff]
      %v2374 = vld [vmem:[#allocation2 + $0xe0] sm:$0xff]
      %v2375 = vld [vmem:[#allocation2 + $0xf0] sm:$0xff]
      %v2376 = vld [vmem:[#allocation2 + $0xf8] sm:$0xff]
      %v2377 = vld [vmem:[#allocation2 + $0x108] sm:$0xff]
      %v2378 = vld [vmem:[#allocation2 + $0x110] sm:$0xff]
      %v2379 = vld [vmem:[#allocation2 + $0x120] sm:$0xff]
      %v2380 = vld [vmem:[#allocation2 + $0x128] sm:$0xff]
      %v2381 = vld [vmem:[#allocation2 + $0x138] sm:$0xff]
      %v2382 = vld [vmem:[#allocation2 + $0x140] sm:$0xff]
      %v2383 = vld [vmem:[#allocation2 + $0x150] sm:$0xff]
      %v2384 = vld [vmem:[#allocation2 + $0x158] sm:$0xff]
      %v2385 = vld [vmem:[#allocation2 + $0x168] sm:$0xff]
      %v2386 = vld [vmem:[#allocation2 + $0x170] sm:$0xff]
      %v2387 = vld [vmem:[#allocation2 + $0x1] sm:$0xff]
      %v2388 = vld [vmem:[#allocation2 + $0x9] sm:$0xff]
      %v2389 = vld [vmem:[#allocation2 + $0x19] sm:$0xff]
      %v2390 = vld [vmem:[#allocation2 + $0x21] sm:$0xff]
      %v2391 = vld [vmem:[#allocation2 + $0x31] sm:$0xff]
      %v2392 = vld [vmem:[#allocation2 + $0x39] sm:$0xff]
      %v2393 = vld [vmem:[#allocation2 + $0x49] sm:$0xff]
      %v2394 = vld [vmem:[#allocation2 + $0x51] sm:$0xff]
      %v2395 = vld [vmem:[#allocation2 + $0x61] sm:$0xff]
      %v2396 = vld [vmem:[#allocation2 + $0x69] sm:$0xff]
      %v2397 = vld [vmem:[#allocation2 + $0x79] sm:$0xff]
      %v2398 = vld [vmem:[#allocation2 + $0x81] sm:$0xff]
      %v2399 = vld [vmem:[#allocation2 + $0x91] sm:$0xff]
      %v2400 = vld [vmem:[#allocation2 + $0x99] sm:$0xff]
      %v2401 = vld [vmem:[#allocation2 + $0xa9] sm:$0xff]
      %v2402 = vld [vmem:[#allocation2 + $0xb1] sm:$0xff]
      %v2403 = vld [vmem:[#allocation2 + $0xc1] sm:$0xff]
      %v2404 = vld [vmem:[#allocation2 + $0xc9] sm:$0xff]
      %v2405 = vld [vmem:[#allocation2 + $0xd9] sm:$0xff]
      %v2406 = vld [vmem:[#allocation2 + $0xe1] sm:$0xff]
      %v2407 = vld [vmem:[#allocation2 + $0xf1] sm:$0xff]
      %v2408 = vld [vmem:[#allocation2 + $0xf9] sm:$0xff]
      %v2409 = vld [vmem:[#allocation2 + $0x109] sm:$0xff]
      %v2410 = vld [vmem:[#allocation2 + $0x111] sm:$0xff]
      %v2411 = vld [vmem:[#allocation2 + $0x121] sm:$0xff]
      %v2412 = vld [vmem:[#allocation2 + $0x129] sm:$0xff]
      %v2413 = vld [vmem:[#allocation2 + $0x139] sm:$0xff]
      %v2414 = vld [vmem:[#allocation2 + $0x141] sm:$0xff]
      %v2415 = vld [vmem:[#allocation2 + $0x151] sm:$0xff]
      %v2416 = vld [vmem:[#allocation2 + $0x159] sm:$0xff]
      %v2417 = vld [vmem:[#allocation2 + $0x169] sm:$0xff]
      %v2418 = vld [vmem:[#allocation2 + $0x171] sm:$0xff]
      %v2419 = vld [vmem:[#allocation2 + $0x2] sm:$0xff]
      %v2420 = vld [vmem:[#allocation2 + $0xa] sm:$0xff]
      %v2421 = vld [vmem:[#allocation2 + $0x1a] sm:$0xff]
      %v2422 = vld [vmem:[#allocation2 + $0x22] sm:$0xff]
      %v2423 = vld [vmem:[#allocation2 + $0x32] sm:$0xff]
      %v2424 = vld [vmem:[#allocation2 + $0x3a] sm:$0xff]
      %v2425 = vld [vmem:[#allocation2 + $0x4a] sm:$0xff]
      %v2426 = vld [vmem:[#allocation2 + $0x52] sm:$0xff]
      %v2427 = vld [vmem:[#allocation2 + $0x62] sm:$0xff]
      %v2428 = vld [vmem:[#allocation2 + $0x6a] sm:$0xff]
      %v2429 = vld [vmem:[#allocation2 + $0x7a] sm:$0xff]
      %v2430 = vld [vmem:[#allocation2 + $0x82] sm:$0xff]
      %v2431 = vld [vmem:[#allocation2 + $0x92] sm:$0xff]
      %v2432 = vld [vmem:[#allocation2 + $0x9a] sm:$0xff]
      %v2433 = vld [vmem:[#allocation2 + $0xaa] sm:$0xff]
      %v2434 = vld [vmem:[#allocation2 + $0xb2] sm:$0xff]
      %v2435 = vld [vmem:[#allocation2 + $0xc2] sm:$0xff]
      %v2436 = vld [vmem:[#allocation2 + $0xca] sm:$0xff]
      %v2437 = vld [vmem:[#allocation2 + $0xda] sm:$0xff]
      %v2438 = vld [vmem:[#allocation2 + $0xe2] sm:$0xff]
      %v2439 = vld [vmem:[#allocation2 + $0xf2] sm:$0xff]
      %v2440 = vld [vmem:[#allocation2 + $0xfa] sm:$0xff]
      %v2441 = vld [vmem:[#allocation2 + $0x10a] sm:$0xff]
      %v2442 = vld [vmem:[#allocation2 + $0x112] sm:$0xff]
      %v2443 = vld [vmem:[#allocation2 + $0x122] sm:$0xff]
      %v2444 = vld [vmem:[#allocation2 + $0x12a] sm:$0xff]
      %v2445 = vld [vmem:[#allocation2 + $0x13a] sm:$0xff]
      %v2446 = vld [vmem:[#allocation2 + $0x142] sm:$0xff]
      %v2447 = vld [vmem:[#allocation2 + $0x152] sm:$0xff]
      %v2448 = vld [vmem:[#allocation2 + $0x15a] sm:$0xff]
      %v2449 = vld [vmem:[#allocation2 + $0x16a] sm:$0xff]
      %v2450 = vld [vmem:[#allocation2 + $0x172] sm:$0xff]
      %v2451 = vld [vmem:[%s2322] sm:$0xff]
      %v2452 = vld [vmem:[%s2322 + $0x8] sm:$0xff]
      %v2453 = vld [vmem:[%s2322 + $0x18] sm:$0xff]
      %v2454 = vld [vmem:[%s2322 + $0x20] sm:$0xff]
      %v2455 = vld [vmem:[%s2322 + $0x30] sm:$0xff]
      %v2456 = vld [vmem:[%s2322 + $0x38] sm:$0xff]
      %v2457 = vld [vmem:[%s2322 + $0x48] sm:$0xff]
      %v2458 = vld [vmem:[%s2322 + $0x50] sm:$0xff]
      %v2459 = vld [vmem:[%s2322 + $0x60] sm:$0xff]
      %v2460 = vld [vmem:[%s2322 + $0x68] sm:$0xff]
      %v2461 = vld [vmem:[%s2322 + $0x78] sm:$0xff]
      %v2462 = vld [vmem:[%s2322 + $0x80] sm:$0xff]
      %v2463 = vld [vmem:[%s2322 + $0x90] sm:$0xff]
      %v2464 = vld [vmem:[%s2322 + $0x98] sm:$0xff]
      %v2465 = vld [vmem:[%s2322 + $0xa8] sm:$0xff]
      %v2466 = vld [vmem:[%s2322 + $0xb0] sm:$0xff]
      %v2467 = vld [vmem:[%s2322 + $0xc0] sm:$0xff]
      %v2468 = vld [vmem:[%s2322 + $0xc8] sm:$0xff]
      %v2469 = vld [vmem:[%s2322 + $0xd8] sm:$0xff]
      %v2470 = vld [vmem:[%s2322 + $0xe0] sm:$0xff]
      %v2471 = vld [vmem:[%s2322 + $0xf0] sm:$0xff]
      %v2472 = vld [vmem:[%s2322 + $0xf8] sm:$0xff]
      %v2473 = vld [vmem:[%s2322 + $0x108] sm:$0xff]
      %v2474 = vld [vmem:[%s2322 + $0x110] sm:$0xff]
      %v2475 = vld [vmem:[%s2322 + $0x120] sm:$0xff]
      %v2476 = vld [vmem:[%s2322 + $0x128] sm:$0xff]
      %v2477 = vld [vmem:[%s2322 + $0x138] sm:$0xff]
      %v2478 = vld [vmem:[%s2322 + $0x140] sm:$0xff]
      %v2479 = vld [vmem:[%s2322 + $0x150] sm:$0xff]
      %v2480 = vld [vmem:[%s2322 + $0x158] sm:$0xff]
      %v2481 = vld [vmem:[%s2322 + $0x168] sm:$0xff]
      %v2482 = vld [vmem:[%s2322 + $0x170] sm:$0xff]
      %v2483 = vld [vmem:[%s2322 + $0x1] sm:$0xff]
      %v2484 = vld [vmem:[%s2322 + $0x9] sm:$0xff]
      %v2485 = vld [vmem:[%s2322 + $0x19] sm:$0xff]
      %v2486 = vld [vmem:[%s2322 + $0x21] sm:$0xff]
      %v2487 = vld [vmem:[%s2322 + $0x31] sm:$0xff]
      %v2488 = vld [vmem:[%s2322 + $0x39] sm:$0xff]
      %v2489 = vld [vmem:[%s2322 + $0x49] sm:$0xff]
      %v2490 = vld [vmem:[%s2322 + $0x51] sm:$0xff]
      %v2491 = vld [vmem:[%s2322 + $0x61] sm:$0xff]
      %v2492 = vld [vmem:[%s2322 + $0x69] sm:$0xff]
      %v2493 = vld [vmem:[%s2322 + $0x79] sm:$0xff]
      %v2494 = vld [vmem:[%s2322 + $0x81] sm:$0xff]
      %v2495 = vld [vmem:[%s2322 + $0x91] sm:$0xff]
      %v2496 = vld [vmem:[%s2322 + $0x99] sm:$0xff]
      %v2497 = vld [vmem:[%s2322 + $0xa9] sm:$0xff]
      %v2498 = vld [vmem:[%s2322 + $0xb1] sm:$0xff]
      %v2499 = vld [vmem:[%s2322 + $0xc1] sm:$0xff]
      %v2500 = vld [vmem:[%s2322 + $0xc9] sm:$0xff]
      %v2501 = vld [vmem:[%s2322 + $0xd9] sm:$0xff]
      %v2502 = vld [vmem:[%s2322 + $0xe1] sm:$0xff]
      %v2503 = vld [vmem:[%s2322 + $0xf1] sm:$0xff]
      %v2504 = vld [vmem:[%s2322 + $0xf9] sm:$0xff]
      %v2505 = vld [vmem:[%s2322 + $0x109] sm:$0xff]
      %v2506 = vld [vmem:[%s2322 + $0x111] sm:$0xff]
      %v2507 = vld [vmem:[%s2322 + $0x121] sm:$0xff]
      %v2508 = vld [vmem:[%s2322 + $0x129] sm:$0xff]
      %v2509 = vld [vmem:[%s2322 + $0x139] sm:$0xff]
      %v2510 = vld [vmem:[%s2322 + $0x141] sm:$0xff]
      %v2511 = vld [vmem:[%s2322 + $0x151] sm:$0xff]
      %v2512 = vld [vmem:[%s2322 + $0x159] sm:$0xff]
      %v2513 = vld [vmem:[%s2322 + $0x169] sm:$0xff]
      %v2514 = vld [vmem:[%s2322 + $0x171] sm:$0xff]
      %v2515 = vld [vmem:[%s2322 + $0x2] sm:$0xff]
      %v2516 = vld [vmem:[%s2322 + $0xa] sm:$0xff]
      %v2517 = vld [vmem:[%s2322 + $0x1a] sm:$0xff]
      %v2518 = vld [vmem:[%s2322 + $0x22] sm:$0xff]
      %v2519 = vld [vmem:[%s2322 + $0x32] sm:$0xff]
      %v2520 = vld [vmem:[%s2322 + $0x3a] sm:$0xff]
      %v2521 = vld [vmem:[%s2322 + $0x4a] sm:$0xff]
      %v2522 = vld [vmem:[%s2322 + $0x52] sm:$0xff]
      %v2523 = vld [vmem:[%s2322 + $0x62] sm:$0xff]
      %v2524 = vld [vmem:[%s2322 + $0x6a] sm:$0xff]
      %v2525 = vld [vmem:[%s2322 + $0x7a] sm:$0xff]
      %v2526 = vld [vmem:[%s2322 + $0x82] sm:$0xff]
      %v2527 = vld [vmem:[%s2322 + $0x92] sm:$0xff]
      %v2528 = vld [vmem:[%s2322 + $0x9a] sm:$0xff]
      %v2529 = vld [vmem:[%s2322 + $0xaa] sm:$0xff]
      %v2530 = vld [vmem:[%s2322 + $0xb2] sm:$0xff]
      %v2531 = vld [vmem:[%s2322 + $0xc2] sm:$0xff]
      %v2532 = vld [vmem:[%s2322 + $0xca] sm:$0xff]
      %v2533 = vld [vmem:[%s2322 + $0xda] sm:$0xff]
      %v2534 = vld [vmem:[%s2322 + $0xe2] sm:$0xff]
      %v2535 = vld [vmem:[%s2322 + $0xf2] sm:$0xff]
      %v2536 = vld [vmem:[%s2322 + $0xfa] sm:$0xff]
      %v2537 = vld [vmem:[%s2322 + $0x10a] sm:$0xff]
      %v2538 = vld [vmem:[%s2322 + $0x112] sm:$0xff]
      %v2539 = vld [vmem:[%s2322 + $0x122] sm:$0xff]
      %v2540 = vld [vmem:[%s2322 + $0x12a] sm:$0xff]
      %v2541 = vld [vmem:[%s2322 + $0x13a] sm:$0xff]
      %v2542 = vld [vmem:[%s2322 + $0x142] sm:$0xff]
      %v2543 = vld [vmem:[%s2322 + $0x152] sm:$0xff]
      %v2544 = vld [vmem:[%s2322 + $0x15a] sm:$0xff]
      %v2545 = vld [vmem:[%s2322 + $0x16a] sm:$0xff]
      %v2546 = vld [vmem:[%s2322 + $0x172] sm:$0xff]
      %s2547 = scalar_lea.vmem [#allocation2], 48
      %v2548 = vld [vmem:[%s2547] sm:$0xff]
      %v2549 = vld [vmem:[%s2547 + $0x8] sm:$0xff]
      %v2550 = vld [vmem:[%s2547 + $0x18] sm:$0xff]
      %v2551 = vld [vmem:[%s2547 + $0x20] sm:$0xff]
      %v2552 = vld [vmem:[%s2547 + $0x30] sm:$0xff]
      %v2553 = vld [vmem:[%s2547 + $0x38] sm:$0xff]
      %v2554 = vld [vmem:[%s2547 + $0x48] sm:$0xff]
      %v2555 = vld [vmem:[%s2547 + $0x50] sm:$0xff]
      %v2556 = vld [vmem:[%s2547 + $0x60] sm:$0xff]
      %v2557 = vld [vmem:[%s2547 + $0x68] sm:$0xff]
      %v2558 = vld [vmem:[%s2547 + $0x78] sm:$0xff]
      %v2559 = vld [vmem:[%s2547 + $0x80] sm:$0xff]
      %v2560 = vld [vmem:[%s2547 + $0x90] sm:$0xff]
      %v2561 = vld [vmem:[%s2547 + $0x98] sm:$0xff]
      %v2562 = vld [vmem:[%s2547 + $0xa8] sm:$0xff]
      %v2563 = vld [vmem:[%s2547 + $0xb0] sm:$0xff]
      %v2564 = vld [vmem:[%s2547 + $0xc0] sm:$0xff]
      %v2565 = vld [vmem:[%s2547 + $0xc8] sm:$0xff]
      %v2566 = vld [vmem:[%s2547 + $0xd8] sm:$0xff]
      %v2567 = vld [vmem:[%s2547 + $0xe0] sm:$0xff]
      %v2568 = vld [vmem:[%s2547 + $0xf0] sm:$0xff]
      %v2569 = vld [vmem:[%s2547 + $0xf8] sm:$0xff]
      %v2570 = vld [vmem:[%s2547 + $0x108] sm:$0xff]
      %v2571 = vld [vmem:[%s2547 + $0x110] sm:$0xff]
      %v2572 = vld [vmem:[%s2547 + $0x120] sm:$0xff]
      %v2573 = vld [vmem:[%s2547 + $0x128] sm:$0xff]
      %v2574 = vld [vmem:[%s2547 + $0x138] sm:$0xff]
      %v2575 = vld [vmem:[%s2547 + $0x140] sm:$0xff]
      %v2576 = vld [vmem:[%s2547 + $0x150] sm:$0xff]
      %v2577 = vld [vmem:[%s2547 + $0x158] sm:$0xff]
      %v2578 = vld [vmem:[%s2547 + $0x168] sm:$0xff]
      %v2579 = vld [vmem:[%s2547 + $0x170] sm:$0xff]
      %v2580 = vld [vmem:[%s2547 + $0x1] sm:$0xff]
      %v2581 = vld [vmem:[%s2547 + $0x9] sm:$0xff]
      %v2582 = vld [vmem:[%s2547 + $0x19] sm:$0xff]
      %v2583 = vld [vmem:[%s2547 + $0x21] sm:$0xff]
      %v2584 = vld [vmem:[%s2547 + $0x31] sm:$0xff]
      %v2585 = vld [vmem:[%s2547 + $0x39] sm:$0xff]
      %v2586 = vld [vmem:[%s2547 + $0x49] sm:$0xff]
      %v2587 = vld [vmem:[%s2547 + $0x51] sm:$0xff]
      %v2588 = vld [vmem:[%s2547 + $0x61] sm:$0xff]
      %v2589 = vld [vmem:[%s2547 + $0x69] sm:$0xff]
      %v2590 = vld [vmem:[%s2547 + $0x79] sm:$0xff]
      %v2591 = vld [vmem:[%s2547 + $0x81] sm:$0xff]
      %v2592 = vld [vmem:[%s2547 + $0x91] sm:$0xff]
      %v2593 = vld [vmem:[%s2547 + $0x99] sm:$0xff]
      %v2594 = vld [vmem:[%s2547 + $0xa9] sm:$0xff]
      %v2595 = vld [vmem:[%s2547 + $0xb1] sm:$0xff]
      %v2596 = vld [vmem:[%s2547 + $0xc1] sm:$0xff]
      %v2597 = vld [vmem:[%s2547 + $0xc9] sm:$0xff]
      %v2598 = vld [vmem:[%s2547 + $0xd9] sm:$0xff]
      %v2599 = vld [vmem:[%s2547 + $0xe1] sm:$0xff]
      %v2600 = vld [vmem:[%s2547 + $0xf1] sm:$0xff]
      %v2601 = vld [vmem:[%s2547 + $0xf9] sm:$0xff]
      %v2602 = vld [vmem:[%s2547 + $0x109] sm:$0xff]
      %v2603 = vld [vmem:[%s2547 + $0x111] sm:$0xff]
      %v2604 = vld [vmem:[%s2547 + $0x121] sm:$0xff]
      %v2605 = vld [vmem:[%s2547 + $0x129] sm:$0xff]
      %v2606 = vld [vmem:[%s2547 + $0x139] sm:$0xff]
      %v2607 = vld [vmem:[%s2547 + $0x141] sm:$0xff]
      %v2608 = vld [vmem:[%s2547 + $0x151] sm:$0xff]
      %v2609 = vld [vmem:[%s2547 + $0x159] sm:$0xff]
      %v2610 = vld [vmem:[%s2547 + $0x169] sm:$0xff]
      %v2611 = vld [vmem:[%s2547 + $0x171] sm:$0xff]
      %v2612 = vld [vmem:[%s2547 + $0x2] sm:$0xff]
      %v2613 = vld [vmem:[%s2547 + $0xa] sm:$0xff]
      %v2614 = vld [vmem:[%s2547 + $0x1a] sm:$0xff]
      %v2615 = vld [vmem:[%s2547 + $0x22] sm:$0xff]
      %v2616 = vld [vmem:[%s2547 + $0x32] sm:$0xff]
      %v2617 = vld [vmem:[%s2547 + $0x3a] sm:$0xff]
      %v2618 = vld [vmem:[%s2547 + $0x4a] sm:$0xff]
      %v2619 = vld [vmem:[%s2547 + $0x52] sm:$0xff]
      %v2620 = vld [vmem:[%s2547 + $0x62] sm:$0xff]
      %v2621 = vld [vmem:[%s2547 + $0x6a] sm:$0xff]
      %v2622 = vld [vmem:[%s2547 + $0x7a] sm:$0xff]
      %v2623 = vld [vmem:[%s2547 + $0x82] sm:$0xff]
      %v2624 = vld [vmem:[%s2547 + $0x92] sm:$0xff]
      %v2625 = vld [vmem:[%s2547 + $0x9a] sm:$0xff]
      %v2626 = vld [vmem:[%s2547 + $0xaa] sm:$0xff]
      %v2627 = vld [vmem:[%s2547 + $0xb2] sm:$0xff]
      %v2628 = vld [vmem:[%s2547 + $0xc2] sm:$0xff]
      %v2629 = vld [vmem:[%s2547 + $0xca] sm:$0xff]
      %v2630 = vld [vmem:[%s2547 + $0xda] sm:$0xff]
      %v2631 = vld [vmem:[%s2547 + $0xe2] sm:$0xff]
      %v2632 = vld [vmem:[%s2547 + $0xf2] sm:$0xff]
      %v2633 = vld [vmem:[%s2547 + $0xfa] sm:$0xff]
      %v2634 = vld [vmem:[%s2547 + $0x10a] sm:$0xff]
      %v2635 = vld [vmem:[%s2547 + $0x112] sm:$0xff]
      %v2636 = vld [vmem:[%s2547 + $0x122] sm:$0xff]
      %v2637 = vld [vmem:[%s2547 + $0x12a] sm:$0xff]
      %v2638 = vld [vmem:[%s2547 + $0x13a] sm:$0xff]
      %v2639 = vld [vmem:[%s2547 + $0x142] sm:$0xff]
      %v2640 = vld [vmem:[%s2547 + $0x152] sm:$0xff]
      %v2641 = vld [vmem:[%s2547 + $0x15a] sm:$0xff]
      %v2642 = vld [vmem:[%s2547 + $0x16a] sm:$0xff]
      %v2643 = vld [vmem:[%s2547 + $0x172] sm:$0xff]
      %2676 = vrot.lane.b32.xlu0 %v2387, 32
      %v2677 = vpop.permute.xlu0 %2676
      %2678 = vrot.lane.b32.xlu0 %v2388, 32
      %v2679 = vpop.permute.xlu0 %2678
      %2680 = vrot.lane.b32.xlu0 %v2389, 32
      %v2681 = vpop.permute.xlu0 %2680
      %2682 = vrot.lane.b32.xlu0 %v2390, 32
      %v2683 = vpop.permute.xlu0 %2682
      %2684 = vrot.lane.b32.xlu0 %v2391, 32
      %v2685 = vpop.permute.xlu0 %2684
      %2686 = vrot.lane.b32.xlu0 %v2392, 32
      %v2687 = vpop.permute.xlu0 %2686
      %2688 = vrot.lane.b32.xlu0 %v2393, 32
      %v2689 = vpop.permute.xlu0 %2688
      %2690 = vrot.lane.b32.xlu0 %v2394, 32
      %v2691 = vpop.permute.xlu0 %2690
      %2692 = vrot.lane.b32.xlu0 %v2395, 32
      %v2693 = vpop.permute.xlu0 %2692
      %2694 = vrot.lane.b32.xlu0 %v2396, 32
      %v2695 = vpop.permute.xlu0 %2694
      %2696 = vrot.lane.b32.xlu0 %v2397, 32
      %v2697 = vpop.permute.xlu0 %2696
      %2698 = vrot.lane.b32.xlu0 %v2398, 32
      %v2699 = vpop.permute.xlu0 %2698
      %2700 = vrot.lane.b32.xlu0 %v2399, 32
      %v2701 = vpop.permute.xlu0 %2700
      %2702 = vrot.lane.b32.xlu0 %v2400, 32
      %v2703 = vpop.permute.xlu0 %2702
      %2704 = vrot.lane.b32.xlu0 %v2401, 32
      %v2705 = vpop.permute.xlu0 %2704
      %2706 = vrot.lane.b32.xlu0 %v2402, 32
      %v2707 = vpop.permute.xlu0 %2706
      %2708 = vrot.lane.b32.xlu0 %v2403, 32
      %v2709 = vpop.permute.xlu0 %2708
      %2710 = vrot.lane.b32.xlu0 %v2404, 32
      %v2711 = vpop.permute.xlu0 %2710
      %2712 = vrot.lane.b32.xlu0 %v2405, 32
      %v2713 = vpop.permute.xlu0 %2712
      %2714 = vrot.lane.b32.xlu0 %v2406, 32
      %v2715 = vpop.permute.xlu0 %2714
      %2716 = vrot.lane.b32.xlu0 %v2407, 32
      %v2717 = vpop.permute.xlu0 %2716
      %2718 = vrot.lane.b32.xlu0 %v2408, 32
      %v2719 = vpop.permute.xlu0 %2718
      %2720 = vrot.lane.b32.xlu0 %v2409, 32
      %v2721 = vpop.permute.xlu0 %2720
      %2722 = vrot.lane.b32.xlu0 %v2410, 32
      %v2723 = vpop.permute.xlu0 %2722
      %2724 = vrot.lane.b32.xlu0 %v2411, 32
      %v2725 = vpop.permute.xlu0 %2724
      %2726 = vrot.lane.b32.xlu0 %v2412, 32
      %v2727 = vpop.permute.xlu0 %2726
      %2728 = vrot.lane.b32.xlu0 %v2413, 32
      %v2729 = vpop.permute.xlu0 %2728
      %2730 = vrot.lane.b32.xlu0 %v2414, 32
      %v2731 = vpop.permute.xlu0 %2730
      %2732 = vrot.lane.b32.xlu0 %v2415, 32
      %v2733 = vpop.permute.xlu0 %2732
      %2734 = vrot.lane.b32.xlu0 %v2416, 32
      %v2735 = vpop.permute.xlu0 %2734
      %2736 = vrot.lane.b32.xlu0 %v2417, 32
      %v2737 = vpop.permute.xlu0 %2736
      %2738 = vrot.lane.b32.xlu0 %v2418, 32
      %v2739 = vpop.permute.xlu0 %2738
      %2804 = vrot.lane.b32.xlu0 %v2419, 64
      %v2805 = vpop.permute.xlu0 %2804
      %2806 = vrot.lane.b32.xlu0 %v2420, 64
      %v2807 = vpop.permute.xlu0 %2806
      %2808 = vrot.lane.b32.xlu0 %v2421, 64
      %v2809 = vpop.permute.xlu0 %2808
      %2810 = vrot.lane.b32.xlu0 %v2422, 64
      %v2811 = vpop.permute.xlu0 %2810
      %2812 = vrot.lane.b32.xlu0 %v2423, 64
      %v2813 = vpop.permute.xlu0 %2812
      %2814 = vrot.lane.b32.xlu0 %v2424, 64
      %v2815 = vpop.permute.xlu0 %2814
      %2816 = vrot.lane.b32.xlu0 %v2425, 64
      %v2817 = vpop.permute.xlu0 %2816
      %2818 = vrot.lane.b32.xlu0 %v2426, 64
      %v2819 = vpop.permute.xlu0 %2818
      %2820 = vrot.lane.b32.xlu0 %v2427, 64
      %v2821 = vpop.permute.xlu0 %2820
      %2822 = vrot.lane.b32.xlu0 %v2428, 64
      %v2823 = vpop.permute.xlu0 %2822
      %2824 = vrot.lane.b32.xlu0 %v2429, 64
      %v2825 = vpop.permute.xlu0 %2824
      %2826 = vrot.lane.b32.xlu0 %v2430, 64
      %v2827 = vpop.permute.xlu0 %2826
      %2828 = vrot.lane.b32.xlu0 %v2431, 64
      %v2829 = vpop.permute.xlu0 %2828
      %2830 = vrot.lane.b32.xlu0 %v2432, 64
      %v2831 = vpop.permute.xlu0 %2830
      %2832 = vrot.lane.b32.xlu0 %v2433, 64
      %v2833 = vpop.permute.xlu0 %2832
      %2834 = vrot.lane.b32.xlu0 %v2434, 64
      %v2835 = vpop.permute.xlu0 %2834
      %2836 = vrot.lane.b32.xlu0 %v2435, 64
      %v2837 = vpop.permute.xlu0 %2836
      %2838 = vrot.lane.b32.xlu0 %v2436, 64
      %v2839 = vpop.permute.xlu0 %2838
      %2840 = vrot.lane.b32.xlu0 %v2437, 64
      %v2841 = vpop.permute.xlu0 %2840
      %2842 = vrot.lane.b32.xlu0 %v2438, 64
      %v2843 = vpop.permute.xlu0 %2842
      %2844 = vrot.lane.b32.xlu0 %v2439, 64
      %v2845 = vpop.permute.xlu0 %2844
      %2846 = vrot.lane.b32.xlu0 %v2440, 64
      %v2847 = vpop.permute.xlu0 %2846
      %2848 = vrot.lane.b32.xlu0 %v2441, 64
      %v2849 = vpop.permute.xlu0 %2848
      %2850 = vrot.lane.b32.xlu0 %v2442, 64
      %v2851 = vpop.permute.xlu0 %2850
      %2852 = vrot.lane.b32.xlu0 %v2443, 64
      %v2853 = vpop.permute.xlu0 %2852
      %2854 = vrot.lane.b32.xlu0 %v2444, 64
      %v2855 = vpop.permute.xlu0 %2854
      %2856 = vrot.lane.b32.xlu0 %v2445, 64
      %v2857 = vpop.permute.xlu0 %2856
      %2858 = vrot.lane.b32.xlu0 %v2446, 64
      %v2859 = vpop.permute.xlu0 %2858
      %2860 = vrot.lane.b32.xlu0 %v2447, 64
      %v2861 = vpop.permute.xlu0 %2860
      %2862 = vrot.lane.b32.xlu0 %v2448, 64
      %v2863 = vpop.permute.xlu0 %2862
      %2864 = vrot.lane.b32.xlu0 %v2449, 64
      %v2865 = vpop.permute.xlu0 %2864
      %2866 = vrot.lane.b32.xlu0 %v2450, 64
      %v2867 = vpop.permute.xlu0 %2866
      %2932 = vrot.lane.b32.xlu0 %v2451, 96
      %v2933 = vpop.permute.xlu0 %2932
      %2934 = vrot.lane.b32.xlu0 %v2452, 96
      %v2935 = vpop.permute.xlu0 %2934
      %2936 = vrot.lane.b32.xlu0 %v2453, 96
      %v2937 = vpop.permute.xlu0 %2936
      %2938 = vrot.lane.b32.xlu0 %v2454, 96
      %v2939 = vpop.permute.xlu0 %2938
      %2940 = vrot.lane.b32.xlu0 %v2455, 96
      %v2941 = vpop.permute.xlu0 %2940
      %2942 = vrot.lane.b32.xlu0 %v2456, 96
      %v2943 = vpop.permute.xlu0 %2942
      %2944 = vrot.lane.b32.xlu0 %v2457, 96
      %v2945 = vpop.permute.xlu0 %2944
      %2946 = vrot.lane.b32.xlu0 %v2458, 96
      %v2947 = vpop.permute.xlu0 %2946
      %2948 = vrot.lane.b32.xlu0 %v2459, 96
      %v2949 = vpop.permute.xlu0 %2948
      %2950 = vrot.lane.b32.xlu0 %v2460, 96
      %v2951 = vpop.permute.xlu0 %2950
      %2952 = vrot.lane.b32.xlu0 %v2461, 96
      %v2953 = vpop.permute.xlu0 %2952
      %2954 = vrot.lane.b32.xlu0 %v2462, 96
      %v2955 = vpop.permute.xlu0 %2954
      %2956 = vrot.lane.b32.xlu0 %v2463, 96
      %v2957 = vpop.permute.xlu0 %2956
      %2958 = vrot.lane.b32.xlu0 %v2464, 96
      %v2959 = vpop.permute.xlu0 %2958
      %2960 = vrot.lane.b32.xlu0 %v2465, 96
      %v2961 = vpop.permute.xlu0 %2960
      %2962 = vrot.lane.b32.xlu0 %v2466, 96
      %v2963 = vpop.permute.xlu0 %2962
      %2964 = vrot.lane.b32.xlu0 %v2467, 96
      %v2965 = vpop.permute.xlu0 %2964
      %2966 = vrot.lane.b32.xlu0 %v2468, 96
      %v2967 = vpop.permute.xlu0 %2966
      %2968 = vrot.lane.b32.xlu0 %v2469, 96
      %v2969 = vpop.permute.xlu0 %2968
      %2970 = vrot.lane.b32.xlu0 %v2470, 96
      %v2971 = vpop.permute.xlu0 %2970
      %2972 = vrot.lane.b32.xlu0 %v2471, 96
      %v2973 = vpop.permute.xlu0 %2972
      %2974 = vrot.lane.b32.xlu0 %v2472, 96
      %v2975 = vpop.permute.xlu0 %2974
      %2976 = vrot.lane.b32.xlu0 %v2473, 96
      %v2977 = vpop.permute.xlu0 %2976
      %2978 = vrot.lane.b32.xlu0 %v2474, 96
      %v2979 = vpop.permute.xlu0 %2978
      %2980 = vrot.lane.b32.xlu0 %v2475, 96
      %v2981 = vpop.permute.xlu0 %2980
      %2982 = vrot.lane.b32.xlu0 %v2476, 96
      %v2983 = vpop.permute.xlu0 %2982
      %2984 = vrot.lane.b32.xlu0 %v2477, 96
      %v2985 = vpop.permute.xlu0 %2984
      %2986 = vrot.lane.b32.xlu0 %v2478, 96
      %v2987 = vpop.permute.xlu0 %2986
      %2988 = vrot.lane.b32.xlu0 %v2479, 96
      %v2989 = vpop.permute.xlu0 %2988
      %2990 = vrot.lane.b32.xlu0 %v2480, 96
      %v2991 = vpop.permute.xlu0 %2990
      %2992 = vrot.lane.b32.xlu0 %v2481, 96
      %v2993 = vpop.permute.xlu0 %2992
      %2994 = vrot.lane.b32.xlu0 %v2482, 96
      %v2995 = vpop.permute.xlu0 %2994
      %3060 = vrot.lane.b32.xlu0 %v2515, 32
      %v3061 = vpop.permute.xlu0 %3060
      %3062 = vrot.lane.b32.xlu0 %v2516, 32
      %v3063 = vpop.permute.xlu0 %3062
      %3064 = vrot.lane.b32.xlu0 %v2517, 32
      %v3065 = vpop.permute.xlu0 %3064
      %3066 = vrot.lane.b32.xlu0 %v2518, 32
      %v3067 = vpop.permute.xlu0 %3066
      %3068 = vrot.lane.b32.xlu0 %v2519, 32
      %v3069 = vpop.permute.xlu0 %3068
      %3070 = vrot.lane.b32.xlu0 %v2520, 32
      %v3071 = vpop.permute.xlu0 %3070
      %3072 = vrot.lane.b32.xlu0 %v2521, 32
      %v3073 = vpop.permute.xlu0 %3072
      %3074 = vrot.lane.b32.xlu0 %v2522, 32
      %v3075 = vpop.permute.xlu0 %3074
      %3076 = vrot.lane.b32.xlu0 %v2523, 32
      %v3077 = vpop.permute.xlu0 %3076
      %3078 = vrot.lane.b32.xlu0 %v2524, 32
      %v3079 = vpop.permute.xlu0 %3078
      %3080 = vrot.lane.b32.xlu0 %v2525, 32
      %v3081 = vpop.permute.xlu0 %3080
      %3082 = vrot.lane.b32.xlu0 %v2526, 32
      %v3083 = vpop.permute.xlu0 %3082
      %3084 = vrot.lane.b32.xlu0 %v2527, 32
      %v3085 = vpop.permute.xlu0 %3084
      %3086 = vrot.lane.b32.xlu0 %v2528, 32
      %v3087 = vpop.permute.xlu0 %3086
      %3088 = vrot.lane.b32.xlu0 %v2529, 32
      %v3089 = vpop.permute.xlu0 %3088
      %3090 = vrot.lane.b32.xlu0 %v2530, 32
      %v3091 = vpop.permute.xlu0 %3090
      %3092 = vrot.lane.b32.xlu0 %v2531, 32
      %v3093 = vpop.permute.xlu0 %3092
      %3094 = vrot.lane.b32.xlu0 %v2532, 32
      %v3095 = vpop.permute.xlu0 %3094
      %3096 = vrot.lane.b32.xlu0 %v2533, 32
      %v3097 = vpop.permute.xlu0 %3096
      %3098 = vrot.lane.b32.xlu0 %v2534, 32
      %v3099 = vpop.permute.xlu0 %3098
      %3100 = vrot.lane.b32.xlu0 %v2535, 32
      %v3101 = vpop.permute.xlu0 %3100
      %3102 = vrot.lane.b32.xlu0 %v2536, 32
      %v3103 = vpop.permute.xlu0 %3102
      %3104 = vrot.lane.b32.xlu0 %v2537, 32
      %v3105 = vpop.permute.xlu0 %3104
      %3106 = vrot.lane.b32.xlu0 %v2538, 32
      %v3107 = vpop.permute.xlu0 %3106
      %3108 = vrot.lane.b32.xlu0 %v2539, 32
      %v3109 = vpop.permute.xlu0 %3108
      %3110 = vrot.lane.b32.xlu0 %v2540, 32
      %v3111 = vpop.permute.xlu0 %3110
      %3112 = vrot.lane.b32.xlu0 %v2541, 32
      %v3113 = vpop.permute.xlu0 %3112
      %3114 = vrot.lane.b32.xlu0 %v2542, 32
      %v3115 = vpop.permute.xlu0 %3114
      %3116 = vrot.lane.b32.xlu0 %v2543, 32
      %v3117 = vpop.permute.xlu0 %3116
      %3118 = vrot.lane.b32.xlu0 %v2544, 32
      %v3119 = vpop.permute.xlu0 %3118
      %3120 = vrot.lane.b32.xlu0 %v2545, 32
      %v3121 = vpop.permute.xlu0 %3120
      %3122 = vrot.lane.b32.xlu0 %v2546, 32
      %v3123 = vpop.permute.xlu0 %3122
      %3188 = vrot.lane.b32.xlu0 %v2548, 64
      %v3189 = vpop.permute.xlu0 %3188
      %3190 = vrot.lane.b32.xlu0 %v2549, 64
      %v3191 = vpop.permute.xlu0 %3190
      %3192 = vrot.lane.b32.xlu0 %v2550, 64
      %v3193 = vpop.permute.xlu0 %3192
      %3194 = vrot.lane.b32.xlu0 %v2551, 64
      %v3195 = vpop.permute.xlu0 %3194
      %3196 = vrot.lane.b32.xlu0 %v2552, 64
      %v3197 = vpop.permute.xlu0 %3196
      %3198 = vrot.lane.b32.xlu0 %v2553, 64
      %v3199 = vpop.permute.xlu0 %3198
      %3200 = vrot.lane.b32.xlu0 %v2554, 64
      %v3201 = vpop.permute.xlu0 %3200
      %3202 = vrot.lane.b32.xlu0 %v2555, 64
      %v3203 = vpop.permute.xlu0 %3202
      %3204 = vrot.lane.b32.xlu0 %v2556, 64
      %v3205 = vpop.permute.xlu0 %3204
      %3206 = vrot.lane.b32.xlu0 %v2557, 64
      %v3207 = vpop.permute.xlu0 %3206
      %3208 = vrot.lane.b32.xlu0 %v2558, 64
      %v3209 = vpop.permute.xlu0 %3208
      %3210 = vrot.lane.b32.xlu0 %v2559, 64
      %v3211 = vpop.permute.xlu0 %3210
      %3212 = vrot.lane.b32.xlu0 %v2560, 64
      %v3213 = vpop.permute.xlu0 %3212
      %3214 = vrot.lane.b32.xlu0 %v2561, 64
      %v3215 = vpop.permute.xlu0 %3214
      %3216 = vrot.lane.b32.xlu0 %v2562, 64
      %v3217 = vpop.permute.xlu0 %3216
      %3218 = vrot.lane.b32.xlu0 %v2563, 64
      %v3219 = vpop.permute.xlu0 %3218
      %3220 = vrot.lane.b32.xlu0 %v2564, 64
      %v3221 = vpop.permute.xlu0 %3220
      %3222 = vrot.lane.b32.xlu0 %v2565, 64
      %v3223 = vpop.permute.xlu0 %3222
      %3224 = vrot.lane.b32.xlu0 %v2566, 64
      %v3225 = vpop.permute.xlu0 %3224
      %3226 = vrot.lane.b32.xlu0 %v2567, 64
      %v3227 = vpop.permute.xlu0 %3226
      %3228 = vrot.lane.b32.xlu0 %v2568, 64
      %v3229 = vpop.permute.xlu0 %3228
      %3230 = vrot.lane.b32.xlu0 %v2569, 64
      %v3231 = vpop.permute.xlu0 %3230
      %3232 = vrot.lane.b32.xlu0 %v2570, 64
      %v3233 = vpop.permute.xlu0 %3232
      %3234 = vrot.lane.b32.xlu0 %v2571, 64
      %v3235 = vpop.permute.xlu0 %3234
      %3236 = vrot.lane.b32.xlu0 %v2572, 64
      %v3237 = vpop.permute.xlu0 %3236
      %3238 = vrot.lane.b32.xlu0 %v2573, 64
      %v3239 = vpop.permute.xlu0 %3238
      %3240 = vrot.lane.b32.xlu0 %v2574, 64
      %v3241 = vpop.permute.xlu0 %3240
      %3242 = vrot.lane.b32.xlu0 %v2575, 64
      %v3243 = vpop.permute.xlu0 %3242
      %3244 = vrot.lane.b32.xlu0 %v2576, 64
      %v3245 = vpop.permute.xlu0 %3244
      %3246 = vrot.lane.b32.xlu0 %v2577, 64
      %v3247 = vpop.permute.xlu0 %3246
      %3248 = vrot.lane.b32.xlu0 %v2578, 64
      %v3249 = vpop.permute.xlu0 %3248
      %3250 = vrot.lane.b32.xlu0 %v2579, 64
      %v3251 = vpop.permute.xlu0 %3250
      %3316 = vrot.lane.b32.xlu0 %v2580, 96
      %v3317 = vpop.permute.xlu0 %3316
      %3318 = vrot.lane.b32.xlu0 %v2581, 96
      %v3319 = vpop.permute.xlu0 %3318
      %3320 = vrot.lane.b32.xlu0 %v2582, 96
      %v3321 = vpop.permute.xlu0 %3320
      %3322 = vrot.lane.b32.xlu0 %v2583, 96
      %v3323 = vpop.permute.xlu0 %3322
      %3324 = vrot.lane.b32.xlu0 %v2584, 96
      %v3325 = vpop.permute.xlu0 %3324
      %3326 = vrot.lane.b32.xlu0 %v2585, 96
      %v3327 = vpop.permute.xlu0 %3326
      %3328 = vrot.lane.b32.xlu0 %v2586, 96
      %v3329 = vpop.permute.xlu0 %3328
      %3330 = vrot.lane.b32.xlu0 %v2587, 96
      %v3331 = vpop.permute.xlu0 %3330
      %3332 = vrot.lane.b32.xlu0 %v2588, 96
      %v3333 = vpop.permute.xlu0 %3332
      %3334 = vrot.lane.b32.xlu0 %v2589, 96
      %v3335 = vpop.permute.xlu0 %3334
      %3336 = vrot.lane.b32.xlu0 %v2590, 96
      %v3337 = vpop.permute.xlu0 %3336
      %3338 = vrot.lane.b32.xlu0 %v2591, 96
      %v3339 = vpop.permute.xlu0 %3338
      %3340 = vrot.lane.b32.xlu0 %v2592, 96
      %v3341 = vpop.permute.xlu0 %3340
      %3342 = vrot.lane.b32.xlu0 %v2593, 96
      %v3343 = vpop.permute.xlu0 %3342
      %3344 = vrot.lane.b32.xlu0 %v2594, 96
      %v3345 = vpop.permute.xlu0 %3344
      %3346 = vrot.lane.b32.xlu0 %v2595, 96
      %v3347 = vpop.permute.xlu0 %3346
      %3348 = vrot.lane.b32.xlu0 %v2596, 96
      %v3349 = vpop.permute.xlu0 %3348
      %3350 = vrot.lane.b32.xlu0 %v2597, 96
      %v3351 = vpop.permute.xlu0 %3350
      %3352 = vrot.lane.b32.xlu0 %v2598, 96
      %v3353 = vpop.permute.xlu0 %3352
      %3354 = vrot.lane.b32.xlu0 %v2599, 96
      %v3355 = vpop.permute.xlu0 %3354
      %3356 = vrot.lane.b32.xlu0 %v2600, 96
      %v3357 = vpop.permute.xlu0 %3356
      %3358 = vrot.lane.b32.xlu0 %v2601, 96
      %v3359 = vpop.permute.xlu0 %3358
      %3360 = vrot.lane.b32.xlu0 %v2602, 96
      %v3361 = vpop.permute.xlu0 %3360
      %3362 = vrot.lane.b32.xlu0 %v2603, 96
      %v3363 = vpop.permute.xlu0 %3362
      %3364 = vrot.lane.b32.xlu0 %v2604, 96
      %v3365 = vpop.permute.xlu0 %3364
      %3366 = vrot.lane.b32.xlu0 %v2605, 96
      %v3367 = vpop.permute.xlu0 %3366
      %3368 = vrot.lane.b32.xlu0 %v2606, 96
      %v3369 = vpop.permute.xlu0 %3368
      %3370 = vrot.lane.b32.xlu0 %v2607, 96
      %v3371 = vpop.permute.xlu0 %3370
      %3372 = vrot.lane.b32.xlu0 %v2608, 96
      %v3373 = vpop.permute.xlu0 %3372
      %3374 = vrot.lane.b32.xlu0 %v2609, 96
      %v3375 = vpop.permute.xlu0 %3374
      %3376 = vrot.lane.b32.xlu0 %v2610, 96
      %v3377 = vpop.permute.xlu0 %3376
      %3378 = vrot.lane.b32.xlu0 %v2611, 96
      %v3379 = vpop.permute.xlu0 %3378
      %v3412 = vsel %vm572, %v2355, %v2677
      %v3413 = vsel %vm572, %v2356, %v2679
      %v3414 = vsel %vm572, %v2357, %v2681
      %v3415 = vsel %vm572, %v2358, %v2683
      %v3416 = vsel %vm572, %v2359, %v2685
      %v3417 = vsel %vm572, %v2360, %v2687
      %v3418 = vsel %vm572, %v2361, %v2689
      %v3419 = vsel %vm572, %v2362, %v2691
      %v3420 = vsel %vm572, %v2363, %v2693
      %v3421 = vsel %vm572, %v2364, %v2695
      %v3422 = vsel %vm572, %v2365, %v2697
      %v3423 = vsel %vm572, %v2366, %v2699
      %v3424 = vsel %vm572, %v2367, %v2701
      %v3425 = vsel %vm572, %v2368, %v2703
      %v3426 = vsel %vm572, %v2369, %v2705
      %v3427 = vsel %vm572, %v2370, %v2707
      %v3428 = vsel %vm572, %v2371, %v2709
      %v3429 = vsel %vm572, %v2372, %v2711
      %v3430 = vsel %vm572, %v2373, %v2713
      %v3431 = vsel %vm572, %v2374, %v2715
      %v3432 = vsel %vm572, %v2375, %v2717
      %v3433 = vsel %vm572, %v2376, %v2719
      %v3434 = vsel %vm572, %v2377, %v2721
      %v3435 = vsel %vm572, %v2378, %v2723
      %v3436 = vsel %vm572, %v2379, %v2725
      %v3437 = vsel %vm572, %v2380, %v2727
      %v3438 = vsel %vm572, %v2381, %v2729
      %v3439 = vsel %vm572, %v2382, %v2731
      %v3440 = vsel %vm572, %v2383, %v2733
      %v3441 = vsel %vm572, %v2384, %v2735
      %v3442 = vsel %vm572, %v2385, %v2737
      %v3443 = vsel %vm572, %v2386, %v2739
      %vm3444 = vcmask 523264
      %v3445 = vsel %vm3444, %v3412, %v2805
      %v3446 = vsel %vm3444, %v3413, %v2807
      %v3447 = vsel %vm3444, %v3414, %v2809
      %v3448 = vsel %vm3444, %v3415, %v2811
      %v3449 = vsel %vm3444, %v3416, %v2813
      %v3450 = vsel %vm3444, %v3417, %v2815
      %v3451 = vsel %vm3444, %v3418, %v2817
      %v3452 = vsel %vm3444, %v3419, %v2819
      %v3453 = vsel %vm3444, %v3420, %v2821
      %v3454 = vsel %vm3444, %v3421, %v2823
      %v3455 = vsel %vm3444, %v3422, %v2825
      %v3456 = vsel %vm3444, %v3423, %v2827
      %v3457 = vsel %vm3444, %v3424, %v2829
      %v3458 = vsel %vm3444, %v3425, %v2831
      %v3459 = vsel %vm3444, %v3426, %v2833
      %v3460 = vsel %vm3444, %v3427, %v2835
      %v3461 = vsel %vm3444, %v3428, %v2837
      %v3462 = vsel %vm3444, %v3429, %v2839
      %v3463 = vsel %vm3444, %v3430, %v2841
      %v3464 = vsel %vm3444, %v3431, %v2843
      %v3465 = vsel %vm3444, %v3432, %v2845
      %v3466 = vsel %vm3444, %v3433, %v2847
      %v3467 = vsel %vm3444, %v3434, %v2849
      %v3468 = vsel %vm3444, %v3435, %v2851
      %v3469 = vsel %vm3444, %v3436, %v2853
      %v3470 = vsel %vm3444, %v3437, %v2855
      %v3471 = vsel %vm3444, %v3438, %v2857
      %v3472 = vsel %vm3444, %v3439, %v2859
      %v3473 = vsel %vm3444, %v3440, %v2861
      %v3474 = vsel %vm3444, %v3441, %v2863
      %v3475 = vsel %vm3444, %v3442, %v2865
      %v3476 = vsel %vm3444, %v3443, %v2867
      %vm3477 = vcmask 785408
      %v3478 = vsel %vm3477, %v3445, %v2933
      %v3479 = vsel %vm3477, %v3446, %v2935
      %v3480 = vsel %vm3477, %v3447, %v2937
      %v3481 = vsel %vm3477, %v3448, %v2939
      %v3482 = vsel %vm3477, %v3449, %v2941
      %v3483 = vsel %vm3477, %v3450, %v2943
      %v3484 = vsel %vm3477, %v3451, %v2945
      %v3485 = vsel %vm3477, %v3452, %v2947
      %v3486 = vsel %vm3477, %v3453, %v2949
      %v3487 = vsel %vm3477, %v3454, %v2951
      %v3488 = vsel %vm3477, %v3455, %v2953
      %v3489 = vsel %vm3477, %v3456, %v2955
      %v3490 = vsel %vm3477, %v3457, %v2957
      %v3491 = vsel %vm3477, %v3458, %v2959
      %v3492 = vsel %vm3477, %v3459, %v2961
      %v3493 = vsel %vm3477, %v3460, %v2963
      %v3494 = vsel %vm3477, %v3461, %v2965
      %v3495 = vsel %vm3477, %v3462, %v2967
      %v3496 = vsel %vm3477, %v3463, %v2969
      %v3497 = vsel %vm3477, %v3464, %v2971
      %v3498 = vsel %vm3477, %v3465, %v2973
      %v3499 = vsel %vm3477, %v3466, %v2975
      %v3500 = vsel %vm3477, %v3467, %v2977
      %v3501 = vsel %vm3477, %v3468, %v2979
      %v3502 = vsel %vm3477, %v3469, %v2981
      %v3503 = vsel %vm3477, %v3470, %v2983
      %v3504 = vsel %vm3477, %v3471, %v2985
      %v3505 = vsel %vm3477, %v3472, %v2987
      %v3506 = vsel %vm3477, %v3473, %v2989
      %v3507 = vsel %vm3477, %v3474, %v2991
      %v3508 = vsel %vm3477, %v3475, %v2993
      %v3509 = vsel %vm3477, %v3476, %v2995
      %v3510 = vsel %vm572, %v2483, %v3061
      %v3511 = vsel %vm572, %v2484, %v3063
      %v3512 = vsel %vm572, %v2485, %v3065
      %v3513 = vsel %vm572, %v2486, %v3067
      %v3514 = vsel %vm572, %v2487, %v3069
      %v3515 = vsel %vm572, %v2488, %v3071
      %v3516 = vsel %vm572, %v2489, %v3073
      %v3517 = vsel %vm572, %v2490, %v3075
      %v3518 = vsel %vm572, %v2491, %v3077
      %v3519 = vsel %vm572, %v2492, %v3079
      %v3520 = vsel %vm572, %v2493, %v3081
      %v3521 = vsel %vm572, %v2494, %v3083
      %v3522 = vsel %vm572, %v2495, %v3085
      %v3523 = vsel %vm572, %v2496, %v3087
      %v3524 = vsel %vm572, %v2497, %v3089
      %v3525 = vsel %vm572, %v2498, %v3091
      %v3526 = vsel %vm572, %v2499, %v3093
      %v3527 = vsel %vm572, %v2500, %v3095
      %v3528 = vsel %vm572, %v2501, %v3097
      %v3529 = vsel %vm572, %v2502, %v3099
      %v3530 = vsel %vm572, %v2503, %v3101
      %v3531 = vsel %vm572, %v2504, %v3103
      %v3532 = vsel %vm572, %v2505, %v3105
      %v3533 = vsel %vm572, %v2506, %v3107
      %v3534 = vsel %vm572, %v2507, %v3109
      %v3535 = vsel %vm572, %v2508, %v3111
      %v3536 = vsel %vm572, %v2509, %v3113
      %v3537 = vsel %vm572, %v2510, %v3115
      %v3538 = vsel %vm572, %v2511, %v3117
      %v3539 = vsel %vm572, %v2512, %v3119
      %v3540 = vsel %vm572, %v2513, %v3121
      %v3541 = vsel %vm572, %v2514, %v3123
      %v3542 = vsel %vm3444, %v3510, %v3189
      %v3543 = vsel %vm3444, %v3511, %v3191
      %v3544 = vsel %vm3444, %v3512, %v3193
      %v3545 = vsel %vm3444, %v3513, %v3195
      %v3546 = vsel %vm3444, %v3514, %v3197
      %v3547 = vsel %vm3444, %v3515, %v3199
      %v3548 = vsel %vm3444, %v3516, %v3201
      %v3549 = vsel %vm3444, %v3517, %v3203
      %v3550 = vsel %vm3444, %v3518, %v3205
      %v3551 = vsel %vm3444, %v3519, %v3207
      %v3552 = vsel %vm3444, %v3520, %v3209
      %v3553 = vsel %vm3444, %v3521, %v3211
      %v3554 = vsel %vm3444, %v3522, %v3213
      %v3555 = vsel %vm3444, %v3523, %v3215
      %v3556 = vsel %vm3444, %v3524, %v3217
      %v3557 = vsel %vm3444, %v3525, %v3219
      %v3558 = vsel %vm3444, %v3526, %v3221
      %v3559 = vsel %vm3444, %v3527, %v3223
      %v3560 = vsel %vm3444, %v3528, %v3225
      %v3561 = vsel %vm3444, %v3529, %v3227
      %v3562 = vsel %vm3444, %v3530, %v3229
      %v3563 = vsel %vm3444, %v3531, %v3231
      %v3564 = vsel %vm3444, %v3532, %v3233
      %v3565 = vsel %vm3444, %v3533, %v3235
      %v3566 = vsel %vm3444, %v3534, %v3237
      %v3567 = vsel %vm3444, %v3535, %v3239
      %v3568 = vsel %vm3444, %v3536, %v3241
      %v3569 = vsel %vm3444, %v3537, %v3243
      %v3570 = vsel %vm3444, %v3538, %v3245
      %v3571 = vsel %vm3444, %v3539, %v3247
      %v3572 = vsel %vm3444, %v3540, %v3249
      %v3573 = vsel %vm3444, %v3541, %v3251
      %v3574 = vsel %vm3477, %v3542, %v3317
      %v3575 = vsel %vm3477, %v3543, %v3319
      %v3576 = vsel %vm3477, %v3544, %v3321
      %v3577 = vsel %vm3477, %v3545, %v3323
      %v3578 = vsel %vm3477, %v3546, %v3325
      %v3579 = vsel %vm3477, %v3547, %v3327
      %v3580 = vsel %vm3477, %v3548, %v3329
      %v3581 = vsel %vm3477, %v3549, %v3331
      %v3582 = vsel %vm3477, %v3550, %v3333
      %v3583 = vsel %vm3477, %v3551, %v3335
      %v3584 = vsel %vm3477, %v3552, %v3337
      %v3585 = vsel %vm3477, %v3553, %v3339
      %v3586 = vsel %vm3477, %v3554, %v3341
      %v3587 = vsel %vm3477, %v3555, %v3343
      %v3588 = vsel %vm3477, %v3556, %v3345
      %v3589 = vsel %vm3477, %v3557, %v3347
      %v3590 = vsel %vm3477, %v3558, %v3349
      %v3591 = vsel %vm3477, %v3559, %v3351
      %v3592 = vsel %vm3477, %v3560, %v3353
      %v3593 = vsel %vm3477, %v3561, %v3355
      %v3594 = vsel %vm3477, %v3562, %v3357
      %v3595 = vsel %vm3477, %v3563, %v3359
      %v3596 = vsel %vm3477, %v3564, %v3361
      %v3597 = vsel %vm3477, %v3565, %v3363
      %v3598 = vsel %vm3477, %v3566, %v3365
      %v3599 = vsel %vm3477, %v3567, %v3367
      %v3600 = vsel %vm3477, %v3568, %v3369
      %v3601 = vsel %vm3477, %v3569, %v3371
      %v3602 = vsel %vm3477, %v3570, %v3373
      %v3603 = vsel %vm3477, %v3571, %v3375
      %v3604 = vsel %vm3477, %v3572, %v3377
      %v3605 = vsel %vm3477, %v3573, %v3379
      %v3606 = vld [vmem:[%s2] sm:$0xff]
      %v3607 = vld [vmem:[%s2 + $0x8] sm:$0xff]
      %v3608 = vld [vmem:[%s2 + $0x10] sm:$0xff]
      %v3609 = vld [vmem:[%s2 + $0x18] sm:$0xff]
      %v3610 = vld [vmem:[%s2 + $0x20] sm:$0xff]
      %v3611 = vld [vmem:[%s2 + $0x28] sm:$0xff]
      %v3612 = vld [vmem:[%s2 + $0x30] sm:$0xff]
      %v3613 = vld [vmem:[%s2 + $0x38] sm:$0xff]
      %v3614 = vld [vmem:[%s2 + $0x40] sm:$0xff]
      %v3615 = vld [vmem:[%s2 + $0x48] sm:$0xff]
      %v3616 = vld [vmem:[%s2 + $0x50] sm:$0xff]
      %v3617 = vld [vmem:[%s2 + $0x58] sm:$0xff]
      %v3618 = vld [vmem:[%s2 + $0x60] sm:$0xff]
      %v3619 = vld [vmem:[%s2 + $0x68] sm:$0xff]
      %v3620 = vld [vmem:[%s2 + $0x70] sm:$0xff]
      %v3621 = vld [vmem:[%s2 + $0x78] sm:$0xff]
      %v3622 = vld [vmem:[%s2 + $0x80] sm:$0xff]
      %v3623 = vld [vmem:[%s2 + $0x88] sm:$0xff]
      %v3624 = vld [vmem:[%s2 + $0x90] sm:$0xff]
      %v3625 = vld [vmem:[%s2 + $0x98] sm:$0xff]
      %v3626 = vld [vmem:[%s2 + $0xa0] sm:$0xff]
      %v3627 = vld [vmem:[%s2 + $0xa8] sm:$0xff]
      %v3628 = vld [vmem:[%s2 + $0xb0] sm:$0xff]
      %v3629 = vld [vmem:[%s2 + $0xb8] sm:$0xff]
      %v3630 = vld [vmem:[%s2 + $0xc0] sm:$0xff]
      %v3631 = vld [vmem:[%s2 + $0xc8] sm:$0xff]
      %v3632 = vld [vmem:[%s2 + $0xd0] sm:$0xff]
      %v3633 = vld [vmem:[%s2 + $0xd8] sm:$0xff]
      %v3634 = vld [vmem:[%s2 + $0xe0] sm:$0xff]
      %v3635 = vld [vmem:[%s2 + $0xe8] sm:$0xff]
      %v3636 = vld [vmem:[%s2 + $0xf0] sm:$0xff]
      %v3637 = vld [vmem:[%s2 + $0xf8] sm:$0xff]
      %v3638 = vld [vmem:[%s2 + $0x100] sm:$0xff]
      %v3639 = vld [vmem:[%s2 + $0x108] sm:$0xff]
      %v3640 = vld [vmem:[%s2 + $0x110] sm:$0xff]
      %v3641 = vld [vmem:[%s2 + $0x118] sm:$0xff]
      %v3643 = vsel %vm572, %v2612, 0
      %v3646 = vsel %vm572, %v2613, 0
      %v3649 = vsel %vm572, %v2614, 0
      %v3652 = vsel %vm572, %v2615, 0
      %v3655 = vsel %vm572, %v2616, 0
      %v3658 = vsel %vm572, %v2617, 0
      %v3661 = vsel %vm572, %v2618, 0
      %v3664 = vsel %vm572, %v2619, 0
      %v3667 = vsel %vm572, %v2620, 0
      %v3670 = vsel %vm572, %v2621, 0
      %v3673 = vsel %vm572, %v2622, 0
      %v3676 = vsel %vm572, %v2623, 0
      %v3679 = vsel %vm572, %v2624, 0
      %v3682 = vsel %vm572, %v2625, 0
      %v3685 = vsel %vm572, %v2626, 0
      %v3688 = vsel %vm572, %v2627, 0
      %v3691 = vsel %vm572, %v2628, 0
      %v3694 = vsel %vm572, %v2629, 0
      %v3697 = vsel %vm572, %v2630, 0
      %v3700 = vsel %vm572, %v2631, 0
      %v3703 = vsel %vm572, %v2632, 0
      %v3706 = vsel %vm572, %v2633, 0
      %v3709 = vsel %vm572, %v2634, 0
      %v3712 = vsel %vm572, %v2635, 0
      %v3715 = vsel %vm572, %v2636, 0
      %v3718 = vsel %vm572, %v2637, 0
      %v3721 = vsel %vm572, %v2638, 0
      %v3724 = vsel %vm572, %v2639, 0
      %v3727 = vsel %vm572, %v2640, 0
      %v3730 = vsel %vm572, %v2641, 0
      %v3733 = vsel %vm572, %v2642, 0
      %v3736 = vsel %vm572, %v2643, 0
      %3738 = vmatpush.msra.mxu0 %v3621
      %3739 = vmatpush.msra.mxu0 %v3620
      %3740 = vmatpush.msra.mxu0 %v3619
      %3741 = vmatpush.msra.mxu0 %v3618
      %3742 = vmatpush.msra.mxu0 %v3617
      %3743 = vmatpush.msra.mxu0 %v3616
      %3744 = vmatpush.msra.mxu0 %v3615
      %3745 = vmatpush.msra.mxu0 %v3614
      %3746 = vmatpush.msra.mxu0 %v3613
      %3747 = vmatpush.msra.mxu0 %v3612
      %3748 = vmatpush.msra.mxu0 %v3611
      %3749 = vmatpush.msra.mxu0 %v3610
      %3750 = vmatpush.msra.mxu0 %v3609
      %3751 = vmatpush.msra.mxu0 %v3608
      %3752 = vmatpush.msra.mxu0 %v3607
      %3753 = vmatpush.msra.mxu0 %v3606
      %3754 = vmatmul.f32.gmra.mxu0 %v3478
      %v3755 = vpop.f32.mrf.mxu0
      %v3756 = vadd.f32 0.0, %v3755
      %3757 = vmatmul.f32.gmra.mxu0 %v3479
      %v3758 = vpop.f32.mrf.mxu0
      %v3759 = vadd.f32 0.0, %v3758
      %3760 = vmatmul.f32.gmra.mxu0 %v3480
      %v3761 = vpop.f32.mrf.mxu0
      %v3762 = vadd.f32 0.0, %v3761
      %3763 = vmatmul.f32.gmra.mxu0 %v3481
      %v3764 = vpop.f32.mrf.mxu0
      %v3765 = vadd.f32 0.0, %v3764
      %3766 = vmatmul.f32.gmra.mxu0 %v3482
      %v3767 = vpop.f32.mrf.mxu0
      %v3768 = vadd.f32 0.0, %v3767
      %3769 = vmatmul.f32.gmra.mxu0 %v3483
      %v3770 = vpop.f32.mrf.mxu0
      %v3771 = vadd.f32 0.0, %v3770
      %3772 = vmatmul.f32.gmra.mxu0 %v3484
      %v3773 = vpop.f32.mrf.mxu0
      %v3774 = vadd.f32 0.0, %v3773
      %3775 = vmatmul.f32.gmra.mxu0 %v3485
      %v3776 = vpop.f32.mrf.mxu0
      %v3777 = vadd.f32 0.0, %v3776
      %3778 = vmatmul.f32.gmra.mxu0 %v3486
      %v3779 = vpop.f32.mrf.mxu0
      %v3780 = vadd.f32 0.0, %v3779
      %3781 = vmatmul.f32.gmra.mxu0 %v3487
      %v3782 = vpop.f32.mrf.mxu0
      %v3783 = vadd.f32 0.0, %v3782
      %3784 = vmatmul.f32.gmra.mxu0 %v3488
      %v3785 = vpop.f32.mrf.mxu0
      %v3786 = vadd.f32 0.0, %v3785
      %3787 = vmatmul.f32.gmra.mxu0 %v3489
      %v3788 = vpop.f32.mrf.mxu0
      %v3789 = vadd.f32 0.0, %v3788
      %3790 = vmatmul.f32.gmra.mxu0 %v3490
      %v3791 = vpop.f32.mrf.mxu0
      %v3792 = vadd.f32 0.0, %v3791
      %3793 = vmatmul.f32.gmra.mxu0 %v3491
      %v3794 = vpop.f32.mrf.mxu0
      %v3795 = vadd.f32 0.0, %v3794
      %3796 = vmatmul.f32.gmra.mxu0 %v3492
      %v3797 = vpop.f32.mrf.mxu0
      %v3798 = vadd.f32 0.0, %v3797
      %3799 = vmatmul.f32.gmra.mxu0 %v3493
      %v3800 = vpop.f32.mrf.mxu0
      %v3801 = vadd.f32 0.0, %v3800
      %3802 = vmatmul.f32.gmra.mxu0 %v3494
      %v3803 = vpop.f32.mrf.mxu0
      %v3804 = vadd.f32 0.0, %v3803
      %3805 = vmatmul.f32.gmra.mxu0 %v3495
      %v3806 = vpop.f32.mrf.mxu0
      %v3807 = vadd.f32 0.0, %v3806
      %3808 = vmatmul.f32.gmra.mxu0 %v3496
      %v3809 = vpop.f32.mrf.mxu0
      %v3810 = vadd.f32 0.0, %v3809
      %3811 = vmatmul.f32.gmra.mxu0 %v3497
      %v3812 = vpop.f32.mrf.mxu0
      %v3813 = vadd.f32 0.0, %v3812
      %3814 = vmatmul.f32.gmra.mxu0 %v3498
      %v3815 = vpop.f32.mrf.mxu0
      %v3816 = vadd.f32 0.0, %v3815
      %3817 = vmatmul.f32.gmra.mxu0 %v3499
      %v3818 = vpop.f32.mrf.mxu0
      %v3819 = vadd.f32 0.0, %v3818
      %3820 = vmatmul.f32.gmra.mxu0 %v3500
      %v3821 = vpop.f32.mrf.mxu0
      %v3822 = vadd.f32 0.0, %v3821
      %3823 = vmatmul.f32.gmra.mxu0 %v3501
      %v3824 = vpop.f32.mrf.mxu0
      %v3825 = vadd.f32 0.0, %v3824
      %3826 = vmatmul.f32.gmra.mxu0 %v3502
      %v3827 = vpop.f32.mrf.mxu0
      %v3828 = vadd.f32 0.0, %v3827
      %3829 = vmatmul.f32.gmra.mxu0 %v3503
      %v3830 = vpop.f32.mrf.mxu0
      %v3831 = vadd.f32 0.0, %v3830
      %3832 = vmatmul.f32.gmra.mxu0 %v3504
      %v3833 = vpop.f32.mrf.mxu0
      %v3834 = vadd.f32 0.0, %v3833
      %3835 = vmatmul.f32.gmra.mxu0 %v3505
      %v3836 = vpop.f32.mrf.mxu0
      %v3837 = vadd.f32 0.0, %v3836
      %3838 = vmatmul.f32.gmra.mxu0 %v3506
      %v3839 = vpop.f32.mrf.mxu0
      %v3840 = vadd.f32 0.0, %v3839
      %3841 = vmatmul.f32.gmra.mxu0 %v3507
      %v3842 = vpop.f32.mrf.mxu0
      %v3843 = vadd.f32 0.0, %v3842
      %3844 = vmatmul.f32.gmra.mxu0 %v3508
      %v3845 = vpop.f32.mrf.mxu0
      %v3846 = vadd.f32 0.0, %v3845
      %3847 = vmatmul.f32.gmra.mxu0 %v3509
      %v3848 = vpop.f32.mrf.mxu0
      %v3849 = vadd.f32 0.0, %v3848
      %3850 = vdwg.mxu0
      %3851 = vmatpush.msra.mxu0 %v3637
      %3852 = vmatpush.msra.mxu0 %v3636
      %3853 = vmatpush.msra.mxu0 %v3635
      %3854 = vmatpush.msra.mxu0 %v3634
      %3855 = vmatpush.msra.mxu0 %v3633
      %3856 = vmatpush.msra.mxu0 %v3632
      %3857 = vmatpush.msra.mxu0 %v3631
      %3858 = vmatpush.msra.mxu0 %v3630
      %3859 = vmatpush.msra.mxu0 %v3629
      %3860 = vmatpush.msra.mxu0 %v3628
      %3861 = vmatpush.msra.mxu0 %v3627
      %3862 = vmatpush.msra.mxu0 %v3626
      %3863 = vmatpush.msra.mxu0 %v3625
      %3864 = vmatpush.msra.mxu0 %v3624
      %3865 = vmatpush.msra.mxu0 %v3623
      %3866 = vmatpush.msra.mxu0 %v3622
      %3867 = vmatmul.f32.gmra.mxu0 %v3574
      %v3868 = vpop.f32.mrf.mxu0
      %v3869 = vadd.f32 %v3756, %v3868
      %3870 = vmatmul.f32.gmra.mxu0 %v3575
      %v3871 = vpop.f32.mrf.mxu0
      %v3872 = vadd.f32 %v3759, %v3871
      %3873 = vmatmul.f32.gmra.mxu0 %v3576
      %v3874 = vpop.f32.mrf.mxu0
      %v3875 = vadd.f32 %v3762, %v3874
      %3876 = vmatmul.f32.gmra.mxu0 %v3577
      %v3877 = vpop.f32.mrf.mxu0
      %v3878 = vadd.f32 %v3765, %v3877
      %3879 = vmatmul.f32.gmra.mxu0 %v3578
      %v3880 = vpop.f32.mrf.mxu0
      %v3881 = vadd.f32 %v3768, %v3880
      %3882 = vmatmul.f32.gmra.mxu0 %v3579
      %v3883 = vpop.f32.mrf.mxu0
      %v3884 = vadd.f32 %v3771, %v3883
      %3885 = vmatmul.f32.gmra.mxu0 %v3580
      %v3886 = vpop.f32.mrf.mxu0
      %v3887 = vadd.f32 %v3774, %v3886
      %3888 = vmatmul.f32.gmra.mxu0 %v3581
      %v3889 = vpop.f32.mrf.mxu0
      %v3890 = vadd.f32 %v3777, %v3889
      %3891 = vmatmul.f32.gmra.mxu0 %v3582
      %v3892 = vpop.f32.mrf.mxu0
      %v3893 = vadd.f32 %v3780, %v3892
      %3894 = vmatmul.f32.gmra.mxu0 %v3583
      %v3895 = vpop.f32.mrf.mxu0
      %v3896 = vadd.f32 %v3783, %v3895
      %3897 = vmatmul.f32.gmra.mxu0 %v3584
      %v3898 = vpop.f32.mrf.mxu0
      %v3899 = vadd.f32 %v3786, %v3898
      %3900 = vmatmul.f32.gmra.mxu0 %v3585
      %v3901 = vpop.f32.mrf.mxu0
      %v3902 = vadd.f32 %v3789, %v3901
      %3903 = vmatmul.f32.gmra.mxu0 %v3586
      %v3904 = vpop.f32.mrf.mxu0
      %v3905 = vadd.f32 %v3792, %v3904
      %3906 = vmatmul.f32.gmra.mxu0 %v3587
      %v3907 = vpop.f32.mrf.mxu0
      %v3908 = vadd.f32 %v3795, %v3907
      %3909 = vmatmul.f32.gmra.mxu0 %v3588
      %v3910 = vpop.f32.mrf.mxu0
      %v3911 = vadd.f32 %v3798, %v3910
      %3912 = vmatmul.f32.gmra.mxu0 %v3589
      %v3913 = vpop.f32.mrf.mxu0
      %v3914 = vadd.f32 %v3801, %v3913
      %3915 = vmatmul.f32.gmra.mxu0 %v3590
      %v3916 = vpop.f32.mrf.mxu0
      %v3917 = vadd.f32 %v3804, %v3916
      %3918 = vmatmul.f32.gmra.mxu0 %v3591
      %v3919 = vpop.f32.mrf.mxu0
      %v3920 = vadd.f32 %v3807, %v3919
      %3921 = vmatmul.f32.gmra.mxu0 %v3592
      %v3922 = vpop.f32.mrf.mxu0
      %v3923 = vadd.f32 %v3810, %v3922
      %3924 = vmatmul.f32.gmra.mxu0 %v3593
      %v3925 = vpop.f32.mrf.mxu0
      %v3926 = vadd.f32 %v3813, %v3925
      %3927 = vmatmul.f32.gmra.mxu0 %v3594
      %v3928 = vpop.f32.mrf.mxu0
      %v3929 = vadd.f32 %v3816, %v3928
      %3930 = vmatmul.f32.gmra.mxu0 %v3595
      %v3931 = vpop.f32.mrf.mxu0
      %v3932 = vadd.f32 %v3819, %v3931
      %3933 = vmatmul.f32.gmra.mxu0 %v3596
      %v3934 = vpop.f32.mrf.mxu0
      %v3935 = vadd.f32 %v3822, %v3934
      %3936 = vmatmul.f32.gmra.mxu0 %v3597
      %v3937 = vpop.f32.mrf.mxu0
      %v3938 = vadd.f32 %v3825, %v3937
      %3939 = vmatmul.f32.gmra.mxu0 %v3598
      %v3940 = vpop.f32.mrf.mxu0
      %v3941 = vadd.f32 %v3828, %v3940
      %3942 = vmatmul.f32.gmra.mxu0 %v3599
      %v3943 = vpop.f32.mrf.mxu0
      %v3944 = vadd.f32 %v3831, %v3943
      %3945 = vmatmul.f32.gmra.mxu0 %v3600
      %v3946 = vpop.f32.mrf.mxu0
      %v3947 = vadd.f32 %v3834, %v3946
      %3948 = vmatmul.f32.gmra.mxu0 %v3601
      %v3949 = vpop.f32.mrf.mxu0
      %v3950 = vadd.f32 %v3837, %v3949
      %3951 = vmatmul.f32.gmra.mxu0 %v3602
      %v3952 = vpop.f32.mrf.mxu0
      %v3953 = vadd.f32 %v3840, %v3952
      %3954 = vmatmul.f32.gmra.mxu0 %v3603
      %v3955 = vpop.f32.mrf.mxu0
      %v3956 = vadd.f32 %v3843, %v3955
      %3957 = vmatmul.f32.gmra.mxu0 %v3604
      %v3958 = vpop.f32.mrf.mxu0
      %v3959 = vadd.f32 %v3846, %v3958
      %3960 = vmatmul.f32.gmra.mxu0 %v3605
      %v3961 = vpop.f32.mrf.mxu0
      %v3962 = vadd.f32 %v3849, %v3961
      %3963 = vdwg.mxu0
      %3964 = vmatpush.msra.mxu0 0.0
      %3965 = vmatpush.msra.mxu0 0.0
      %3966 = vmatpush.msra.mxu0 0.0
      %3967 = vmatpush.msra.mxu0 0.0
      %3968 = vmatpush.msra.mxu0 0.0
      %3969 = vmatpush.msra.mxu0 0.0
      %3970 = vmatpush.msra.mxu0 0.0
      %3971 = vmatpush.msra.mxu0 0.0
      %3972 = vmatpush.msra.mxu0 0.0
      %3973 = vmatpush.msra.mxu0 0.0
      %3974 = vmatpush.msra.mxu0 0.0
      %3975 = vmatpush.msra.mxu0 0.0
      %3976 = vmatpush.msra.mxu0 %v3641
      %3977 = vmatpush.msra.mxu0 %v3640
      %3978 = vmatpush.msra.mxu0 %v3639
      %3979 = vmatpush.msra.mxu0 %v3638
      %3980 = vmatmul.f32.gmra.mxu0 %v3643
      %v3981 = vpop.f32.mrf.mxu0
      %v3982 = vadd.f32 %v3869, %v3981
      %3983 = vmatmul.f32.gmra.mxu0 %v3646
      %v3984 = vpop.f32.mrf.mxu0
      %v3985 = vadd.f32 %v3872, %v3984
      %3986 = vmatmul.f32.gmra.mxu0 %v3649
      %v3987 = vpop.f32.mrf.mxu0
      %v3988 = vadd.f32 %v3875, %v3987
      %3989 = vmatmul.f32.gmra.mxu0 %v3652
      %v3990 = vpop.f32.mrf.mxu0
      %v3991 = vadd.f32 %v3878, %v3990
      %3992 = vmatmul.f32.gmra.mxu0 %v3655
      %v3993 = vpop.f32.mrf.mxu0
      %v3994 = vadd.f32 %v3881, %v3993
      %3995 = vmatmul.f32.gmra.mxu0 %v3658
      %v3996 = vpop.f32.mrf.mxu0
      %v3997 = vadd.f32 %v3884, %v3996
      %3998 = vmatmul.f32.gmra.mxu0 %v3661
      %v3999 = vpop.f32.mrf.mxu0
      %v4000 = vadd.f32 %v3887, %v3999
      %4001 = vmatmul.f32.gmra.mxu0 %v3664
      %v4002 = vpop.f32.mrf.mxu0
      %v4003 = vadd.f32 %v3890, %v4002
      %4004 = vmatmul.f32.gmra.mxu0 %v3667
      %v4005 = vpop.f32.mrf.mxu0
      %v4006 = vadd.f32 %v3893, %v4005
      %4007 = vmatmul.f32.gmra.mxu0 %v3670
      %v4008 = vpop.f32.mrf.mxu0
      %v4009 = vadd.f32 %v3896, %v4008
      %4010 = vmatmul.f32.gmra.mxu0 %v3673
      %v4011 = vpop.f32.mrf.mxu0
      %v4012 = vadd.f32 %v3899, %v4011
      %4013 = vmatmul.f32.gmra.mxu0 %v3676
      %v4014 = vpop.f32.mrf.mxu0
      %v4015 = vadd.f32 %v3902, %v4014
      %4016 = vmatmul.f32.gmra.mxu0 %v3679
      %v4017 = vpop.f32.mrf.mxu0
      %v4018 = vadd.f32 %v3905, %v4017
      %4019 = vmatmul.f32.gmra.mxu0 %v3682
      %v4020 = vpop.f32.mrf.mxu0
      %v4021 = vadd.f32 %v3908, %v4020
      %4022 = vmatmul.f32.gmra.mxu0 %v3685
      %v4023 = vpop.f32.mrf.mxu0
      %v4024 = vadd.f32 %v3911, %v4023
      %4025 = vmatmul.f32.gmra.mxu0 %v3688
      %v4026 = vpop.f32.mrf.mxu0
      %v4027 = vadd.f32 %v3914, %v4026
      %4028 = vmatmul.f32.gmra.mxu0 %v3691
      %v4029 = vpop.f32.mrf.mxu0
      %v4030 = vadd.f32 %v3917, %v4029
      %4031 = vmatmul.f32.gmra.mxu0 %v3694
      %v4032 = vpop.f32.mrf.mxu0
      %v4033 = vadd.f32 %v3920, %v4032
      %4034 = vmatmul.f32.gmra.mxu0 %v3697
      %v4035 = vpop.f32.mrf.mxu0
      %v4036 = vadd.f32 %v3923, %v4035
      %4037 = vmatmul.f32.gmra.mxu0 %v3700
      %v4038 = vpop.f32.mrf.mxu0
      %v4039 = vadd.f32 %v3926, %v4038
      %4040 = vmatmul.f32.gmra.mxu0 %v3703
      %v4041 = vpop.f32.mrf.mxu0
      %v4042 = vadd.f32 %v3929, %v4041
      %4043 = vmatmul.f32.gmra.mxu0 %v3706
      %v4044 = vpop.f32.mrf.mxu0
      %v4045 = vadd.f32 %v3932, %v4044
      %4046 = vmatmul.f32.gmra.mxu0 %v3709
      %v4047 = vpop.f32.mrf.mxu0
      %v4048 = vadd.f32 %v3935, %v4047
      %4049 = vmatmul.f32.gmra.mxu0 %v3712
      %v4050 = vpop.f32.mrf.mxu0
      %v4051 = vadd.f32 %v3938, %v4050
      %4052 = vmatmul.f32.gmra.mxu0 %v3715
      %v4053 = vpop.f32.mrf.mxu0
      %v4054 = vadd.f32 %v3941, %v4053
      %4055 = vmatmul.f32.gmra.mxu0 %v3718
      %v4056 = vpop.f32.mrf.mxu0
      %v4057 = vadd.f32 %v3944, %v4056
      %4058 = vmatmul.f32.gmra.mxu0 %v3721
      %v4059 = vpop.f32.mrf.mxu0
      %v4060 = vadd.f32 %v3947, %v4059
      %4061 = vmatmul.f32.gmra.mxu0 %v3724
      %v4062 = vpop.f32.mrf.mxu0
      %v4063 = vadd.f32 %v3950, %v4062
      %4064 = vmatmul.f32.gmra.mxu0 %v3727
      %v4065 = vpop.f32.mrf.mxu0
      %v4066 = vadd.f32 %v3953, %v4065
      %4067 = vmatmul.f32.gmra.mxu0 %v3730
      %v4068 = vpop.f32.mrf.mxu0
      %v4069 = vadd.f32 %v3956, %v4068
      %4070 = vmatmul.f32.gmra.mxu0 %v3733
      %v4071 = vpop.f32.mrf.mxu0
      %v4072 = vadd.f32 %v3959, %v4071
      %4073 = vmatmul.f32.gmra.mxu0 %v3736
      %v4074 = vpop.f32.mrf.mxu0
      %v4075 = vadd.f32 %v3962, %v4074
      %4076 = vdwg.mxu0
      %v4077 = vld [vmem:[%s5] sm:$0x1]
      %v4078 = vld [vmem:[%s6] sm:$0x1]
      %v4079 = vsel %vm572, %v3982, 0.0
      %v4080 = vsel %vm572, %v3985, 0.0
      %v4081 = vadd.f32 %v4079, %v4080
      %v4082 = vsel %vm572, %v3988, 0.0
      %v4083 = vadd.f32 %v4081, %v4082
      %v4084 = vsel %vm572, %v3991, 0.0
      %v4085 = vadd.f32 %v4083, %v4084
      %v4086 = vsel %vm572, %v3994, 0.0
      %v4087 = vadd.f32 %v4085, %v4086
      %v4088 = vsel %vm572, %v3997, 0.0
      %v4089 = vadd.f32 %v4087, %v4088
      %v4090 = vsel %vm572, %v4000, 0.0
      %v4091 = vadd.f32 %v4089, %v4090
      %v4092 = vsel %vm572, %v4003, 0.0
      %v4093 = vadd.f32 %v4091, %v4092
      %v4094 = vsel %vm572, %v4006, 0.0
      %v4095 = vadd.f32 %v4093, %v4094
      %v4096 = vsel %vm572, %v4009, 0.0
      %v4097 = vadd.f32 %v4095, %v4096
      %v4098 = vsel %vm572, %v4012, 0.0
      %v4099 = vadd.f32 %v4097, %v4098
      %v4100 = vsel %vm572, %v4015, 0.0
      %v4101 = vadd.f32 %v4099, %v4100
      %v4102 = vsel %vm572, %v4018, 0.0
      %v4103 = vadd.f32 %v4101, %v4102
      %v4104 = vsel %vm572, %v4021, 0.0
      %v4105 = vadd.f32 %v4103, %v4104
      %v4106 = vsel %vm572, %v4024, 0.0
      %v4107 = vadd.f32 %v4105, %v4106
      %v4108 = vsel %vm572, %v4027, 0.0
      %v4109 = vadd.f32 %v4107, %v4108
      %v4110 = vsel %vm572, %v4030, 0.0
      %v4111 = vadd.f32 %v4109, %v4110
      %v4112 = vsel %vm572, %v4033, 0.0
      %v4113 = vadd.f32 %v4111, %v4112
      %v4114 = vsel %vm572, %v4036, 0.0
      %v4115 = vadd.f32 %v4113, %v4114
      %v4116 = vsel %vm572, %v4039, 0.0
      %v4117 = vadd.f32 %v4115, %v4116
      %v4118 = vsel %vm572, %v4042, 0.0
      %v4119 = vadd.f32 %v4117, %v4118
      %v4120 = vsel %vm572, %v4045, 0.0
      %v4121 = vadd.f32 %v4119, %v4120
      %v4122 = vsel %vm572, %v4048, 0.0
      %v4123 = vadd.f32 %v4121, %v4122
      %v4124 = vsel %vm572, %v4051, 0.0
      %v4125 = vadd.f32 %v4123, %v4124
      %v4126 = vsel %vm572, %v4054, 0.0
      %v4127 = vadd.f32 %v4125, %v4126
      %v4128 = vsel %vm572, %v4057, 0.0
      %v4129 = vadd.f32 %v4127, %v4128
      %v4130 = vsel %vm572, %v4060, 0.0
      %v4131 = vadd.f32 %v4129, %v4130
      %v4132 = vsel %vm572, %v4063, 0.0
      %v4133 = vadd.f32 %v4131, %v4132
      %v4134 = vsel %vm572, %v4066, 0.0
      %v4135 = vadd.f32 %v4133, %v4134
      %v4136 = vsel %vm572, %v4069, 0.0
      %v4137 = vadd.f32 %v4135, %v4136
      %v4138 = vsel %vm572, %v4072, 0.0
      %v4139 = vadd.f32 %v4137, %v4138
      %v4140 = vsel %vm572, %v4075, 0.0
      %v4141 = vadd.f32 %v4139, %v4140
      %v4142 = vrot.slane %v4141, 4
      %v4143 = vadd.f32 %v4141, %v4142
      %v4144 = vrot.slane %v4143, 2
      %v4145 = vadd.f32 %v4143, %v4144
      %v4146 = vrot.slane %v4145, 1
      %v4147 = vadd.f32 %v4145, %v4146
      %v4148 = vmul.f32 %v4147, 0.00390625
      %v4149 = vsub.f32 %v3982, %v4148
      %v4150 = vsub.f32 %v3985, %v4148
      %v4151 = vsub.f32 %v3988, %v4148
      %v4152 = vsub.f32 %v3991, %v4148
      %v4153 = vsub.f32 %v3994, %v4148
      %v4154 = vsub.f32 %v3997, %v4148
      %v4155 = vsub.f32 %v4000, %v4148
      %v4156 = vsub.f32 %v4003, %v4148
      %v4157 = vsub.f32 %v4006, %v4148
      %v4158 = vsub.f32 %v4009, %v4148
      %v4159 = vsub.f32 %v4012, %v4148
      %v4160 = vsub.f32 %v4015, %v4148
      %v4161 = vsub.f32 %v4018, %v4148
      %v4162 = vsub.f32 %v4021, %v4148
      %v4163 = vsub.f32 %v4024, %v4148
      %v4164 = vsub.f32 %v4027, %v4148
      %v4165 = vsub.f32 %v4030, %v4148
      %v4166 = vsub.f32 %v4033, %v4148
      %v4167 = vsub.f32 %v4036, %v4148
      %v4168 = vsub.f32 %v4039, %v4148
      %v4169 = vsub.f32 %v4042, %v4148
      %v4170 = vsub.f32 %v4045, %v4148
      %v4171 = vsub.f32 %v4048, %v4148
      %v4172 = vsub.f32 %v4051, %v4148
      %v4173 = vsub.f32 %v4054, %v4148
      %v4174 = vsub.f32 %v4057, %v4148
      %v4175 = vsub.f32 %v4060, %v4148
      %v4176 = vsub.f32 %v4063, %v4148
      %v4177 = vsub.f32 %v4066, %v4148
      %v4178 = vsub.f32 %v4069, %v4148
      %v4179 = vsub.f32 %v4072, %v4148
      %v4180 = vsub.f32 %v4075, %v4148
      %v4181 = vmul.f32 %v4149, %v4149
      %v4182 = vmul.f32 %v4150, %v4150
      %v4183 = vmul.f32 %v4151, %v4151
      %v4184 = vmul.f32 %v4152, %v4152
      %v4185 = vmul.f32 %v4153, %v4153
      %v4186 = vmul.f32 %v4154, %v4154
      %v4187 = vmul.f32 %v4155, %v4155
      %v4188 = vmul.f32 %v4156, %v4156
      %v4189 = vmul.f32 %v4157, %v4157
      %v4190 = vmul.f32 %v4158, %v4158
      %v4191 = vmul.f32 %v4159, %v4159
      %v4192 = vmul.f32 %v4160, %v4160
      %v4193 = vmul.f32 %v4161, %v4161
      %v4194 = vmul.f32 %v4162, %v4162
      %v4195 = vmul.f32 %v4163, %v4163
      %v4196 = vmul.f32 %v4164, %v4164
      %v4197 = vmul.f32 %v4165, %v4165
      %v4198 = vmul.f32 %v4166, %v4166
      %v4199 = vmul.f32 %v4167, %v4167
      %v4200 = vmul.f32 %v4168, %v4168
      %v4201 = vmul.f32 %v4169, %v4169
      %v4202 = vmul.f32 %v4170, %v4170
      %v4203 = vmul.f32 %v4171, %v4171
      %v4204 = vmul.f32 %v4172, %v4172
      %v4205 = vmul.f32 %v4173, %v4173
      %v4206 = vmul.f32 %v4174, %v4174
      %v4207 = vmul.f32 %v4175, %v4175
      %v4208 = vmul.f32 %v4176, %v4176
      %v4209 = vmul.f32 %v4177, %v4177
      %v4210 = vmul.f32 %v4178, %v4178
      %v4211 = vmul.f32 %v4179, %v4179
      %v4212 = vmul.f32 %v4180, %v4180
      %v4213 = vsel %vm572, %v4181, 0.0
      %v4214 = vsel %vm572, %v4182, 0.0
      %v4215 = vadd.f32 %v4213, %v4214
      %v4216 = vsel %vm572, %v4183, 0.0
      %v4217 = vadd.f32 %v4215, %v4216
      %v4218 = vsel %vm572, %v4184, 0.0
      %v4219 = vadd.f32 %v4217, %v4218
      %v4220 = vsel %vm572, %v4185, 0.0
      %v4221 = vadd.f32 %v4219, %v4220
      %v4222 = vsel %vm572, %v4186, 0.0
      %v4223 = vadd.f32 %v4221, %v4222
      %v4224 = vsel %vm572, %v4187, 0.0
      %v4225 = vadd.f32 %v4223, %v4224
      %v4226 = vsel %vm572, %v4188, 0.0
      %v4227 = vadd.f32 %v4225, %v4226
      %v4228 = vsel %vm572, %v4189, 0.0
      %v4229 = vadd.f32 %v4227, %v4228
      %v4230 = vsel %vm572, %v4190, 0.0
      %v4231 = vadd.f32 %v4229, %v4230
      %v4232 = vsel %vm572, %v4191, 0.0
      %v4233 = vadd.f32 %v4231, %v4232
      %v4234 = vsel %vm572, %v4192, 0.0
      %v4235 = vadd.f32 %v4233, %v4234
      %v4236 = vsel %vm572, %v4193, 0.0
      %v4237 = vadd.f32 %v4235, %v4236
      %v4238 = vsel %vm572, %v4194, 0.0
      %v4239 = vadd.f32 %v4237, %v4238
      %v4240 = vsel %vm572, %v4195, 0.0
      %v4241 = vadd.f32 %v4239, %v4240
      %v4242 = vsel %vm572, %v4196, 0.0
      %v4243 = vadd.f32 %v4241, %v4242
      %v4244 = vsel %vm572, %v4197, 0.0
      %v4245 = vadd.f32 %v4243, %v4244
      %v4246 = vsel %vm572, %v4198, 0.0
      %v4247 = vadd.f32 %v4245, %v4246
      %v4248 = vsel %vm572, %v4199, 0.0
      %v4249 = vadd.f32 %v4247, %v4248
      %v4250 = vsel %vm572, %v4200, 0.0
      %v4251 = vadd.f32 %v4249, %v4250
      %v4252 = vsel %vm572, %v4201, 0.0
      %v4253 = vadd.f32 %v4251, %v4252
      %v4254 = vsel %vm572, %v4202, 0.0
      %v4255 = vadd.f32 %v4253, %v4254
      %v4256 = vsel %vm572, %v4203, 0.0
      %v4257 = vadd.f32 %v4255, %v4256
      %v4258 = vsel %vm572, %v4204, 0.0
      %v4259 = vadd.f32 %v4257, %v4258
      %v4260 = vsel %vm572, %v4205, 0.0
      %v4261 = vadd.f32 %v4259, %v4260
      %v4262 = vsel %vm572, %v4206, 0.0
      %v4263 = vadd.f32 %v4261, %v4262
      %v4264 = vsel %vm572, %v4207, 0.0
      %v4265 = vadd.f32 %v4263, %v4264
      %v4266 = vsel %vm572, %v4208, 0.0
      %v4267 = vadd.f32 %v4265, %v4266
      %v4268 = vsel %vm572, %v4209, 0.0
      %v4269 = vadd.f32 %v4267, %v4268
      %v4270 = vsel %vm572, %v4210, 0.0
      %v4271 = vadd.f32 %v4269, %v4270
      %v4272 = vsel %vm572, %v4211, 0.0
      %v4273 = vadd.f32 %v4271, %v4272
      %v4274 = vsel %vm572, %v4212, 0.0
      %v4275 = vadd.f32 %v4273, %v4274
      %v4276 = vrot.slane %v4275, 4
      %v4277 = vadd.f32 %v4275, %v4276
      %v4278 = vrot.slane %v4277, 2
      %v4279 = vadd.f32 %v4277, %v4278
      %v4280 = vrot.slane %v4279, 1
      %v4281 = vadd.f32 %v4279, %v4280
      %v4282 = vmul.f32 %v4281, 0.00390625
      %v4283 = vadd.f32 %v4282, 1e-05
      %v4284 = vrsqrt.pop %v4283
      %v4285 = vmul.f32 %v4284, %v4283
      %v4286 = vmul.f32 %v4285, %v4284
      %v4287 = vmul.f32 0.5, %v4286
      %v4288 = vsub.f32 1.5, %v4287
      %v4289 = vmul.f32 %v4284, %v4288
      %vm4290 = vweird.f32 %v4283
      %vm4291 = vweird.f32 %v4284
      %vm4292 = vmor %vm4290, %vm4291
      %v4293 = vsel %vm4292, %v4284, %v4289
      %v4294 = vmul.f32 %v4077, %v4293
      %v4296 = vperm.slane %v4294, 0
      %v4298 = vmul.f32 %v4149, %v4296
      %v4299 = vmul.f32 %v4150, %v4296
      %v4300 = vmul.f32 %v4151, %v4296
      %v4301 = vmul.f32 %v4152, %v4296
      %v4302 = vmul.f32 %v4153, %v4296
      %v4303 = vmul.f32 %v4154, %v4296
      %v4304 = vmul.f32 %v4155, %v4296
      %v4305 = vmul.f32 %v4156, %v4296
      %v4306 = vmul.f32 %v4157, %v4296
      %v4307 = vmul.f32 %v4158, %v4296
      %v4308 = vmul.f32 %v4159, %v4296
      %v4309 = vmul.f32 %v4160, %v4296
      %v4310 = vmul.f32 %v4161, %v4296
      %v4311 = vmul.f32 %v4162, %v4296
      %v4312 = vmul.f32 %v4163, %v4296
      %v4313 = vmul.f32 %v4164, %v4296
      %v4314 = vmul.f32 %v4165, %v4296
      %v4315 = vmul.f32 %v4166, %v4296
      %v4316 = vmul.f32 %v4167, %v4296
      %v4317 = vmul.f32 %v4168, %v4296
      %v4318 = vmul.f32 %v4169, %v4296
      %v4319 = vmul.f32 %v4170, %v4296
      %v4320 = vmul.f32 %v4171, %v4296
      %v4321 = vmul.f32 %v4172, %v4296
      %v4322 = vmul.f32 %v4173, %v4296
      %v4323 = vmul.f32 %v4174, %v4296
      %v4324 = vmul.f32 %v4175, %v4296
      %v4325 = vmul.f32 %v4176, %v4296
      %v4326 = vmul.f32 %v4177, %v4296
      %v4327 = vmul.f32 %v4178, %v4296
      %v4328 = vmul.f32 %v4179, %v4296
      %v4329 = vmul.f32 %v4180, %v4296
      %v4331 = vperm.slane %v4078, 0
      %v4333 = vadd.f32 %v4298, %v4331
      %v4334 = vadd.f32 %v4299, %v4331
      %v4335 = vadd.f32 %v4300, %v4331
      %v4336 = vadd.f32 %v4301, %v4331
      %v4337 = vadd.f32 %v4302, %v4331
      %v4338 = vadd.f32 %v4303, %v4331
      %v4339 = vadd.f32 %v4304, %v4331
      %v4340 = vadd.f32 %v4305, %v4331
      %v4341 = vadd.f32 %v4306, %v4331
      %v4342 = vadd.f32 %v4307, %v4331
      %v4343 = vadd.f32 %v4308, %v4331
      %v4344 = vadd.f32 %v4309, %v4331
      %v4345 = vadd.f32 %v4310, %v4331
      %v4346 = vadd.f32 %v4311, %v4331
      %v4347 = vadd.f32 %v4312, %v4331
      %v4348 = vadd.f32 %v4313, %v4331
      %v4349 = vadd.f32 %v4314, %v4331
      %v4350 = vadd.f32 %v4315, %v4331
      %v4351 = vadd.f32 %v4316, %v4331
      %v4352 = vadd.f32 %v4317, %v4331
      %v4353 = vadd.f32 %v4318, %v4331
      %v4354 = vadd.f32 %v4319, %v4331
      %v4355 = vadd.f32 %v4320, %v4331
      %v4356 = vadd.f32 %v4321, %v4331
      %v4357 = vadd.f32 %v4322, %v4331
      %v4358 = vadd.f32 %v4323, %v4331
      %v4359 = vadd.f32 %v4324, %v4331
      %v4360 = vadd.f32 %v4325, %v4331
      %v4361 = vadd.f32 %v4326, %v4331
      %v4362 = vadd.f32 %v4327, %v4331
      %v4363 = vadd.f32 %v4328, %v4331
      %v4364 = vadd.f32 %v4329, %v4331
      %v4365 = vmul.f32 %v4333, 0.5
      %v4366 = vmul.f32 %v4334, 0.5
      %v4367 = vmul.f32 %v4335, 0.5
      %v4368 = vmul.f32 %v4336, 0.5
      %v4369 = vmul.f32 %v4337, 0.5
      %v4370 = vmul.f32 %v4338, 0.5
      %v4371 = vmul.f32 %v4339, 0.5
      %v4372 = vmul.f32 %v4340, 0.5
      %v4373 = vmul.f32 %v4341, 0.5
      %v4374 = vmul.f32 %v4342, 0.5
      %v4375 = vmul.f32 %v4343, 0.5
      %v4376 = vmul.f32 %v4344, 0.5
      %v4377 = vmul.f32 %v4345, 0.5
      %v4378 = vmul.f32 %v4346, 0.5
      %v4379 = vmul.f32 %v4347, 0.5
      %v4380 = vmul.f32 %v4348, 0.5
      %v4381 = vmul.f32 %v4349, 0.5
      %v4382 = vmul.f32 %v4350, 0.5
      %v4383 = vmul.f32 %v4351, 0.5
      %v4384 = vmul.f32 %v4352, 0.5
      %v4385 = vmul.f32 %v4353, 0.5
      %v4386 = vmul.f32 %v4354, 0.5
      %v4387 = vmul.f32 %v4355, 0.5
      %v4388 = vmul.f32 %v4356, 0.5
      %v4389 = vmul.f32 %v4357, 0.5
      %v4390 = vmul.f32 %v4358, 0.5
      %v4391 = vmul.f32 %v4359, 0.5
      %v4392 = vmul.f32 %v4360, 0.5
      %v4393 = vmul.f32 %v4361, 0.5
      %v4394 = vmul.f32 %v4362, 0.5
      %v4395 = vmul.f32 %v4363, 0.5
      %v4396 = vmul.f32 %v4364, 0.5
      %v4397 = vmul.f32 %v4333, 0.70710677
      %v4398 = vmul.f32 %v4334, 0.70710677
      %v4399 = vmul.f32 %v4335, 0.70710677
      %v4400 = vmul.f32 %v4336, 0.70710677
      %v4401 = vmul.f32 %v4337, 0.70710677
      %v4402 = vmul.f32 %v4338, 0.70710677
      %v4403 = vmul.f32 %v4339, 0.70710677
      %v4404 = vmul.f32 %v4340, 0.70710677
      %v4405 = vmul.f32 %v4341, 0.70710677
      %v4406 = vmul.f32 %v4342, 0.70710677
      %v4407 = vmul.f32 %v4343, 0.70710677
      %v4408 = vmul.f32 %v4344, 0.70710677
      %v4409 = vmul.f32 %v4345, 0.70710677
      %v4410 = vmul.f32 %v4346, 0.70710677
      %v4411 = vmul.f32 %v4347, 0.70710677
      %v4412 = vmul.f32 %v4348, 0.70710677
      %v4413 = vmul.f32 %v4349, 0.70710677
      %v4414 = vmul.f32 %v4350, 0.70710677
      %v4415 = vmul.f32 %v4351, 0.70710677
      %v4416 = vmul.f32 %v4352, 0.70710677
      %v4417 = vmul.f32 %v4353, 0.70710677
      %v4418 = vmul.f32 %v4354, 0.70710677
      %v4419 = vmul.f32 %v4355, 0.70710677
      %v4420 = vmul.f32 %v4356, 0.70710677
      %v4421 = vmul.f32 %v4357, 0.70710677
      %v4422 = vmul.f32 %v4358, 0.70710677
      %v4423 = vmul.f32 %v4359, 0.70710677
      %v4424 = vmul.f32 %v4360, 0.70710677
      %v4425 = vmul.f32 %v4361, 0.70710677
      %v4426 = vmul.f32 %v4362, 0.70710677
      %v4427 = vmul.f32 %v4363, 0.70710677
      %v4428 = vmul.f32 %v4364, 0.70710677
      %v4429 = vmul.f32 %v4397, %v4397
      %v4430 = vmin.f32 16.0, %v4429
      %v4431 = vmul.f32 %v4430, 2.1237322e-06
      %v4432 = vadd.f32 %v4431, 0.00028619796
      %v4433 = vmul.f32 %v4430, %v4432
      %v4434 = vadd.f32 %v4433, 0.0036580483
      %v4435 = vmul.f32 %v4430, %v4434
      %v4436 = vadd.f32 %v4435, 0.05243302
      %v4437 = vmul.f32 %v4430, %v4436
      %v4438 = vadd.f32 %v4437, 0.18741608
      %v4439 = vmul.f32 %v4430, %v4438
      %v4440 = vadd.f32 %v4439, 1.1283791
      %v4441 = vmul.f32 %v4397, %v4440
      %v4442 = vmul.f32 %v4430, 3.8918573e-05
      %v4443 = vadd.f32 %v4442, 0.001143296
      %v4444 = vmul.f32 %v4430, %v4443
      %v4445 = vadd.f32 %v4444, 0.014752088
      %v4446 = vmul.f32 %v4430, %v4445
      %v4447 = vadd.f32 %v4446, 0.112945676
      %v4448 = vmul.f32 %v4430, %v4447
      %v4449 = vadd.f32 %v4448, 0.4994258
      %v4450 = vmul.f32 %v4430, %v4449
      %v4451 = vadd.f32 %v4450, 1.0
      %v4452 = vrcp.pop %v4451
      %v4453 = vmul.f32 %v4451, %v4452
      %v4454 = vsub.f32 1.0, %v4453
      %v4455 = vmul.f32 %v4452, %v4454
      %v4456 = vadd.f32 %v4452, %v4455
      %vm4457 = vweird.f32 %v4451
      %vm4458 = vweird.f32 %v4452
      %vm4459 = vmor %vm4457, %vm4458
      %v4460 = vsel %vm4459, %v4452, %v4456
      %v4461 = vand.u32 2147483647, %v4451
      %vm4462 = vcmp.eq.f32.partialorder %v4461, 8.507059e+37
      %v4463 = vand.u32 %v4451, 2147483648
      %v4464 = vor.u32 1.1754944e-38, %v4463
      %v4465 = vsel %vm4462, %v4464, %v4460
      %v4466 = vmul.f32 %v4441, %v4465
      %v4467 = vmin.f32 %v4466, 1.0
      %v4468 = vmax.f32 %v4467, -1.0
      %v4469 = vmul.f32 %v4398, %v4398
      %v4470 = vmin.f32 16.0, %v4469
      %v4471 = vmul.f32 %v4470, 2.1237322e-06
      %v4472 = vadd.f32 %v4471, 0.00028619796
      %v4473 = vmul.f32 %v4470, %v4472
      %v4474 = vadd.f32 %v4473, 0.0036580483
      %v4475 = vmul.f32 %v4470, %v4474
      %v4476 = vadd.f32 %v4475, 0.05243302
      %v4477 = vmul.f32 %v4470, %v4476
      %v4478 = vadd.f32 %v4477, 0.18741608
      %v4479 = vmul.f32 %v4470, %v4478
      %v4480 = vadd.f32 %v4479, 1.1283791
      %v4481 = vmul.f32 %v4398, %v4480
      %v4482 = vmul.f32 %v4470, 3.8918573e-05
      %v4483 = vadd.f32 %v4482, 0.001143296
      %v4484 = vmul.f32 %v4470, %v4483
      %v4485 = vadd.f32 %v4484, 0.014752088
      %v4486 = vmul.f32 %v4470, %v4485
      %v4487 = vadd.f32 %v4486, 0.112945676
      %v4488 = vmul.f32 %v4470, %v4487
      %v4489 = vadd.f32 %v4488, 0.4994258
      %v4490 = vmul.f32 %v4470, %v4489
      %v4491 = vadd.f32 %v4490, 1.0
      %v4492 = vrcp.pop %v4491
      %v4493 = vmul.f32 %v4491, %v4492
      %v4494 = vsub.f32 1.0, %v4493
      %v4495 = vmul.f32 %v4492, %v4494
      %v4496 = vadd.f32 %v4492, %v4495
      %vm4497 = vweird.f32 %v4491
      %vm4498 = vweird.f32 %v4492
      %vm4499 = vmor %vm4497, %vm4498
      %v4500 = vsel %vm4499, %v4492, %v4496
      %v4501 = vand.u32 2147483647, %v4491
      %vm4502 = vcmp.eq.f32.partialorder %v4501, 8.507059e+37
      %v4503 = vand.u32 %v4491, 2147483648
      %v4504 = vor.u32 1.1754944e-38, %v4503
      %v4505 = vsel %vm4502, %v4504, %v4500
      %v4506 = vmul.f32 %v4481, %v4505
      %v4507 = vmin.f32 %v4506, 1.0
      %v4508 = vmax.f32 %v4507, -1.0
      %v4509 = vmul.f32 %v4399, %v4399
      %v4510 = vmin.f32 16.0, %v4509
      %v4511 = vmul.f32 %v4510, 2.1237322e-06
      %v4512 = vadd.f32 %v4511, 0.00028619796
      %v4513 = vmul.f32 %v4510, %v4512
      %v4514 = vadd.f32 %v4513, 0.0036580483
      %v4515 = vmul.f32 %v4510, %v4514
      %v4516 = vadd.f32 %v4515, 0.05243302
      %v4517 = vmul.f32 %v4510, %v4516
      %v4518 = vadd.f32 %v4517, 0.18741608
      %v4519 = vmul.f32 %v4510, %v4518
      %v4520 = vadd.f32 %v4519, 1.1283791
      %v4521 = vmul.f32 %v4399, %v4520
      %v4522 = vmul.f32 %v4510, 3.8918573e-05
      %v4523 = vadd.f32 %v4522, 0.001143296
      %v4524 = vmul.f32 %v4510, %v4523
      %v4525 = vadd.f32 %v4524, 0.014752088
      %v4526 = vmul.f32 %v4510, %v4525
      %v4527 = vadd.f32 %v4526, 0.112945676
      %v4528 = vmul.f32 %v4510, %v4527
      %v4529 = vadd.f32 %v4528, 0.4994258
      %v4530 = vmul.f32 %v4510, %v4529
      %v4531 = vadd.f32 %v4530, 1.0
      %v4532 = vrcp.pop %v4531
      %v4533 = vmul.f32 %v4531, %v4532
      %v4534 = vsub.f32 1.0, %v4533
      %v4535 = vmul.f32 %v4532, %v4534
      %v4536 = vadd.f32 %v4532, %v4535
      %vm4537 = vweird.f32 %v4531
      %vm4538 = vweird.f32 %v4532
      %vm4539 = vmor %vm4537, %vm4538
      %v4540 = vsel %vm4539, %v4532, %v4536
      %v4541 = vand.u32 2147483647, %v4531
      %vm4542 = vcmp.eq.f32.partialorder %v4541, 8.507059e+37
      %v4543 = vand.u32 %v4531, 2147483648
      %v4544 = vor.u32 1.1754944e-38, %v4543
      %v4545 = vsel %vm4542, %v4544, %v4540
      %v4546 = vmul.f32 %v4521, %v4545
      %v4547 = vmin.f32 %v4546, 1.0
      %v4548 = vmax.f32 %v4547, -1.0
      %v4549 = vmul.f32 %v4400, %v4400
      %v4550 = vmin.f32 16.0, %v4549
      %v4551 = vmul.f32 %v4550, 2.1237322e-06
      %v4552 = vadd.f32 %v4551, 0.00028619796
      %v4553 = vmul.f32 %v4550, %v4552
      %v4554 = vadd.f32 %v4553, 0.0036580483
      %v4555 = vmul.f32 %v4550, %v4554
      %v4556 = vadd.f32 %v4555, 0.05243302
      %v4557 = vmul.f32 %v4550, %v4556
      %v4558 = vadd.f32 %v4557, 0.18741608
      %v4559 = vmul.f32 %v4550, %v4558
      %v4560 = vadd.f32 %v4559, 1.1283791
      %v4561 = vmul.f32 %v4400, %v4560
      %v4562 = vmul.f32 %v4550, 3.8918573e-05
      %v4563 = vadd.f32 %v4562, 0.001143296
      %v4564 = vmul.f32 %v4550, %v4563
      %v4565 = vadd.f32 %v4564, 0.014752088
      %v4566 = vmul.f32 %v4550, %v4565
      %v4567 = vadd.f32 %v4566, 0.112945676
      %v4568 = vmul.f32 %v4550, %v4567
      %v4569 = vadd.f32 %v4568, 0.4994258
      %v4570 = vmul.f32 %v4550, %v4569
      %v4571 = vadd.f32 %v4570, 1.0
      %v4572 = vrcp.pop %v4571
      %v4573 = vmul.f32 %v4571, %v4572
      %v4574 = vsub.f32 1.0, %v4573
      %v4575 = vmul.f32 %v4572, %v4574
      %v4576 = vadd.f32 %v4572, %v4575
      %vm4577 = vweird.f32 %v4571
      %vm4578 = vweird.f32 %v4572
      %vm4579 = vmor %vm4577, %vm4578
      %v4580 = vsel %vm4579, %v4572, %v4576
      %v4581 = vand.u32 2147483647, %v4571
      %vm4582 = vcmp.eq.f32.partialorder %v4581, 8.507059e+37
      %v4583 = vand.u32 %v4571, 2147483648
      %v4584 = vor.u32 1.1754944e-38, %v4583
      %v4585 = vsel %vm4582, %v4584, %v4580
      %v4586 = vmul.f32 %v4561, %v4585
      %v4587 = vmin.f32 %v4586, 1.0
      %v4588 = vmax.f32 %v4587, -1.0
      %v4589 = vmul.f32 %v4401, %v4401
      %v4590 = vmin.f32 16.0, %v4589
      %v4591 = vmul.f32 %v4590, 2.1237322e-06
      %v4592 = vadd.f32 %v4591, 0.00028619796
      %v4593 = vmul.f32 %v4590, %v4592
      %v4594 = vadd.f32 %v4593, 0.0036580483
      %v4595 = vmul.f32 %v4590, %v4594
      %v4596 = vadd.f32 %v4595, 0.05243302
      %v4597 = vmul.f32 %v4590, %v4596
      %v4598 = vadd.f32 %v4597, 0.18741608
      %v4599 = vmul.f32 %v4590, %v4598
      %v4600 = vadd.f32 %v4599, 1.1283791
      %v4601 = vmul.f32 %v4401, %v4600
      %v4602 = vmul.f32 %v4590, 3.8918573e-05
      %v4603 = vadd.f32 %v4602, 0.001143296
      %v4604 = vmul.f32 %v4590, %v4603
      %v4605 = vadd.f32 %v4604, 0.014752088
      %v4606 = vmul.f32 %v4590, %v4605
      %v4607 = vadd.f32 %v4606, 0.112945676
      %v4608 = vmul.f32 %v4590, %v4607
      %v4609 = vadd.f32 %v4608, 0.4994258
      %v4610 = vmul.f32 %v4590, %v4609
      %v4611 = vadd.f32 %v4610, 1.0
      %v4612 = vrcp.pop %v4611
      %v4613 = vmul.f32 %v4611, %v4612
      %v4614 = vsub.f32 1.0, %v4613
      %v4615 = vmul.f32 %v4612, %v4614
      %v4616 = vadd.f32 %v4612, %v4615
      %vm4617 = vweird.f32 %v4611
      %vm4618 = vweird.f32 %v4612
      %vm4619 = vmor %vm4617, %vm4618
      %v4620 = vsel %vm4619, %v4612, %v4616
      %v4621 = vand.u32 2147483647, %v4611
      %vm4622 = vcmp.eq.f32.partialorder %v4621, 8.507059e+37
      %v4623 = vand.u32 %v4611, 2147483648
      %v4624 = vor.u32 1.1754944e-38, %v4623
      %v4625 = vsel %vm4622, %v4624, %v4620
      %v4626 = vmul.f32 %v4601, %v4625
      %v4627 = vmin.f32 %v4626, 1.0
      %v4628 = vmax.f32 %v4627, -1.0
      %v4629 = vmul.f32 %v4402, %v4402
      %v4630 = vmin.f32 16.0, %v4629
      %v4631 = vmul.f32 %v4630, 2.1237322e-06
      %v4632 = vadd.f32 %v4631, 0.00028619796
      %v4633 = vmul.f32 %v4630, %v4632
      %v4634 = vadd.f32 %v4633, 0.0036580483
      %v4635 = vmul.f32 %v4630, %v4634
      %v4636 = vadd.f32 %v4635, 0.05243302
      %v4637 = vmul.f32 %v4630, %v4636
      %v4638 = vadd.f32 %v4637, 0.18741608
      %v4639 = vmul.f32 %v4630, %v4638
      %v4640 = vadd.f32 %v4639, 1.1283791
      %v4641 = vmul.f32 %v4402, %v4640
      %v4642 = vmul.f32 %v4630, 3.8918573e-05
      %v4643 = vadd.f32 %v4642, 0.001143296
      %v4644 = vmul.f32 %v4630, %v4643
      %v4645 = vadd.f32 %v4644, 0.014752088
      %v4646 = vmul.f32 %v4630, %v4645
      %v4647 = vadd.f32 %v4646, 0.112945676
      %v4648 = vmul.f32 %v4630, %v4647
      %v4649 = vadd.f32 %v4648, 0.4994258
      %v4650 = vmul.f32 %v4630, %v4649
      %v4651 = vadd.f32 %v4650, 1.0
      %v4652 = vrcp.pop %v4651
      %v4653 = vmul.f32 %v4651, %v4652
      %v4654 = vsub.f32 1.0, %v4653
      %v4655 = vmul.f32 %v4652, %v4654
      %v4656 = vadd.f32 %v4652, %v4655
      %vm4657 = vweird.f32 %v4651
      %vm4658 = vweird.f32 %v4652
      %vm4659 = vmor %vm4657, %vm4658
      %v4660 = vsel %vm4659, %v4652, %v4656
      %v4661 = vand.u32 2147483647, %v4651
      %vm4662 = vcmp.eq.f32.partialorder %v4661, 8.507059e+37
      %v4663 = vand.u32 %v4651, 2147483648
      %v4664 = vor.u32 1.1754944e-38, %v4663
      %v4665 = vsel %vm4662, %v4664, %v4660
      %v4666 = vmul.f32 %v4641, %v4665
      %v4667 = vmin.f32 %v4666, 1.0
      %v4668 = vmax.f32 %v4667, -1.0
      %v4669 = vmul.f32 %v4403, %v4403
      %v4670 = vmin.f32 16.0, %v4669
      %v4671 = vmul.f32 %v4670, 2.1237322e-06
      %v4672 = vadd.f32 %v4671, 0.00028619796
      %v4673 = vmul.f32 %v4670, %v4672
      %v4674 = vadd.f32 %v4673, 0.0036580483
      %v4675 = vmul.f32 %v4670, %v4674
      %v4676 = vadd.f32 %v4675, 0.05243302
      %v4677 = vmul.f32 %v4670, %v4676
      %v4678 = vadd.f32 %v4677, 0.18741608
      %v4679 = vmul.f32 %v4670, %v4678
      %v4680 = vadd.f32 %v4679, 1.1283791
      %v4681 = vmul.f32 %v4403, %v4680
      %v4682 = vmul.f32 %v4670, 3.8918573e-05
      %v4683 = vadd.f32 %v4682, 0.001143296
      %v4684 = vmul.f32 %v4670, %v4683
      %v4685 = vadd.f32 %v4684, 0.014752088
      %v4686 = vmul.f32 %v4670, %v4685
      %v4687 = vadd.f32 %v4686, 0.112945676
      %v4688 = vmul.f32 %v4670, %v4687
      %v4689 = vadd.f32 %v4688, 0.4994258
      %v4690 = vmul.f32 %v4670, %v4689
      %v4691 = vadd.f32 %v4690, 1.0
      %v4692 = vrcp.pop %v4691
      %v4693 = vmul.f32 %v4691, %v4692
      %v4694 = vsub.f32 1.0, %v4693
      %v4695 = vmul.f32 %v4692, %v4694
      %v4696 = vadd.f32 %v4692, %v4695
      %vm4697 = vweird.f32 %v4691
      %vm4698 = vweird.f32 %v4692
      %vm4699 = vmor %vm4697, %vm4698
      %v4700 = vsel %vm4699, %v4692, %v4696
      %v4701 = vand.u32 2147483647, %v4691
      %vm4702 = vcmp.eq.f32.partialorder %v4701, 8.507059e+37
      %v4703 = vand.u32 %v4691, 2147483648
      %v4704 = vor.u32 1.1754944e-38, %v4703
      %v4705 = vsel %vm4702, %v4704, %v4700
      %v4706 = vmul.f32 %v4681, %v4705
      %v4707 = vmin.f32 %v4706, 1.0
      %v4708 = vmax.f32 %v4707, -1.0
      %v4709 = vmul.f32 %v4404, %v4404
      %v4710 = vmin.f32 16.0, %v4709
      %v4711 = vmul.f32 %v4710, 2.1237322e-06
      %v4712 = vadd.f32 %v4711, 0.00028619796
      %v4713 = vmul.f32 %v4710, %v4712
      %v4714 = vadd.f32 %v4713, 0.0036580483
      %v4715 = vmul.f32 %v4710, %v4714
      %v4716 = vadd.f32 %v4715, 0.05243302
      %v4717 = vmul.f32 %v4710, %v4716
      %v4718 = vadd.f32 %v4717, 0.18741608
      %v4719 = vmul.f32 %v4710, %v4718
      %v4720 = vadd.f32 %v4719, 1.1283791
      %v4721 = vmul.f32 %v4404, %v4720
      %v4722 = vmul.f32 %v4710, 3.8918573e-05
      %v4723 = vadd.f32 %v4722, 0.001143296
      %v4724 = vmul.f32 %v4710, %v4723
      %v4725 = vadd.f32 %v4724, 0.014752088
      %v4726 = vmul.f32 %v4710, %v4725
      %v4727 = vadd.f32 %v4726, 0.112945676
      %v4728 = vmul.f32 %v4710, %v4727
      %v4729 = vadd.f32 %v4728, 0.4994258
      %v4730 = vmul.f32 %v4710, %v4729
      %v4731 = vadd.f32 %v4730, 1.0
      %v4732 = vrcp.pop %v4731
      %v4733 = vmul.f32 %v4731, %v4732
      %v4734 = vsub.f32 1.0, %v4733
      %v4735 = vmul.f32 %v4732, %v4734
      %v4736 = vadd.f32 %v4732, %v4735
      %vm4737 = vweird.f32 %v4731
      %vm4738 = vweird.f32 %v4732
      %vm4739 = vmor %vm4737, %vm4738
      %v4740 = vsel %vm4739, %v4732, %v4736
      %v4741 = vand.u32 2147483647, %v4731
      %vm4742 = vcmp.eq.f32.partialorder %v4741, 8.507059e+37
      %v4743 = vand.u32 %v4731, 2147483648
      %v4744 = vor.u32 1.1754944e-38, %v4743
      %v4745 = vsel %vm4742, %v4744, %v4740
      %v4746 = vmul.f32 %v4721, %v4745
      %v4747 = vmin.f32 %v4746, 1.0
      %v4748 = vmax.f32 %v4747, -1.0
      %v4749 = vmul.f32 %v4405, %v4405
      %v4750 = vmin.f32 16.0, %v4749
      %v4751 = vmul.f32 %v4750, 2.1237322e-06
      %v4752 = vadd.f32 %v4751, 0.00028619796
      %v4753 = vmul.f32 %v4750, %v4752
      %v4754 = vadd.f32 %v4753, 0.0036580483
      %v4755 = vmul.f32 %v4750, %v4754
      %v4756 = vadd.f32 %v4755, 0.05243302
      %v4757 = vmul.f32 %v4750, %v4756
      %v4758 = vadd.f32 %v4757, 0.18741608
      %v4759 = vmul.f32 %v4750, %v4758
      %v4760 = vadd.f32 %v4759, 1.1283791
      %v4761 = vmul.f32 %v4405, %v4760
      %v4762 = vmul.f32 %v4750, 3.8918573e-05
      %v4763 = vadd.f32 %v4762, 0.001143296
      %v4764 = vmul.f32 %v4750, %v4763
      %v4765 = vadd.f32 %v4764, 0.014752088
      %v4766 = vmul.f32 %v4750, %v4765
      %v4767 = vadd.f32 %v4766, 0.112945676
      %v4768 = vmul.f32 %v4750, %v4767
      %v4769 = vadd.f32 %v4768, 0.4994258
      %v4770 = vmul.f32 %v4750, %v4769
      %v4771 = vadd.f32 %v4770, 1.0
      %v4772 = vrcp.pop %v4771
      %v4773 = vmul.f32 %v4771, %v4772
      %v4774 = vsub.f32 1.0, %v4773
      %v4775 = vmul.f32 %v4772, %v4774
      %v4776 = vadd.f32 %v4772, %v4775
      %vm4777 = vweird.f32 %v4771
      %vm4778 = vweird.f32 %v4772
      %vm4779 = vmor %vm4777, %vm4778
      %v4780 = vsel %vm4779, %v4772, %v4776
      %v4781 = vand.u32 2147483647, %v4771
      %vm4782 = vcmp.eq.f32.partialorder %v4781, 8.507059e+37
      %v4783 = vand.u32 %v4771, 2147483648
      %v4784 = vor.u32 1.1754944e-38, %v4783
      %v4785 = vsel %vm4782, %v4784, %v4780
      %v4786 = vmul.f32 %v4761, %v4785
      %v4787 = vmin.f32 %v4786, 1.0
      %v4788 = vmax.f32 %v4787, -1.0
      %v4789 = vmul.f32 %v4406, %v4406
      %v4790 = vmin.f32 16.0, %v4789
      %v4791 = vmul.f32 %v4790, 2.1237322e-06
      %v4792 = vadd.f32 %v4791, 0.00028619796
      %v4793 = vmul.f32 %v4790, %v4792
      %v4794 = vadd.f32 %v4793, 0.0036580483
      %v4795 = vmul.f32 %v4790, %v4794
      %v4796 = vadd.f32 %v4795, 0.05243302
      %v4797 = vmul.f32 %v4790, %v4796
      %v4798 = vadd.f32 %v4797, 0.18741608
      %v4799 = vmul.f32 %v4790, %v4798
      %v4800 = vadd.f32 %v4799, 1.1283791
      %v4801 = vmul.f32 %v4406, %v4800
      %v4802 = vmul.f32 %v4790, 3.8918573e-05
      %v4803 = vadd.f32 %v4802, 0.001143296
      %v4804 = vmul.f32 %v4790, %v4803
      %v4805 = vadd.f32 %v4804, 0.014752088
      %v4806 = vmul.f32 %v4790, %v4805
      %v4807 = vadd.f32 %v4806, 0.112945676
      %v4808 = vmul.f32 %v4790, %v4807
      %v4809 = vadd.f32 %v4808, 0.4994258
      %v4810 = vmul.f32 %v4790, %v4809
      %v4811 = vadd.f32 %v4810, 1.0
      %v4812 = vrcp.pop %v4811
      %v4813 = vmul.f32 %v4811, %v4812
      %v4814 = vsub.f32 1.0, %v4813
      %v4815 = vmul.f32 %v4812, %v4814
      %v4816 = vadd.f32 %v4812, %v4815
      %vm4817 = vweird.f32 %v4811
      %vm4818 = vweird.f32 %v4812
      %vm4819 = vmor %vm4817, %vm4818
      %v4820 = vsel %vm4819, %v4812, %v4816
      %v4821 = vand.u32 2147483647, %v4811
      %vm4822 = vcmp.eq.f32.partialorder %v4821, 8.507059e+37
      %v4823 = vand.u32 %v4811, 2147483648
      %v4824 = vor.u32 1.1754944e-38, %v4823
      %v4825 = vsel %vm4822, %v4824, %v4820
      %v4826 = vmul.f32 %v4801, %v4825
      %v4827 = vmin.f32 %v4826, 1.0
      %v4828 = vmax.f32 %v4827, -1.0
      %v4829 = vmul.f32 %v4407, %v4407
      %v4830 = vmin.f32 16.0, %v4829
      %v4831 = vmul.f32 %v4830, 2.1237322e-06
      %v4832 = vadd.f32 %v4831, 0.00028619796
      %v4833 = vmul.f32 %v4830, %v4832
      %v4834 = vadd.f32 %v4833, 0.0036580483
      %v4835 = vmul.f32 %v4830, %v4834
      %v4836 = vadd.f32 %v4835, 0.05243302
      %v4837 = vmul.f32 %v4830, %v4836
      %v4838 = vadd.f32 %v4837, 0.18741608
      %v4839 = vmul.f32 %v4830, %v4838
      %v4840 = vadd.f32 %v4839, 1.1283791
      %v4841 = vmul.f32 %v4407, %v4840
      %v4842 = vmul.f32 %v4830, 3.8918573e-05
      %v4843 = vadd.f32 %v4842, 0.001143296
      %v4844 = vmul.f32 %v4830, %v4843
      %v4845 = vadd.f32 %v4844, 0.014752088
      %v4846 = vmul.f32 %v4830, %v4845
      %v4847 = vadd.f32 %v4846, 0.112945676
      %v4848 = vmul.f32 %v4830, %v4847
      %v4849 = vadd.f32 %v4848, 0.4994258
      %v4850 = vmul.f32 %v4830, %v4849
      %v4851 = vadd.f32 %v4850, 1.0
      %v4852 = vrcp.pop %v4851
      %v4853 = vmul.f32 %v4851, %v4852
      %v4854 = vsub.f32 1.0, %v4853
      %v4855 = vmul.f32 %v4852, %v4854
      %v4856 = vadd.f32 %v4852, %v4855
      %vm4857 = vweird.f32 %v4851
      %vm4858 = vweird.f32 %v4852
      %vm4859 = vmor %vm4857, %vm4858
      %v4860 = vsel %vm4859, %v4852, %v4856
      %v4861 = vand.u32 2147483647, %v4851
      %vm4862 = vcmp.eq.f32.partialorder %v4861, 8.507059e+37
      %v4863 = vand.u32 %v4851, 2147483648
      %v4864 = vor.u32 1.1754944e-38, %v4863
      %v4865 = vsel %vm4862, %v4864, %v4860
      %v4866 = vmul.f32 %v4841, %v4865
      %v4867 = vmin.f32 %v4866, 1.0
      %v4868 = vmax.f32 %v4867, -1.0
      %v4869 = vmul.f32 %v4408, %v4408
      %v4870 = vmin.f32 16.0, %v4869
      %v4871 = vmul.f32 %v4870, 2.1237322e-06
      %v4872 = vadd.f32 %v4871, 0.00028619796
      %v4873 = vmul.f32 %v4870, %v4872
      %v4874 = vadd.f32 %v4873, 0.0036580483
      %v4875 = vmul.f32 %v4870, %v4874
      %v4876 = vadd.f32 %v4875, 0.05243302
      %v4877 = vmul.f32 %v4870, %v4876
      %v4878 = vadd.f32 %v4877, 0.18741608
      %v4879 = vmul.f32 %v4870, %v4878
      %v4880 = vadd.f32 %v4879, 1.1283791
      %v4881 = vmul.f32 %v4408, %v4880
      %v4882 = vmul.f32 %v4870, 3.8918573e-05
      %v4883 = vadd.f32 %v4882, 0.001143296
      %v4884 = vmul.f32 %v4870, %v4883
      %v4885 = vadd.f32 %v4884, 0.014752088
      %v4886 = vmul.f32 %v4870, %v4885
      %v4887 = vadd.f32 %v4886, 0.112945676
      %v4888 = vmul.f32 %v4870, %v4887
      %v4889 = vadd.f32 %v4888, 0.4994258
      %v4890 = vmul.f32 %v4870, %v4889
      %v4891 = vadd.f32 %v4890, 1.0
      %v4892 = vrcp.pop %v4891
      %v4893 = vmul.f32 %v4891, %v4892
      %v4894 = vsub.f32 1.0, %v4893
      %v4895 = vmul.f32 %v4892, %v4894
      %v4896 = vadd.f32 %v4892, %v4895
      %vm4897 = vweird.f32 %v4891
      %vm4898 = vweird.f32 %v4892
      %vm4899 = vmor %vm4897, %vm4898
      %v4900 = vsel %vm4899, %v4892, %v4896
      %v4901 = vand.u32 2147483647, %v4891
      %vm4902 = vcmp.eq.f32.partialorder %v4901, 8.507059e+37
      %v4903 = vand.u32 %v4891, 2147483648
      %v4904 = vor.u32 1.1754944e-38, %v4903
      %v4905 = vsel %vm4902, %v4904, %v4900
      %v4906 = vmul.f32 %v4881, %v4905
      %v4907 = vmin.f32 %v4906, 1.0
      %v4908 = vmax.f32 %v4907, -1.0
      %v4909 = vmul.f32 %v4409, %v4409
      %v4910 = vmin.f32 16.0, %v4909
      %v4911 = vmul.f32 %v4910, 2.1237322e-06
      %v4912 = vadd.f32 %v4911, 0.00028619796
      %v4913 = vmul.f32 %v4910, %v4912
      %v4914 = vadd.f32 %v4913, 0.0036580483
      %v4915 = vmul.f32 %v4910, %v4914
      %v4916 = vadd.f32 %v4915, 0.05243302
      %v4917 = vmul.f32 %v4910, %v4916
      %v4918 = vadd.f32 %v4917, 0.18741608
      %v4919 = vmul.f32 %v4910, %v4918
      %v4920 = vadd.f32 %v4919, 1.1283791
      %v4921 = vmul.f32 %v4409, %v4920
      %v4922 = vmul.f32 %v4910, 3.8918573e-05
      %v4923 = vadd.f32 %v4922, 0.001143296
      %v4924 = vmul.f32 %v4910, %v4923
      %v4925 = vadd.f32 %v4924, 0.014752088
      %v4926 = vmul.f32 %v4910, %v4925
      %v4927 = vadd.f32 %v4926, 0.112945676
      %v4928 = vmul.f32 %v4910, %v4927
      %v4929 = vadd.f32 %v4928, 0.4994258
      %v4930 = vmul.f32 %v4910, %v4929
      %v4931 = vadd.f32 %v4930, 1.0
      %v4932 = vrcp.pop %v4931
      %v4933 = vmul.f32 %v4931, %v4932
      %v4934 = vsub.f32 1.0, %v4933
      %v4935 = vmul.f32 %v4932, %v4934
      %v4936 = vadd.f32 %v4932, %v4935
      %vm4937 = vweird.f32 %v4931
      %vm4938 = vweird.f32 %v4932
      %vm4939 = vmor %vm4937, %vm4938
      %v4940 = vsel %vm4939, %v4932, %v4936
      %v4941 = vand.u32 2147483647, %v4931
      %vm4942 = vcmp.eq.f32.partialorder %v4941, 8.507059e+37
      %v4943 = vand.u32 %v4931, 2147483648
      %v4944 = vor.u32 1.1754944e-38, %v4943
      %v4945 = vsel %vm4942, %v4944, %v4940
      %v4946 = vmul.f32 %v4921, %v4945
      %v4947 = vmin.f32 %v4946, 1.0
      %v4948 = vmax.f32 %v4947, -1.0
      %v4949 = vmul.f32 %v4410, %v4410
      %v4950 = vmin.f32 16.0, %v4949
      %v4951 = vmul.f32 %v4950, 2.1237322e-06
      %v4952 = vadd.f32 %v4951, 0.00028619796
      %v4953 = vmul.f32 %v4950, %v4952
      %v4954 = vadd.f32 %v4953, 0.0036580483
      %v4955 = vmul.f32 %v4950, %v4954
      %v4956 = vadd.f32 %v4955, 0.05243302
      %v4957 = vmul.f32 %v4950, %v4956
      %v4958 = vadd.f32 %v4957, 0.18741608
      %v4959 = vmul.f32 %v4950, %v4958
      %v4960 = vadd.f32 %v4959, 1.1283791
      %v4961 = vmul.f32 %v4410, %v4960
      %v4962 = vmul.f32 %v4950, 3.8918573e-05
      %v4963 = vadd.f32 %v4962, 0.001143296
      %v4964 = vmul.f32 %v4950, %v4963
      %v4965 = vadd.f32 %v4964, 0.014752088
      %v4966 = vmul.f32 %v4950, %v4965
      %v4967 = vadd.f32 %v4966, 0.112945676
      %v4968 = vmul.f32 %v4950, %v4967
      %v4969 = vadd.f32 %v4968, 0.4994258
      %v4970 = vmul.f32 %v4950, %v4969
      %v4971 = vadd.f32 %v4970, 1.0
      %v4972 = vrcp.pop %v4971
      %v4973 = vmul.f32 %v4971, %v4972
      %v4974 = vsub.f32 1.0, %v4973
      %v4975 = vmul.f32 %v4972, %v4974
      %v4976 = vadd.f32 %v4972, %v4975
      %vm4977 = vweird.f32 %v4971
      %vm4978 = vweird.f32 %v4972
      %vm4979 = vmor %vm4977, %vm4978
      %v4980 = vsel %vm4979, %v4972, %v4976
      %v4981 = vand.u32 2147483647, %v4971
      %vm4982 = vcmp.eq.f32.partialorder %v4981, 8.507059e+37
      %v4983 = vand.u32 %v4971, 2147483648
      %v4984 = vor.u32 1.1754944e-38, %v4983
      %v4985 = vsel %vm4982, %v4984, %v4980
      %v4986 = vmul.f32 %v4961, %v4985
      %v4987 = vmin.f32 %v4986, 1.0
      %v4988 = vmax.f32 %v4987, -1.0
      %v4989 = vmul.f32 %v4411, %v4411
      %v4990 = vmin.f32 16.0, %v4989
      %v4991 = vmul.f32 %v4990, 2.1237322e-06
      %v4992 = vadd.f32 %v4991, 0.00028619796
      %v4993 = vmul.f32 %v4990, %v4992
      %v4994 = vadd.f32 %v4993, 0.0036580483
      %v4995 = vmul.f32 %v4990, %v4994
      %v4996 = vadd.f32 %v4995, 0.05243302
      %v4997 = vmul.f32 %v4990, %v4996
      %v4998 = vadd.f32 %v4997, 0.18741608
      %v4999 = vmul.f32 %v4990, %v4998
      %v5000 = vadd.f32 %v4999, 1.1283791
      %v5001 = vmul.f32 %v4411, %v5000
      %v5002 = vmul.f32 %v4990, 3.8918573e-05
      %v5003 = vadd.f32 %v5002, 0.001143296
      %v5004 = vmul.f32 %v4990, %v5003
      %v5005 = vadd.f32 %v5004, 0.014752088
      %v5006 = vmul.f32 %v4990, %v5005
      %v5007 = vadd.f32 %v5006, 0.112945676
      %v5008 = vmul.f32 %v4990, %v5007
      %v5009 = vadd.f32 %v5008, 0.4994258
      %v5010 = vmul.f32 %v4990, %v5009
      %v5011 = vadd.f32 %v5010, 1.0
      %v5012 = vrcp.pop %v5011
      %v5013 = vmul.f32 %v5011, %v5012
      %v5014 = vsub.f32 1.0, %v5013
      %v5015 = vmul.f32 %v5012, %v5014
      %v5016 = vadd.f32 %v5012, %v5015
      %vm5017 = vweird.f32 %v5011
      %vm5018 = vweird.f32 %v5012
      %vm5019 = vmor %vm5017, %vm5018
      %v5020 = vsel %vm5019, %v5012, %v5016
      %v5021 = vand.u32 2147483647, %v5011
      %vm5022 = vcmp.eq.f32.partialorder %v5021, 8.507059e+37
      %v5023 = vand.u32 %v5011, 2147483648
      %v5024 = vor.u32 1.1754944e-38, %v5023
      %v5025 = vsel %vm5022, %v5024, %v5020
      %v5026 = vmul.f32 %v5001, %v5025
      %v5027 = vmin.f32 %v5026, 1.0
      %v5028 = vmax.f32 %v5027, -1.0
      %v5029 = vmul.f32 %v4412, %v4412
      %v5030 = vmin.f32 16.0, %v5029
      %v5031 = vmul.f32 %v5030, 2.1237322e-06
      %v5032 = vadd.f32 %v5031, 0.00028619796
      %v5033 = vmul.f32 %v5030, %v5032
      %v5034 = vadd.f32 %v5033, 0.0036580483
      %v5035 = vmul.f32 %v5030, %v5034
      %v5036 = vadd.f32 %v5035, 0.05243302
      %v5037 = vmul.f32 %v5030, %v5036
      %v5038 = vadd.f32 %v5037, 0.18741608
      %v5039 = vmul.f32 %v5030, %v5038
      %v5040 = vadd.f32 %v5039, 1.1283791
      %v5041 = vmul.f32 %v4412, %v5040
      %v5042 = vmul.f32 %v5030, 3.8918573e-05
      %v5043 = vadd.f32 %v5042, 0.001143296
      %v5044 = vmul.f32 %v5030, %v5043
      %v5045 = vadd.f32 %v5044, 0.014752088
      %v5046 = vmul.f32 %v5030, %v5045
      %v5047 = vadd.f32 %v5046, 0.112945676
      %v5048 = vmul.f32 %v5030, %v5047
      %v5049 = vadd.f32 %v5048, 0.4994258
      %v5050 = vmul.f32 %v5030, %v5049
      %v5051 = vadd.f32 %v5050, 1.0
      %v5052 = vrcp.pop %v5051
      %v5053 = vmul.f32 %v5051, %v5052
      %v5054 = vsub.f32 1.0, %v5053
      %v5055 = vmul.f32 %v5052, %v5054
      %v5056 = vadd.f32 %v5052, %v5055
      %vm5057 = vweird.f32 %v5051
      %vm5058 = vweird.f32 %v5052
      %vm5059 = vmor %vm5057, %vm5058
      %v5060 = vsel %vm5059, %v5052, %v5056
      %v5061 = vand.u32 2147483647, %v5051
      %vm5062 = vcmp.eq.f32.partialorder %v5061, 8.507059e+37
      %v5063 = vand.u32 %v5051, 2147483648
      %v5064 = vor.u32 1.1754944e-38, %v5063
      %v5065 = vsel %vm5062, %v5064, %v5060
      %v5066 = vmul.f32 %v5041, %v5065
      %v5067 = vmin.f32 %v5066, 1.0
      %v5068 = vmax.f32 %v5067, -1.0
      %v5069 = vmul.f32 %v4413, %v4413
      %v5070 = vmin.f32 16.0, %v5069
      %v5071 = vmul.f32 %v5070, 2.1237322e-06
      %v5072 = vadd.f32 %v5071, 0.00028619796
      %v5073 = vmul.f32 %v5070, %v5072
      %v5074 = vadd.f32 %v5073, 0.0036580483
      %v5075 = vmul.f32 %v5070, %v5074
      %v5076 = vadd.f32 %v5075, 0.05243302
      %v5077 = vmul.f32 %v5070, %v5076
      %v5078 = vadd.f32 %v5077, 0.18741608
      %v5079 = vmul.f32 %v5070, %v5078
      %v5080 = vadd.f32 %v5079, 1.1283791
      %v5081 = vmul.f32 %v4413, %v5080
      %v5082 = vmul.f32 %v5070, 3.8918573e-05
      %v5083 = vadd.f32 %v5082, 0.001143296
      %v5084 = vmul.f32 %v5070, %v5083
      %v5085 = vadd.f32 %v5084, 0.014752088
      %v5086 = vmul.f32 %v5070, %v5085
      %v5087 = vadd.f32 %v5086, 0.112945676
      %v5088 = vmul.f32 %v5070, %v5087
      %v5089 = vadd.f32 %v5088, 0.4994258
      %v5090 = vmul.f32 %v5070, %v5089
      %v5091 = vadd.f32 %v5090, 1.0
      %v5092 = vrcp.pop %v5091
      %v5093 = vmul.f32 %v5091, %v5092
      %v5094 = vsub.f32 1.0, %v5093
      %v5095 = vmul.f32 %v5092, %v5094
      %v5096 = vadd.f32 %v5092, %v5095
      %vm5097 = vweird.f32 %v5091
      %vm5098 = vweird.f32 %v5092
      %vm5099 = vmor %vm5097, %vm5098
      %v5100 = vsel %vm5099, %v5092, %v5096
      %v5101 = vand.u32 2147483647, %v5091
      %vm5102 = vcmp.eq.f32.partialorder %v5101, 8.507059e+37
      %v5103 = vand.u32 %v5091, 2147483648
      %v5104 = vor.u32 1.1754944e-38, %v5103
      %v5105 = vsel %vm5102, %v5104, %v5100
      %v5106 = vmul.f32 %v5081, %v5105
      %v5107 = vmin.f32 %v5106, 1.0
      %v5108 = vmax.f32 %v5107, -1.0
      %v5109 = vmul.f32 %v4414, %v4414
      %v5110 = vmin.f32 16.0, %v5109
      %v5111 = vmul.f32 %v5110, 2.1237322e-06
      %v5112 = vadd.f32 %v5111, 0.00028619796
      %v5113 = vmul.f32 %v5110, %v5112
      %v5114 = vadd.f32 %v5113, 0.0036580483
      %v5115 = vmul.f32 %v5110, %v5114
      %v5116 = vadd.f32 %v5115, 0.05243302
      %v5117 = vmul.f32 %v5110, %v5116
      %v5118 = vadd.f32 %v5117, 0.18741608
      %v5119 = vmul.f32 %v5110, %v5118
      %v5120 = vadd.f32 %v5119, 1.1283791
      %v5121 = vmul.f32 %v4414, %v5120
      %v5122 = vmul.f32 %v5110, 3.8918573e-05
      %v5123 = vadd.f32 %v5122, 0.001143296
      %v5124 = vmul.f32 %v5110, %v5123
      %v5125 = vadd.f32 %v5124, 0.014752088
      %v5126 = vmul.f32 %v5110, %v5125
      %v5127 = vadd.f32 %v5126, 0.112945676
      %v5128 = vmul.f32 %v5110, %v5127
      %v5129 = vadd.f32 %v5128, 0.4994258
      %v5130 = vmul.f32 %v5110, %v5129
      %v5131 = vadd.f32 %v5130, 1.0
      %v5132 = vrcp.pop %v5131
      %v5133 = vmul.f32 %v5131, %v5132
      %v5134 = vsub.f32 1.0, %v5133
      %v5135 = vmul.f32 %v5132, %v5134
      %v5136 = vadd.f32 %v5132, %v5135
      %vm5137 = vweird.f32 %v5131
      %vm5138 = vweird.f32 %v5132
      %vm5139 = vmor %vm5137, %vm5138
      %v5140 = vsel %vm5139, %v5132, %v5136
      %v5141 = vand.u32 2147483647, %v5131
      %vm5142 = vcmp.eq.f32.partialorder %v5141, 8.507059e+37
      %v5143 = vand.u32 %v5131, 2147483648
      %v5144 = vor.u32 1.1754944e-38, %v5143
      %v5145 = vsel %vm5142, %v5144, %v5140
      %v5146 = vmul.f32 %v5121, %v5145
      %v5147 = vmin.f32 %v5146, 1.0
      %v5148 = vmax.f32 %v5147, -1.0
      %v5149 = vmul.f32 %v4415, %v4415
      %v5150 = vmin.f32 16.0, %v5149
      %v5151 = vmul.f32 %v5150, 2.1237322e-06
      %v5152 = vadd.f32 %v5151, 0.00028619796
      %v5153 = vmul.f32 %v5150, %v5152
      %v5154 = vadd.f32 %v5153, 0.0036580483
      %v5155 = vmul.f32 %v5150, %v5154
      %v5156 = vadd.f32 %v5155, 0.05243302
      %v5157 = vmul.f32 %v5150, %v5156
      %v5158 = vadd.f32 %v5157, 0.18741608
      %v5159 = vmul.f32 %v5150, %v5158
      %v5160 = vadd.f32 %v5159, 1.1283791
      %v5161 = vmul.f32 %v4415, %v5160
      %v5162 = vmul.f32 %v5150, 3.8918573e-05
      %v5163 = vadd.f32 %v5162, 0.001143296
      %v5164 = vmul.f32 %v5150, %v5163
      %v5165 = vadd.f32 %v5164, 0.014752088
      %v5166 = vmul.f32 %v5150, %v5165
      %v5167 = vadd.f32 %v5166, 0.112945676
      %v5168 = vmul.f32 %v5150, %v5167
      %v5169 = vadd.f32 %v5168, 0.4994258
      %v5170 = vmul.f32 %v5150, %v5169
      %v5171 = vadd.f32 %v5170, 1.0
      %v5172 = vrcp.pop %v5171
      %v5173 = vmul.f32 %v5171, %v5172
      %v5174 = vsub.f32 1.0, %v5173
      %v5175 = vmul.f32 %v5172, %v5174
      %v5176 = vadd.f32 %v5172, %v5175
      %vm5177 = vweird.f32 %v5171
      %vm5178 = vweird.f32 %v5172
      %vm5179 = vmor %vm5177, %vm5178
      %v5180 = vsel %vm5179, %v5172, %v5176
      %v5181 = vand.u32 2147483647, %v5171
      %vm5182 = vcmp.eq.f32.partialorder %v5181, 8.507059e+37
      %v5183 = vand.u32 %v5171, 2147483648
      %v5184 = vor.u32 1.1754944e-38, %v5183
      %v5185 = vsel %vm5182, %v5184, %v5180
      %v5186 = vmul.f32 %v5161, %v5185
      %v5187 = vmin.f32 %v5186, 1.0
      %v5188 = vmax.f32 %v5187, -1.0
      %v5189 = vmul.f32 %v4416, %v4416
      %v5190 = vmin.f32 16.0, %v5189
      %v5191 = vmul.f32 %v5190, 2.1237322e-06
      %v5192 = vadd.f32 %v5191, 0.00028619796
      %v5193 = vmul.f32 %v5190, %v5192
      %v5194 = vadd.f32 %v5193, 0.0036580483
      %v5195 = vmul.f32 %v5190, %v5194
      %v5196 = vadd.f32 %v5195, 0.05243302
      %v5197 = vmul.f32 %v5190, %v5196
      %v5198 = vadd.f32 %v5197, 0.18741608
      %v5199 = vmul.f32 %v5190, %v5198
      %v5200 = vadd.f32 %v5199, 1.1283791
      %v5201 = vmul.f32 %v4416, %v5200
      %v5202 = vmul.f32 %v5190, 3.8918573e-05
      %v5203 = vadd.f32 %v5202, 0.001143296
      %v5204 = vmul.f32 %v5190, %v5203
      %v5205 = vadd.f32 %v5204, 0.014752088
      %v5206 = vmul.f32 %v5190, %v5205
      %v5207 = vadd.f32 %v5206, 0.112945676
      %v5208 = vmul.f32 %v5190, %v5207
      %v5209 = vadd.f32 %v5208, 0.4994258
      %v5210 = vmul.f32 %v5190, %v5209
      %v5211 = vadd.f32 %v5210, 1.0
      %v5212 = vrcp.pop %v5211
      %v5213 = vmul.f32 %v5211, %v5212
      %v5214 = vsub.f32 1.0, %v5213
      %v5215 = vmul.f32 %v5212, %v5214
      %v5216 = vadd.f32 %v5212, %v5215
      %vm5217 = vweird.f32 %v5211
      %vm5218 = vweird.f32 %v5212
      %vm5219 = vmor %vm5217, %vm5218
      %v5220 = vsel %vm5219, %v5212, %v5216
      %v5221 = vand.u32 2147483647, %v5211
      %vm5222 = vcmp.eq.f32.partialorder %v5221, 8.507059e+37
      %v5223 = vand.u32 %v5211, 2147483648
      %v5224 = vor.u32 1.1754944e-38, %v5223
      %v5225 = vsel %vm5222, %v5224, %v5220
      %v5226 = vmul.f32 %v5201, %v5225
      %v5227 = vmin.f32 %v5226, 1.0
      %v5228 = vmax.f32 %v5227, -1.0
      %v5229 = vmul.f32 %v4417, %v4417
      %v5230 = vmin.f32 16.0, %v5229
      %v5231 = vmul.f32 %v5230, 2.1237322e-06
      %v5232 = vadd.f32 %v5231, 0.00028619796
      %v5233 = vmul.f32 %v5230, %v5232
      %v5234 = vadd.f32 %v5233, 0.0036580483
      %v5235 = vmul.f32 %v5230, %v5234
      %v5236 = vadd.f32 %v5235, 0.05243302
      %v5237 = vmul.f32 %v5230, %v5236
      %v5238 = vadd.f32 %v5237, 0.18741608
      %v5239 = vmul.f32 %v5230, %v5238
      %v5240 = vadd.f32 %v5239, 1.1283791
      %v5241 = vmul.f32 %v4417, %v5240
      %v5242 = vmul.f32 %v5230, 3.8918573e-05
      %v5243 = vadd.f32 %v5242, 0.001143296
      %v5244 = vmul.f32 %v5230, %v5243
      %v5245 = vadd.f32 %v5244, 0.014752088
      %v5246 = vmul.f32 %v5230, %v5245
      %v5247 = vadd.f32 %v5246, 0.112945676
      %v5248 = vmul.f32 %v5230, %v5247
      %v5249 = vadd.f32 %v5248, 0.4994258
      %v5250 = vmul.f32 %v5230, %v5249
      %v5251 = vadd.f32 %v5250, 1.0
      %v5252 = vrcp.pop %v5251
      %v5253 = vmul.f32 %v5251, %v5252
      %v5254 = vsub.f32 1.0, %v5253
      %v5255 = vmul.f32 %v5252, %v5254
      %v5256 = vadd.f32 %v5252, %v5255
      %vm5257 = vweird.f32 %v5251
      %vm5258 = vweird.f32 %v5252
      %vm5259 = vmor %vm5257, %vm5258
      %v5260 = vsel %vm5259, %v5252, %v5256
      %v5261 = vand.u32 2147483647, %v5251
      %vm5262 = vcmp.eq.f32.partialorder %v5261, 8.507059e+37
      %v5263 = vand.u32 %v5251, 2147483648
      %v5264 = vor.u32 1.1754944e-38, %v5263
      %v5265 = vsel %vm5262, %v5264, %v5260
      %v5266 = vmul.f32 %v5241, %v5265
      %v5267 = vmin.f32 %v5266, 1.0
      %v5268 = vmax.f32 %v5267, -1.0
      %v5269 = vmul.f32 %v4418, %v4418
      %v5270 = vmin.f32 16.0, %v5269
      %v5271 = vmul.f32 %v5270, 2.1237322e-06
      %v5272 = vadd.f32 %v5271, 0.00028619796
      %v5273 = vmul.f32 %v5270, %v5272
      %v5274 = vadd.f32 %v5273, 0.0036580483
      %v5275 = vmul.f32 %v5270, %v5274
      %v5276 = vadd.f32 %v5275, 0.05243302
      %v5277 = vmul.f32 %v5270, %v5276
      %v5278 = vadd.f32 %v5277, 0.18741608
      %v5279 = vmul.f32 %v5270, %v5278
      %v5280 = vadd.f32 %v5279, 1.1283791
      %v5281 = vmul.f32 %v4418, %v5280
      %v5282 = vmul.f32 %v5270, 3.8918573e-05
      %v5283 = vadd.f32 %v5282, 0.001143296
      %v5284 = vmul.f32 %v5270, %v5283
      %v5285 = vadd.f32 %v5284, 0.014752088
      %v5286 = vmul.f32 %v5270, %v5285
      %v5287 = vadd.f32 %v5286, 0.112945676
      %v5288 = vmul.f32 %v5270, %v5287
      %v5289 = vadd.f32 %v5288, 0.4994258
      %v5290 = vmul.f32 %v5270, %v5289
      %v5291 = vadd.f32 %v5290, 1.0
      %v5292 = vrcp.pop %v5291
      %v5293 = vmul.f32 %v5291, %v5292
      %v5294 = vsub.f32 1.0, %v5293
      %v5295 = vmul.f32 %v5292, %v5294
      %v5296 = vadd.f32 %v5292, %v5295
      %vm5297 = vweird.f32 %v5291
      %vm5298 = vweird.f32 %v5292
      %vm5299 = vmor %vm5297, %vm5298
      %v5300 = vsel %vm5299, %v5292, %v5296
      %v5301 = vand.u32 2147483647, %v5291
      %vm5302 = vcmp.eq.f32.partialorder %v5301, 8.507059e+37
      %v5303 = vand.u32 %v5291, 2147483648
      %v5304 = vor.u32 1.1754944e-38, %v5303
      %v5305 = vsel %vm5302, %v5304, %v5300
      %v5306 = vmul.f32 %v5281, %v5305
      %v5307 = vmin.f32 %v5306, 1.0
      %v5308 = vmax.f32 %v5307, -1.0
      %v5309 = vmul.f32 %v4419, %v4419
      %v5310 = vmin.f32 16.0, %v5309
      %v5311 = vmul.f32 %v5310, 2.1237322e-06
      %v5312 = vadd.f32 %v5311, 0.00028619796
      %v5313 = vmul.f32 %v5310, %v5312
      %v5314 = vadd.f32 %v5313, 0.0036580483
      %v5315 = vmul.f32 %v5310, %v5314
      %v5316 = vadd.f32 %v5315, 0.05243302
      %v5317 = vmul.f32 %v5310, %v5316
      %v5318 = vadd.f32 %v5317, 0.18741608
      %v5319 = vmul.f32 %v5310, %v5318
      %v5320 = vadd.f32 %v5319, 1.1283791
      %v5321 = vmul.f32 %v4419, %v5320
      %v5322 = vmul.f32 %v5310, 3.8918573e-05
      %v5323 = vadd.f32 %v5322, 0.001143296
      %v5324 = vmul.f32 %v5310, %v5323
      %v5325 = vadd.f32 %v5324, 0.014752088
      %v5326 = vmul.f32 %v5310, %v5325
      %v5327 = vadd.f32 %v5326, 0.112945676
      %v5328 = vmul.f32 %v5310, %v5327
      %v5329 = vadd.f32 %v5328, 0.4994258
      %v5330 = vmul.f32 %v5310, %v5329
      %v5331 = vadd.f32 %v5330, 1.0
      %v5332 = vrcp.pop %v5331
      %v5333 = vmul.f32 %v5331, %v5332
      %v5334 = vsub.f32 1.0, %v5333
      %v5335 = vmul.f32 %v5332, %v5334
      %v5336 = vadd.f32 %v5332, %v5335
      %vm5337 = vweird.f32 %v5331
      %vm5338 = vweird.f32 %v5332
      %vm5339 = vmor %vm5337, %vm5338
      %v5340 = vsel %vm5339, %v5332, %v5336
      %v5341 = vand.u32 2147483647, %v5331
      %vm5342 = vcmp.eq.f32.partialorder %v5341, 8.507059e+37
      %v5343 = vand.u32 %v5331, 2147483648
      %v5344 = vor.u32 1.1754944e-38, %v5343
      %v5345 = vsel %vm5342, %v5344, %v5340
      %v5346 = vmul.f32 %v5321, %v5345
      %v5347 = vmin.f32 %v5346, 1.0
      %v5348 = vmax.f32 %v5347, -1.0
      %v5349 = vmul.f32 %v4420, %v4420
      %v5350 = vmin.f32 16.0, %v5349
      %v5351 = vmul.f32 %v5350, 2.1237322e-06
      %v5352 = vadd.f32 %v5351, 0.00028619796
      %v5353 = vmul.f32 %v5350, %v5352
      %v5354 = vadd.f32 %v5353, 0.0036580483
      %v5355 = vmul.f32 %v5350, %v5354
      %v5356 = vadd.f32 %v5355, 0.05243302
      %v5357 = vmul.f32 %v5350, %v5356
      %v5358 = vadd.f32 %v5357, 0.18741608
      %v5359 = vmul.f32 %v5350, %v5358
      %v5360 = vadd.f32 %v5359, 1.1283791
      %v5361 = vmul.f32 %v4420, %v5360
      %v5362 = vmul.f32 %v5350, 3.8918573e-05
      %v5363 = vadd.f32 %v5362, 0.001143296
      %v5364 = vmul.f32 %v5350, %v5363
      %v5365 = vadd.f32 %v5364, 0.014752088
      %v5366 = vmul.f32 %v5350, %v5365
      %v5367 = vadd.f32 %v5366, 0.112945676
      %v5368 = vmul.f32 %v5350, %v5367
      %v5369 = vadd.f32 %v5368, 0.4994258
      %v5370 = vmul.f32 %v5350, %v5369
      %v5371 = vadd.f32 %v5370, 1.0
      %v5372 = vrcp.pop %v5371
      %v5373 = vmul.f32 %v5371, %v5372
      %v5374 = vsub.f32 1.0, %v5373
      %v5375 = vmul.f32 %v5372, %v5374
      %v5376 = vadd.f32 %v5372, %v5375
      %vm5377 = vweird.f32 %v5371
      %vm5378 = vweird.f32 %v5372
      %vm5379 = vmor %vm5377, %vm5378
      %v5380 = vsel %vm5379, %v5372, %v5376
      %v5381 = vand.u32 2147483647, %v5371
      %vm5382 = vcmp.eq.f32.partialorder %v5381, 8.507059e+37
      %v5383 = vand.u32 %v5371, 2147483648
      %v5384 = vor.u32 1.1754944e-38, %v5383
      %v5385 = vsel %vm5382, %v5384, %v5380
      %v5386 = vmul.f32 %v5361, %v5385
      %v5387 = vmin.f32 %v5386, 1.0
      %v5388 = vmax.f32 %v5387, -1.0
      %v5389 = vmul.f32 %v4421, %v4421
      %v5390 = vmin.f32 16.0, %v5389
      %v5391 = vmul.f32 %v5390, 2.1237322e-06
      %v5392 = vadd.f32 %v5391, 0.00028619796
      %v5393 = vmul.f32 %v5390, %v5392
      %v5394 = vadd.f32 %v5393, 0.0036580483
      %v5395 = vmul.f32 %v5390, %v5394
      %v5396 = vadd.f32 %v5395, 0.05243302
      %v5397 = vmul.f32 %v5390, %v5396
      %v5398 = vadd.f32 %v5397, 0.18741608
      %v5399 = vmul.f32 %v5390, %v5398
      %v5400 = vadd.f32 %v5399, 1.1283791
      %v5401 = vmul.f32 %v4421, %v5400
      %v5402 = vmul.f32 %v5390, 3.8918573e-05
      %v5403 = vadd.f32 %v5402, 0.001143296
      %v5404 = vmul.f32 %v5390, %v5403
      %v5405 = vadd.f32 %v5404, 0.014752088
      %v5406 = vmul.f32 %v5390, %v5405
      %v5407 = vadd.f32 %v5406, 0.112945676
      %v5408 = vmul.f32 %v5390, %v5407
      %v5409 = vadd.f32 %v5408, 0.4994258
      %v5410 = vmul.f32 %v5390, %v5409
      %v5411 = vadd.f32 %v5410, 1.0
      %v5412 = vrcp.pop %v5411
      %v5413 = vmul.f32 %v5411, %v5412
      %v5414 = vsub.f32 1.0, %v5413
      %v5415 = vmul.f32 %v5412, %v5414
      %v5416 = vadd.f32 %v5412, %v5415
      %vm5417 = vweird.f32 %v5411
      %vm5418 = vweird.f32 %v5412
      %vm5419 = vmor %vm5417, %vm5418
      %v5420 = vsel %vm5419, %v5412, %v5416
      %v5421 = vand.u32 2147483647, %v5411
      %vm5422 = vcmp.eq.f32.partialorder %v5421, 8.507059e+37
      %v5423 = vand.u32 %v5411, 2147483648
      %v5424 = vor.u32 1.1754944e-38, %v5423
      %v5425 = vsel %vm5422, %v5424, %v5420
      %v5426 = vmul.f32 %v5401, %v5425
      %v5427 = vmin.f32 %v5426, 1.0
      %v5428 = vmax.f32 %v5427, -1.0
      %v5429 = vmul.f32 %v4422, %v4422
      %v5430 = vmin.f32 16.0, %v5429
      %v5431 = vmul.f32 %v5430, 2.1237322e-06
      %v5432 = vadd.f32 %v5431, 0.00028619796
      %v5433 = vmul.f32 %v5430, %v5432
      %v5434 = vadd.f32 %v5433, 0.0036580483
      %v5435 = vmul.f32 %v5430, %v5434
      %v5436 = vadd.f32 %v5435, 0.05243302
      %v5437 = vmul.f32 %v5430, %v5436
      %v5438 = vadd.f32 %v5437, 0.18741608
      %v5439 = vmul.f32 %v5430, %v5438
      %v5440 = vadd.f32 %v5439, 1.1283791
      %v5441 = vmul.f32 %v4422, %v5440
      %v5442 = vmul.f32 %v5430, 3.8918573e-05
      %v5443 = vadd.f32 %v5442, 0.001143296
      %v5444 = vmul.f32 %v5430, %v5443
      %v5445 = vadd.f32 %v5444, 0.014752088
      %v5446 = vmul.f32 %v5430, %v5445
      %v5447 = vadd.f32 %v5446, 0.112945676
      %v5448 = vmul.f32 %v5430, %v5447
      %v5449 = vadd.f32 %v5448, 0.4994258
      %v5450 = vmul.f32 %v5430, %v5449
      %v5451 = vadd.f32 %v5450, 1.0
      %v5452 = vrcp.pop %v5451
      %v5453 = vmul.f32 %v5451, %v5452
      %v5454 = vsub.f32 1.0, %v5453
      %v5455 = vmul.f32 %v5452, %v5454
      %v5456 = vadd.f32 %v5452, %v5455
      %vm5457 = vweird.f32 %v5451
      %vm5458 = vweird.f32 %v5452
      %vm5459 = vmor %vm5457, %vm5458
      %v5460 = vsel %vm5459, %v5452, %v5456
      %v5461 = vand.u32 2147483647, %v5451
      %vm5462 = vcmp.eq.f32.partialorder %v5461, 8.507059e+37
      %v5463 = vand.u32 %v5451, 2147483648
      %v5464 = vor.u32 1.1754944e-38, %v5463
      %v5465 = vsel %vm5462, %v5464, %v5460
      %v5466 = vmul.f32 %v5441, %v5465
      %v5467 = vmin.f32 %v5466, 1.0
      %v5468 = vmax.f32 %v5467, -1.0
      %v5469 = vmul.f32 %v4423, %v4423
      %v5470 = vmin.f32 16.0, %v5469
      %v5471 = vmul.f32 %v5470, 2.1237322e-06
      %v5472 = vadd.f32 %v5471, 0.00028619796
      %v5473 = vmul.f32 %v5470, %v5472
      %v5474 = vadd.f32 %v5473, 0.0036580483
      %v5475 = vmul.f32 %v5470, %v5474
      %v5476 = vadd.f32 %v5475, 0.05243302
      %v5477 = vmul.f32 %v5470, %v5476
      %v5478 = vadd.f32 %v5477, 0.18741608
      %v5479 = vmul.f32 %v5470, %v5478
      %v5480 = vadd.f32 %v5479, 1.1283791
      %v5481 = vmul.f32 %v4423, %v5480
      %v5482 = vmul.f32 %v5470, 3.8918573e-05
      %v5483 = vadd.f32 %v5482, 0.001143296
      %v5484 = vmul.f32 %v5470, %v5483
      %v5485 = vadd.f32 %v5484, 0.014752088
      %v5486 = vmul.f32 %v5470, %v5485
      %v5487 = vadd.f32 %v5486, 0.112945676
      %v5488 = vmul.f32 %v5470, %v5487
      %v5489 = vadd.f32 %v5488, 0.4994258
      %v5490 = vmul.f32 %v5470, %v5489
      %v5491 = vadd.f32 %v5490, 1.0
      %v5492 = vrcp.pop %v5491
      %v5493 = vmul.f32 %v5491, %v5492
      %v5494 = vsub.f32 1.0, %v5493
      %v5495 = vmul.f32 %v5492, %v5494
      %v5496 = vadd.f32 %v5492, %v5495
      %vm5497 = vweird.f32 %v5491
      %vm5498 = vweird.f32 %v5492
      %vm5499 = vmor %vm5497, %vm5498
      %v5500 = vsel %vm5499, %v5492, %v5496
      %v5501 = vand.u32 2147483647, %v5491
      %vm5502 = vcmp.eq.f32.partialorder %v5501, 8.507059e+37
      %v5503 = vand.u32 %v5491, 2147483648
      %v5504 = vor.u32 1.1754944e-38, %v5503
      %v5505 = vsel %vm5502, %v5504, %v5500
      %v5506 = vmul.f32 %v5481, %v5505
      %v5507 = vmin.f32 %v5506, 1.0
      %v5508 = vmax.f32 %v5507, -1.0
      %v5509 = vmul.f32 %v4424, %v4424
      %v5510 = vmin.f32 16.0, %v5509
      %v5511 = vmul.f32 %v5510, 2.1237322e-06
      %v5512 = vadd.f32 %v5511, 0.00028619796
      %v5513 = vmul.f32 %v5510, %v5512
      %v5514 = vadd.f32 %v5513, 0.0036580483
      %v5515 = vmul.f32 %v5510, %v5514
      %v5516 = vadd.f32 %v5515, 0.05243302
      %v5517 = vmul.f32 %v5510, %v5516
      %v5518 = vadd.f32 %v5517, 0.18741608
      %v5519 = vmul.f32 %v5510, %v5518
      %v5520 = vadd.f32 %v5519, 1.1283791
      %v5521 = vmul.f32 %v4424, %v5520
      %v5522 = vmul.f32 %v5510, 3.8918573e-05
      %v5523 = vadd.f32 %v5522, 0.001143296
      %v5524 = vmul.f32 %v5510, %v5523
      %v5525 = vadd.f32 %v5524, 0.014752088
      %v5526 = vmul.f32 %v5510, %v5525
      %v5527 = vadd.f32 %v5526, 0.112945676
      %v5528 = vmul.f32 %v5510, %v5527
      %v5529 = vadd.f32 %v5528, 0.4994258
      %v5530 = vmul.f32 %v5510, %v5529
      %v5531 = vadd.f32 %v5530, 1.0
      %v5532 = vrcp.pop %v5531
      %v5533 = vmul.f32 %v5531, %v5532
      %v5534 = vsub.f32 1.0, %v5533
      %v5535 = vmul.f32 %v5532, %v5534
      %v5536 = vadd.f32 %v5532, %v5535
      %vm5537 = vweird.f32 %v5531
      %vm5538 = vweird.f32 %v5532
      %vm5539 = vmor %vm5537, %vm5538
      %v5540 = vsel %vm5539, %v5532, %v5536
      %v5541 = vand.u32 2147483647, %v5531
      %vm5542 = vcmp.eq.f32.partialorder %v5541, 8.507059e+37
      %v5543 = vand.u32 %v5531, 2147483648
      %v5544 = vor.u32 1.1754944e-38, %v5543
      %v5545 = vsel %vm5542, %v5544, %v5540
      %v5546 = vmul.f32 %v5521, %v5545
      %v5547 = vmin.f32 %v5546, 1.0
      %v5548 = vmax.f32 %v5547, -1.0
      %v5549 = vmul.f32 %v4425, %v4425
      %v5550 = vmin.f32 16.0, %v5549
      %v5551 = vmul.f32 %v5550, 2.1237322e-06
      %v5552 = vadd.f32 %v5551, 0.00028619796
      %v5553 = vmul.f32 %v5550, %v5552
      %v5554 = vadd.f32 %v5553, 0.0036580483
      %v5555 = vmul.f32 %v5550, %v5554
      %v5556 = vadd.f32 %v5555, 0.05243302
      %v5557 = vmul.f32 %v5550, %v5556
      %v5558 = vadd.f32 %v5557, 0.18741608
      %v5559 = vmul.f32 %v5550, %v5558
      %v5560 = vadd.f32 %v5559, 1.1283791
      %v5561 = vmul.f32 %v4425, %v5560
      %v5562 = vmul.f32 %v5550, 3.8918573e-05
      %v5563 = vadd.f32 %v5562, 0.001143296
      %v5564 = vmul.f32 %v5550, %v5563
      %v5565 = vadd.f32 %v5564, 0.014752088
      %v5566 = vmul.f32 %v5550, %v5565
      %v5567 = vadd.f32 %v5566, 0.112945676
      %v5568 = vmul.f32 %v5550, %v5567
      %v5569 = vadd.f32 %v5568, 0.4994258
      %v5570 = vmul.f32 %v5550, %v5569
      %v5571 = vadd.f32 %v5570, 1.0
      %v5572 = vrcp.pop %v5571
      %v5573 = vmul.f32 %v5571, %v5572
      %v5574 = vsub.f32 1.0, %v5573
      %v5575 = vmul.f32 %v5572, %v5574
      %v5576 = vadd.f32 %v5572, %v5575
      %vm5577 = vweird.f32 %v5571
      %vm5578 = vweird.f32 %v5572
      %vm5579 = vmor %vm5577, %vm5578
      %v5580 = vsel %vm5579, %v5572, %v5576
      %v5581 = vand.u32 2147483647, %v5571
      %vm5582 = vcmp.eq.f32.partialorder %v5581, 8.507059e+37
      %v5583 = vand.u32 %v5571, 2147483648
      %v5584 = vor.u32 1.1754944e-38, %v5583
      %v5585 = vsel %vm5582, %v5584, %v5580
      %v5586 = vmul.f32 %v5561, %v5585
      %v5587 = vmin.f32 %v5586, 1.0
      %v5588 = vmax.f32 %v5587, -1.0
      %v5589 = vmul.f32 %v4426, %v4426
      %v5590 = vmin.f32 16.0, %v5589
      %v5591 = vmul.f32 %v5590, 2.1237322e-06
      %v5592 = vadd.f32 %v5591, 0.00028619796
      %v5593 = vmul.f32 %v5590, %v5592
      %v5594 = vadd.f32 %v5593, 0.0036580483
      %v5595 = vmul.f32 %v5590, %v5594
      %v5596 = vadd.f32 %v5595, 0.05243302
      %v5597 = vmul.f32 %v5590, %v5596
      %v5598 = vadd.f32 %v5597, 0.18741608
      %v5599 = vmul.f32 %v5590, %v5598
      %v5600 = vadd.f32 %v5599, 1.1283791
      %v5601 = vmul.f32 %v4426, %v5600
      %v5602 = vmul.f32 %v5590, 3.8918573e-05
      %v5603 = vadd.f32 %v5602, 0.001143296
      %v5604 = vmul.f32 %v5590, %v5603
      %v5605 = vadd.f32 %v5604, 0.014752088
      %v5606 = vmul.f32 %v5590, %v5605
      %v5607 = vadd.f32 %v5606, 0.112945676
      %v5608 = vmul.f32 %v5590, %v5607
      %v5609 = vadd.f32 %v5608, 0.4994258
      %v5610 = vmul.f32 %v5590, %v5609
      %v5611 = vadd.f32 %v5610, 1.0
      %v5612 = vrcp.pop %v5611
      %v5613 = vmul.f32 %v5611, %v5612
      %v5614 = vsub.f32 1.0, %v5613
      %v5615 = vmul.f32 %v5612, %v5614
      %v5616 = vadd.f32 %v5612, %v5615
      %vm5617 = vweird.f32 %v5611
      %vm5618 = vweird.f32 %v5612
      %vm5619 = vmor %vm5617, %vm5618
      %v5620 = vsel %vm5619, %v5612, %v5616
      %v5621 = vand.u32 2147483647, %v5611
      %vm5622 = vcmp.eq.f32.partialorder %v5621, 8.507059e+37
      %v5623 = vand.u32 %v5611, 2147483648
      %v5624 = vor.u32 1.1754944e-38, %v5623
      %v5625 = vsel %vm5622, %v5624, %v5620
      %v5626 = vmul.f32 %v5601, %v5625
      %v5627 = vmin.f32 %v5626, 1.0
      %v5628 = vmax.f32 %v5627, -1.0
      %v5629 = vmul.f32 %v4427, %v4427
      %v5630 = vmin.f32 16.0, %v5629
      %v5631 = vmul.f32 %v5630, 2.1237322e-06
      %v5632 = vadd.f32 %v5631, 0.00028619796
      %v5633 = vmul.f32 %v5630, %v5632
      %v5634 = vadd.f32 %v5633, 0.0036580483
      %v5635 = vmul.f32 %v5630, %v5634
      %v5636 = vadd.f32 %v5635, 0.05243302
      %v5637 = vmul.f32 %v5630, %v5636
      %v5638 = vadd.f32 %v5637, 0.18741608
      %v5639 = vmul.f32 %v5630, %v5638
      %v5640 = vadd.f32 %v5639, 1.1283791
      %v5641 = vmul.f32 %v4427, %v5640
      %v5642 = vmul.f32 %v5630, 3.8918573e-05
      %v5643 = vadd.f32 %v5642, 0.001143296
      %v5644 = vmul.f32 %v5630, %v5643
      %v5645 = vadd.f32 %v5644, 0.014752088
      %v5646 = vmul.f32 %v5630, %v5645
      %v5647 = vadd.f32 %v5646, 0.112945676
      %v5648 = vmul.f32 %v5630, %v5647
      %v5649 = vadd.f32 %v5648, 0.4994258
      %v5650 = vmul.f32 %v5630, %v5649
      %v5651 = vadd.f32 %v5650, 1.0
      %v5652 = vrcp.pop %v5651
      %v5653 = vmul.f32 %v5651, %v5652
      %v5654 = vsub.f32 1.0, %v5653
      %v5655 = vmul.f32 %v5652, %v5654
      %v5656 = vadd.f32 %v5652, %v5655
      %vm5657 = vweird.f32 %v5651
      %vm5658 = vweird.f32 %v5652
      %vm5659 = vmor %vm5657, %vm5658
      %v5660 = vsel %vm5659, %v5652, %v5656
      %v5661 = vand.u32 2147483647, %v5651
      %vm5662 = vcmp.eq.f32.partialorder %v5661, 8.507059e+37
      %v5663 = vand.u32 %v5651, 2147483648
      %v5664 = vor.u32 1.1754944e-38, %v5663
      %v5665 = vsel %vm5662, %v5664, %v5660
      %v5666 = vmul.f32 %v5641, %v5665
      %v5667 = vmin.f32 %v5666, 1.0
      %v5668 = vmax.f32 %v5667, -1.0
      %v5669 = vmul.f32 %v4428, %v4428
      %v5670 = vmin.f32 16.0, %v5669
      %v5671 = vmul.f32 %v5670, 2.1237322e-06
      %v5672 = vadd.f32 %v5671, 0.00028619796
      %v5673 = vmul.f32 %v5670, %v5672
      %v5674 = vadd.f32 %v5673, 0.0036580483
      %v5675 = vmul.f32 %v5670, %v5674
      %v5676 = vadd.f32 %v5675, 0.05243302
      %v5677 = vmul.f32 %v5670, %v5676
      %v5678 = vadd.f32 %v5677, 0.18741608
      %v5679 = vmul.f32 %v5670, %v5678
      %v5680 = vadd.f32 %v5679, 1.1283791
      %v5681 = vmul.f32 %v4428, %v5680
      %v5682 = vmul.f32 %v5670, 3.8918573e-05
      %v5683 = vadd.f32 %v5682, 0.001143296
      %v5684 = vmul.f32 %v5670, %v5683
      %v5685 = vadd.f32 %v5684, 0.014752088
      %v5686 = vmul.f32 %v5670, %v5685
      %v5687 = vadd.f32 %v5686, 0.112945676
      %v5688 = vmul.f32 %v5670, %v5687
      %v5689 = vadd.f32 %v5688, 0.4994258
      %v5690 = vmul.f32 %v5670, %v5689
      %v5691 = vadd.f32 %v5690, 1.0
      %v5692 = vrcp.pop %v5691
      %v5693 = vmul.f32 %v5691, %v5692
      %v5694 = vsub.f32 1.0, %v5693
      %v5695 = vmul.f32 %v5692, %v5694
      %v5696 = vadd.f32 %v5692, %v5695
      %vm5697 = vweird.f32 %v5691
      %vm5698 = vweird.f32 %v5692
      %vm5699 = vmor %vm5697, %vm5698
      %v5700 = vsel %vm5699, %v5692, %v5696
      %v5701 = vand.u32 2147483647, %v5691
      %vm5702 = vcmp.eq.f32.partialorder %v5701, 8.507059e+37
      %v5703 = vand.u32 %v5691, 2147483648
      %v5704 = vor.u32 1.1754944e-38, %v5703
      %v5705 = vsel %vm5702, %v5704, %v5700
      %v5706 = vmul.f32 %v5681, %v5705
      %v5707 = vmin.f32 %v5706, 1.0
      %v5708 = vmax.f32 %v5707, -1.0
      %v5709 = vadd.f32 %v4468, 1.0
      %v5710 = vadd.f32 %v4508, 1.0
      %v5711 = vadd.f32 %v4548, 1.0
      %v5712 = vadd.f32 %v4588, 1.0
      %v5713 = vadd.f32 %v4628, 1.0
      %v5714 = vadd.f32 %v4668, 1.0
      %v5715 = vadd.f32 %v4708, 1.0
      %v5716 = vadd.f32 %v4748, 1.0
      %v5717 = vadd.f32 %v4788, 1.0
      %v5718 = vadd.f32 %v4828, 1.0
      %v5719 = vadd.f32 %v4868, 1.0
      %v5720 = vadd.f32 %v4908, 1.0
      %v5721 = vadd.f32 %v4948, 1.0
      %v5722 = vadd.f32 %v4988, 1.0
      %v5723 = vadd.f32 %v5028, 1.0
      %v5724 = vadd.f32 %v5068, 1.0
      %v5725 = vadd.f32 %v5108, 1.0
      %v5726 = vadd.f32 %v5148, 1.0
      %v5727 = vadd.f32 %v5188, 1.0
      %v5728 = vadd.f32 %v5228, 1.0
      %v5729 = vadd.f32 %v5268, 1.0
      %v5730 = vadd.f32 %v5308, 1.0
      %v5731 = vadd.f32 %v5348, 1.0
      %v5732 = vadd.f32 %v5388, 1.0
      %v5733 = vadd.f32 %v5428, 1.0
      %v5734 = vadd.f32 %v5468, 1.0
      %v5735 = vadd.f32 %v5508, 1.0
      %v5736 = vadd.f32 %v5548, 1.0
      %v5737 = vadd.f32 %v5588, 1.0
      %v5738 = vadd.f32 %v5628, 1.0
      %v5739 = vadd.f32 %v5668, 1.0
      %v5740 = vadd.f32 %v5708, 1.0
      %v5741 = vmul.f32 %v4365, %v5709
      %v5742 = vmul.f32 %v4366, %v5710
      %v5743 = vmul.f32 %v4367, %v5711
      %v5744 = vmul.f32 %v4368, %v5712
      %v5745 = vmul.f32 %v4369, %v5713
      %v5746 = vmul.f32 %v4370, %v5714
      %v5747 = vmul.f32 %v4371, %v5715
      %v5748 = vmul.f32 %v4372, %v5716
      %v5749 = vmul.f32 %v4373, %v5717
      %v5750 = vmul.f32 %v4374, %v5718
      %v5751 = vmul.f32 %v4375, %v5719
      %v5752 = vmul.f32 %v4376, %v5720
      %v5753 = vmul.f32 %v4377, %v5721
      %v5754 = vmul.f32 %v4378, %v5722
      %v5755 = vmul.f32 %v4379, %v5723
      %v5756 = vmul.f32 %v4380, %v5724
      %v5757 = vmul.f32 %v4381, %v5725
      %v5758 = vmul.f32 %v4382, %v5726
      %v5759 = vmul.f32 %v4383, %v5727
      %v5760 = vmul.f32 %v4384, %v5728
      %v5761 = vmul.f32 %v4385, %v5729
      %v5762 = vmul.f32 %v4386, %v5730
      %v5763 = vmul.f32 %v4387, %v5731
      %v5764 = vmul.f32 %v4388, %v5732
      %v5765 = vmul.f32 %v4389, %v5733
      %v5766 = vmul.f32 %v4390, %v5734
      %v5767 = vmul.f32 %v4391, %v5735
      %v5768 = vmul.f32 %v4392, %v5736
      %v5769 = vmul.f32 %v4393, %v5737
      %v5770 = vmul.f32 %v4394, %v5738
      %v5771 = vmul.f32 %v4395, %v5739
      %v5772 = vmul.f32 %v4396, %v5740
      %v5773 = vmax.f32 %v5741, %v5743
      %v5774 = vmax.f32 %v5742, %v5744
      %v5775 = vmax.f32 %v5745, %v5747
      %v5776 = vmax.f32 %v5746, %v5748
      %v5777 = vmax.f32 %v5749, %v5751
      %v5778 = vmax.f32 %v5750, %v5752
      %v5779 = vmax.f32 %v5753, %v5755
      %v5780 = vmax.f32 %v5754, %v5756
      %v5781 = vmax.f32 %v5757, %v5759
      %v5782 = vmax.f32 %v5758, %v5760
      %v5783 = vmax.f32 %v5761, %v5763
      %v5784 = vmax.f32 %v5762, %v5764
      %v5785 = vmax.f32 %v5765, %v5767
      %v5786 = vmax.f32 %v5766, %v5768
      %v5787 = vmax.f32 %v5769, %v5771
      %v5788 = vmax.f32 %v5770, %v5772
      %v5805 = vrot.slane %v5773, 2
      %v5806 = vrot.slane %v5773, 4
      %v5807 = vrot.slane %v5773, 6
      %v5808 = vrot.slane %v5774, 2
      %v5809 = vrot.slane %v5774, 4
      %v5810 = vrot.slane %v5774, 6
      %v5811 = vrot.slane %v5775, 2
      %v5812 = vrot.slane %v5775, 4
      %v5813 = vrot.slane %v5775, 6
      %v5814 = vrot.slane %v5776, 2
      %v5815 = vrot.slane %v5776, 4
      %v5816 = vrot.slane %v5776, 6
      %v5817 = vrot.slane %v5777, 2
      %v5818 = vrot.slane %v5777, 4
      %v5819 = vrot.slane %v5777, 6
      %v5820 = vrot.slane %v5778, 2
      %v5821 = vrot.slane %v5778, 4
      %v5822 = vrot.slane %v5778, 6
      %v5823 = vrot.slane %v5779, 2
      %v5824 = vrot.slane %v5779, 4
      %v5825 = vrot.slane %v5779, 6
      %v5826 = vrot.slane %v5780, 2
      %v5827 = vrot.slane %v5780, 4
      %v5828 = vrot.slane %v5780, 6
      %v5829 = vrot.slane %v5781, 2
      %v5830 = vrot.slane %v5781, 4
      %v5831 = vrot.slane %v5781, 6
      %v5832 = vrot.slane %v5782, 2
      %v5833 = vrot.slane %v5782, 4
      %v5834 = vrot.slane %v5782, 6
      %v5835 = vrot.slane %v5783, 2
      %v5836 = vrot.slane %v5783, 4
      %v5837 = vrot.slane %v5783, 6
      %v5838 = vrot.slane %v5784, 2
      %v5839 = vrot.slane %v5784, 4
      %v5840 = vrot.slane %v5784, 6
      %v5841 = vrot.slane %v5785, 2
      %v5842 = vrot.slane %v5785, 4
      %v5843 = vrot.slane %v5785, 6
      %v5844 = vrot.slane %v5786, 2
      %v5845 = vrot.slane %v5786, 4
      %v5846 = vrot.slane %v5786, 6
      %v5847 = vrot.slane %v5787, 2
      %v5848 = vrot.slane %v5787, 4
      %v5849 = vrot.slane %v5787, 6
      %v5850 = vrot.slane %v5788, 2
      %v5851 = vrot.slane %v5788, 4
      %v5852 = vrot.slane %v5788, 6
      %v5901 = vsel %vm2269, %v5773, -inf
      %v5902 = vrot.slane %v5901, 4
      %v5903 = vmax.f32 %v5901, %v5902
      %v5904 = vrot.slane %v5903, 2
      %v5905 = vmax.f32 %v5903, %v5904
      %v5906 = vrot.slane %v5905, 1
      %v5907 = vmax.f32 %v5905, %v5906
      %v5908 = vsel %vm2269, %v5805, -inf
      %v5909 = vrot.slane %v5908, 4
      %v5910 = vmax.f32 %v5908, %v5909
      %v5911 = vrot.slane %v5910, 2
      %v5912 = vmax.f32 %v5910, %v5911
      %v5913 = vrot.slane %v5912, 1
      %v5914 = vmax.f32 %v5912, %v5913
      %v5915 = vsel %vm2269, %v5806, -inf
      %v5916 = vrot.slane %v5915, 4
      %v5917 = vmax.f32 %v5915, %v5916
      %v5918 = vrot.slane %v5917, 2
      %v5919 = vmax.f32 %v5917, %v5918
      %v5920 = vrot.slane %v5919, 1
      %v5921 = vmax.f32 %v5919, %v5920
      %v5922 = vsel %vm2269, %v5807, -inf
      %v5923 = vrot.slane %v5922, 4
      %v5924 = vmax.f32 %v5922, %v5923
      %v5925 = vrot.slane %v5924, 2
      %v5926 = vmax.f32 %v5924, %v5925
      %v5927 = vrot.slane %v5926, 1
      %v5928 = vmax.f32 %v5926, %v5927
      %v5929 = vsel %vm2269, %v5774, -inf
      %v5930 = vrot.slane %v5929, 4
      %v5931 = vmax.f32 %v5929, %v5930
      %v5932 = vrot.slane %v5931, 2
      %v5933 = vmax.f32 %v5931, %v5932
      %v5934 = vrot.slane %v5933, 1
      %v5935 = vmax.f32 %v5933, %v5934
      %v5936 = vsel %vm2269, %v5808, -inf
      %v5937 = vrot.slane %v5936, 4
      %v5938 = vmax.f32 %v5936, %v5937
      %v5939 = vrot.slane %v5938, 2
      %v5940 = vmax.f32 %v5938, %v5939
      %v5941 = vrot.slane %v5940, 1
      %v5942 = vmax.f32 %v5940, %v5941
      %v5943 = vsel %vm2269, %v5809, -inf
      %v5944 = vrot.slane %v5943, 4
      %v5945 = vmax.f32 %v5943, %v5944
      %v5946 = vrot.slane %v5945, 2
      %v5947 = vmax.f32 %v5945, %v5946
      %v5948 = vrot.slane %v5947, 1
      %v5949 = vmax.f32 %v5947, %v5948
      %v5950 = vsel %vm2269, %v5810, -inf
      %v5951 = vrot.slane %v5950, 4
      %v5952 = vmax.f32 %v5950, %v5951
      %v5953 = vrot.slane %v5952, 2
      %v5954 = vmax.f32 %v5952, %v5953
      %v5955 = vrot.slane %v5954, 1
      %v5956 = vmax.f32 %v5954, %v5955
      %v5957 = vsel %vm2269, %v5775, -inf
      %v5958 = vrot.slane %v5957, 4
      %v5959 = vmax.f32 %v5957, %v5958
      %v5960 = vrot.slane %v5959, 2
      %v5961 = vmax.f32 %v5959, %v5960
      %v5962 = vrot.slane %v5961, 1
      %v5963 = vmax.f32 %v5961, %v5962
      %v5964 = vsel %vm2269, %v5811, -inf
      %v5965 = vrot.slane %v5964, 4
      %v5966 = vmax.f32 %v5964, %v5965
      %v5967 = vrot.slane %v5966, 2
      %v5968 = vmax.f32 %v5966, %v5967
      %v5969 = vrot.slane %v5968, 1
      %v5970 = vmax.f32 %v5968, %v5969
      %v5971 = vsel %vm2269, %v5812, -inf
      %v5972 = vrot.slane %v5971, 4
      %v5973 = vmax.f32 %v5971, %v5972
      %v5974 = vrot.slane %v5973, 2
      %v5975 = vmax.f32 %v5973, %v5974
      %v5976 = vrot.slane %v5975, 1
      %v5977 = vmax.f32 %v5975, %v5976
      %v5978 = vsel %vm2269, %v5813, -inf
      %v5979 = vrot.slane %v5978, 4
      %v5980 = vmax.f32 %v5978, %v5979
      %v5981 = vrot.slane %v5980, 2
      %v5982 = vmax.f32 %v5980, %v5981
      %v5983 = vrot.slane %v5982, 1
      %v5984 = vmax.f32 %v5982, %v5983
      %v5985 = vsel %vm2269, %v5776, -inf
      %v5986 = vrot.slane %v5985, 4
      %v5987 = vmax.f32 %v5985, %v5986
      %v5988 = vrot.slane %v5987, 2
      %v5989 = vmax.f32 %v5987, %v5988
      %v5990 = vrot.slane %v5989, 1
      %v5991 = vmax.f32 %v5989, %v5990
      %v5992 = vsel %vm2269, %v5814, -inf
      %v5993 = vrot.slane %v5992, 4
      %v5994 = vmax.f32 %v5992, %v5993
      %v5995 = vrot.slane %v5994, 2
      %v5996 = vmax.f32 %v5994, %v5995
      %v5997 = vrot.slane %v5996, 1
      %v5998 = vmax.f32 %v5996, %v5997
      %v5999 = vsel %vm2269, %v5815, -inf
      %v6000 = vrot.slane %v5999, 4
      %v6001 = vmax.f32 %v5999, %v6000
      %v6002 = vrot.slane %v6001, 2
      %v6003 = vmax.f32 %v6001, %v6002
      %v6004 = vrot.slane %v6003, 1
      %v6005 = vmax.f32 %v6003, %v6004
      %v6006 = vsel %vm2269, %v5816, -inf
      %v6007 = vrot.slane %v6006, 4
      %v6008 = vmax.f32 %v6006, %v6007
      %v6009 = vrot.slane %v6008, 2
      %v6010 = vmax.f32 %v6008, %v6009
      %v6011 = vrot.slane %v6010, 1
      %v6012 = vmax.f32 %v6010, %v6011
      %v6013 = vsel %vm2269, %v5777, -inf
      %v6014 = vrot.slane %v6013, 4
      %v6015 = vmax.f32 %v6013, %v6014
      %v6016 = vrot.slane %v6015, 2
      %v6017 = vmax.f32 %v6015, %v6016
      %v6018 = vrot.slane %v6017, 1
      %v6019 = vmax.f32 %v6017, %v6018
      %v6020 = vsel %vm2269, %v5817, -inf
      %v6021 = vrot.slane %v6020, 4
      %v6022 = vmax.f32 %v6020, %v6021
      %v6023 = vrot.slane %v6022, 2
      %v6024 = vmax.f32 %v6022, %v6023
      %v6025 = vrot.slane %v6024, 1
      %v6026 = vmax.f32 %v6024, %v6025
      %v6027 = vsel %vm2269, %v5818, -inf
      %v6028 = vrot.slane %v6027, 4
      %v6029 = vmax.f32 %v6027, %v6028
      %v6030 = vrot.slane %v6029, 2
      %v6031 = vmax.f32 %v6029, %v6030
      %v6032 = vrot.slane %v6031, 1
      %v6033 = vmax.f32 %v6031, %v6032
      %v6034 = vsel %vm2269, %v5819, -inf
      %v6035 = vrot.slane %v6034, 4
      %v6036 = vmax.f32 %v6034, %v6035
      %v6037 = vrot.slane %v6036, 2
      %v6038 = vmax.f32 %v6036, %v6037
      %v6039 = vrot.slane %v6038, 1
      %v6040 = vmax.f32 %v6038, %v6039
      %v6041 = vsel %vm2269, %v5778, -inf
      %v6042 = vrot.slane %v6041, 4
      %v6043 = vmax.f32 %v6041, %v6042
      %v6044 = vrot.slane %v6043, 2
      %v6045 = vmax.f32 %v6043, %v6044
      %v6046 = vrot.slane %v6045, 1
      %v6047 = vmax.f32 %v6045, %v6046
      %v6048 = vsel %vm2269, %v5820, -inf
      %v6049 = vrot.slane %v6048, 4
      %v6050 = vmax.f32 %v6048, %v6049
      %v6051 = vrot.slane %v6050, 2
      %v6052 = vmax.f32 %v6050, %v6051
      %v6053 = vrot.slane %v6052, 1
      %v6054 = vmax.f32 %v6052, %v6053
      %v6055 = vsel %vm2269, %v5821, -inf
      %v6056 = vrot.slane %v6055, 4
      %v6057 = vmax.f32 %v6055, %v6056
      %v6058 = vrot.slane %v6057, 2
      %v6059 = vmax.f32 %v6057, %v6058
      %v6060 = vrot.slane %v6059, 1
      %v6061 = vmax.f32 %v6059, %v6060
      %v6062 = vsel %vm2269, %v5822, -inf
      %v6063 = vrot.slane %v6062, 4
      %v6064 = vmax.f32 %v6062, %v6063
      %v6065 = vrot.slane %v6064, 2
      %v6066 = vmax.f32 %v6064, %v6065
      %v6067 = vrot.slane %v6066, 1
      %v6068 = vmax.f32 %v6066, %v6067
      %v6069 = vsel %vm2269, %v5779, -inf
      %v6070 = vrot.slane %v6069, 4
      %v6071 = vmax.f32 %v6069, %v6070
      %v6072 = vrot.slane %v6071, 2
      %v6073 = vmax.f32 %v6071, %v6072
      %v6074 = vrot.slane %v6073, 1
      %v6075 = vmax.f32 %v6073, %v6074
      %v6076 = vsel %vm2269, %v5823, -inf
      %v6077 = vrot.slane %v6076, 4
      %v6078 = vmax.f32 %v6076, %v6077
      %v6079 = vrot.slane %v6078, 2
      %v6080 = vmax.f32 %v6078, %v6079
      %v6081 = vrot.slane %v6080, 1
      %v6082 = vmax.f32 %v6080, %v6081
      %v6083 = vsel %vm2269, %v5824, -inf
      %v6084 = vrot.slane %v6083, 4
      %v6085 = vmax.f32 %v6083, %v6084
      %v6086 = vrot.slane %v6085, 2
      %v6087 = vmax.f32 %v6085, %v6086
      %v6088 = vrot.slane %v6087, 1
      %v6089 = vmax.f32 %v6087, %v6088
      %v6090 = vsel %vm2269, %v5825, -inf
      %v6091 = vrot.slane %v6090, 4
      %v6092 = vmax.f32 %v6090, %v6091
      %v6093 = vrot.slane %v6092, 2
      %v6094 = vmax.f32 %v6092, %v6093
      %v6095 = vrot.slane %v6094, 1
      %v6096 = vmax.f32 %v6094, %v6095
      %v6097 = vsel %vm2269, %v5780, -inf
      %v6098 = vrot.slane %v6097, 4
      %v6099 = vmax.f32 %v6097, %v6098
      %v6100 = vrot.slane %v6099, 2
      %v6101 = vmax.f32 %v6099, %v6100
      %v6102 = vrot.slane %v6101, 1
      %v6103 = vmax.f32 %v6101, %v6102
      %v6104 = vsel %vm2269, %v5826, -inf
      %v6105 = vrot.slane %v6104, 4
      %v6106 = vmax.f32 %v6104, %v6105
      %v6107 = vrot.slane %v6106, 2
      %v6108 = vmax.f32 %v6106, %v6107
      %v6109 = vrot.slane %v6108, 1
      %v6110 = vmax.f32 %v6108, %v6109
      %v6111 = vsel %vm2269, %v5827, -inf
      %v6112 = vrot.slane %v6111, 4
      %v6113 = vmax.f32 %v6111, %v6112
      %v6114 = vrot.slane %v6113, 2
      %v6115 = vmax.f32 %v6113, %v6114
      %v6116 = vrot.slane %v6115, 1
      %v6117 = vmax.f32 %v6115, %v6116
      %v6118 = vsel %vm2269, %v5828, -inf
      %v6119 = vrot.slane %v6118, 4
      %v6120 = vmax.f32 %v6118, %v6119
      %v6121 = vrot.slane %v6120, 2
      %v6122 = vmax.f32 %v6120, %v6121
      %v6123 = vrot.slane %v6122, 1
      %v6124 = vmax.f32 %v6122, %v6123
      %v6125 = vsel %vm2269, %v5781, -inf
      %v6126 = vrot.slane %v6125, 4
      %v6127 = vmax.f32 %v6125, %v6126
      %v6128 = vrot.slane %v6127, 2
      %v6129 = vmax.f32 %v6127, %v6128
      %v6130 = vrot.slane %v6129, 1
      %v6131 = vmax.f32 %v6129, %v6130
      %v6132 = vsel %vm2269, %v5829, -inf
      %v6133 = vrot.slane %v6132, 4
      %v6134 = vmax.f32 %v6132, %v6133
      %v6135 = vrot.slane %v6134, 2
      %v6136 = vmax.f32 %v6134, %v6135
      %v6137 = vrot.slane %v6136, 1
      %v6138 = vmax.f32 %v6136, %v6137
      %v6139 = vsel %vm2269, %v5830, -inf
      %v6140 = vrot.slane %v6139, 4
      %v6141 = vmax.f32 %v6139, %v6140
      %v6142 = vrot.slane %v6141, 2
      %v6143 = vmax.f32 %v6141, %v6142
      %v6144 = vrot.slane %v6143, 1
      %v6145 = vmax.f32 %v6143, %v6144
      %v6146 = vsel %vm2269, %v5831, -inf
      %v6147 = vrot.slane %v6146, 4
      %v6148 = vmax.f32 %v6146, %v6147
      %v6149 = vrot.slane %v6148, 2
      %v6150 = vmax.f32 %v6148, %v6149
      %v6151 = vrot.slane %v6150, 1
      %v6152 = vmax.f32 %v6150, %v6151
      %v6153 = vsel %vm2269, %v5782, -inf
      %v6154 = vrot.slane %v6153, 4
      %v6155 = vmax.f32 %v6153, %v6154
      %v6156 = vrot.slane %v6155, 2
      %v6157 = vmax.f32 %v6155, %v6156
      %v6158 = vrot.slane %v6157, 1
      %v6159 = vmax.f32 %v6157, %v6158
      %v6160 = vsel %vm2269, %v5832, -inf
      %v6161 = vrot.slane %v6160, 4
      %v6162 = vmax.f32 %v6160, %v6161
      %v6163 = vrot.slane %v6162, 2
      %v6164 = vmax.f32 %v6162, %v6163
      %v6165 = vrot.slane %v6164, 1
      %v6166 = vmax.f32 %v6164, %v6165
      %v6167 = vsel %vm2269, %v5833, -inf
      %v6168 = vrot.slane %v6167, 4
      %v6169 = vmax.f32 %v6167, %v6168
      %v6170 = vrot.slane %v6169, 2
      %v6171 = vmax.f32 %v6169, %v6170
      %v6172 = vrot.slane %v6171, 1
      %v6173 = vmax.f32 %v6171, %v6172
      %v6174 = vsel %vm2269, %v5834, -inf
      %v6175 = vrot.slane %v6174, 4
      %v6176 = vmax.f32 %v6174, %v6175
      %v6177 = vrot.slane %v6176, 2
      %v6178 = vmax.f32 %v6176, %v6177
      %v6179 = vrot.slane %v6178, 1
      %v6180 = vmax.f32 %v6178, %v6179
      %v6181 = vsel %vm2269, %v5783, -inf
      %v6182 = vrot.slane %v6181, 4
      %v6183 = vmax.f32 %v6181, %v6182
      %v6184 = vrot.slane %v6183, 2
      %v6185 = vmax.f32 %v6183, %v6184
      %v6186 = vrot.slane %v6185, 1
      %v6187 = vmax.f32 %v6185, %v6186
      %v6188 = vsel %vm2269, %v5835, -inf
      %v6189 = vrot.slane %v6188, 4
      %v6190 = vmax.f32 %v6188, %v6189
      %v6191 = vrot.slane %v6190, 2
      %v6192 = vmax.f32 %v6190, %v6191
      %v6193 = vrot.slane %v6192, 1
      %v6194 = vmax.f32 %v6192, %v6193
      %v6195 = vsel %vm2269, %v5836, -inf
      %v6196 = vrot.slane %v6195, 4
      %v6197 = vmax.f32 %v6195, %v6196
      %v6198 = vrot.slane %v6197, 2
      %v6199 = vmax.f32 %v6197, %v6198
      %v6200 = vrot.slane %v6199, 1
      %v6201 = vmax.f32 %v6199, %v6200
      %v6202 = vsel %vm2269, %v5837, -inf
      %v6203 = vrot.slane %v6202, 4
      %v6204 = vmax.f32 %v6202, %v6203
      %v6205 = vrot.slane %v6204, 2
      %v6206 = vmax.f32 %v6204, %v6205
      %v6207 = vrot.slane %v6206, 1
      %v6208 = vmax.f32 %v6206, %v6207
      %v6209 = vsel %vm2269, %v5784, -inf
      %v6210 = vrot.slane %v6209, 4
      %v6211 = vmax.f32 %v6209, %v6210
      %v6212 = vrot.slane %v6211, 2
      %v6213 = vmax.f32 %v6211, %v6212
      %v6214 = vrot.slane %v6213, 1
      %v6215 = vmax.f32 %v6213, %v6214
      %v6216 = vsel %vm2269, %v5838, -inf
      %v6217 = vrot.slane %v6216, 4
      %v6218 = vmax.f32 %v6216, %v6217
      %v6219 = vrot.slane %v6218, 2
      %v6220 = vmax.f32 %v6218, %v6219
      %v6221 = vrot.slane %v6220, 1
      %v6222 = vmax.f32 %v6220, %v6221
      %v6223 = vsel %vm2269, %v5839, -inf
      %v6224 = vrot.slane %v6223, 4
      %v6225 = vmax.f32 %v6223, %v6224
      %v6226 = vrot.slane %v6225, 2
      %v6227 = vmax.f32 %v6225, %v6226
      %v6228 = vrot.slane %v6227, 1
      %v6229 = vmax.f32 %v6227, %v6228
      %v6230 = vsel %vm2269, %v5840, -inf
      %v6231 = vrot.slane %v6230, 4
      %v6232 = vmax.f32 %v6230, %v6231
      %v6233 = vrot.slane %v6232, 2
      %v6234 = vmax.f32 %v6232, %v6233
      %v6235 = vrot.slane %v6234, 1
      %v6236 = vmax.f32 %v6234, %v6235
      %v6237 = vsel %vm2269, %v5785, -inf
      %v6238 = vrot.slane %v6237, 4
      %v6239 = vmax.f32 %v6237, %v6238
      %v6240 = vrot.slane %v6239, 2
      %v6241 = vmax.f32 %v6239, %v6240
      %v6242 = vrot.slane %v6241, 1
      %v6243 = vmax.f32 %v6241, %v6242
      %v6244 = vsel %vm2269, %v5841, -inf
      %v6245 = vrot.slane %v6244, 4
      %v6246 = vmax.f32 %v6244, %v6245
      %v6247 = vrot.slane %v6246, 2
      %v6248 = vmax.f32 %v6246, %v6247
      %v6249 = vrot.slane %v6248, 1
      %v6250 = vmax.f32 %v6248, %v6249
      %v6251 = vsel %vm2269, %v5842, -inf
      %v6252 = vrot.slane %v6251, 4
      %v6253 = vmax.f32 %v6251, %v6252
      %v6254 = vrot.slane %v6253, 2
      %v6255 = vmax.f32 %v6253, %v6254
      %v6256 = vrot.slane %v6255, 1
      %v6257 = vmax.f32 %v6255, %v6256
      %v6258 = vsel %vm2269, %v5843, -inf
      %v6259 = vrot.slane %v6258, 4
      %v6260 = vmax.f32 %v6258, %v6259
      %v6261 = vrot.slane %v6260, 2
      %v6262 = vmax.f32 %v6260, %v6261
      %v6263 = vrot.slane %v6262, 1
      %v6264 = vmax.f32 %v6262, %v6263
      %v6265 = vsel %vm2269, %v5786, -inf
      %v6266 = vrot.slane %v6265, 4
      %v6267 = vmax.f32 %v6265, %v6266
      %v6268 = vrot.slane %v6267, 2
      %v6269 = vmax.f32 %v6267, %v6268
      %v6270 = vrot.slane %v6269, 1
      %v6271 = vmax.f32 %v6269, %v6270
      %v6272 = vsel %vm2269, %v5844, -inf
      %v6273 = vrot.slane %v6272, 4
      %v6274 = vmax.f32 %v6272, %v6273
      %v6275 = vrot.slane %v6274, 2
      %v6276 = vmax.f32 %v6274, %v6275
      %v6277 = vrot.slane %v6276, 1
      %v6278 = vmax.f32 %v6276, %v6277
      %v6279 = vsel %vm2269, %v5845, -inf
      %v6280 = vrot.slane %v6279, 4
      %v6281 = vmax.f32 %v6279, %v6280
      %v6282 = vrot.slane %v6281, 2
      %v6283 = vmax.f32 %v6281, %v6282
      %v6284 = vrot.slane %v6283, 1
      %v6285 = vmax.f32 %v6283, %v6284
      %v6286 = vsel %vm2269, %v5846, -inf
      %v6287 = vrot.slane %v6286, 4
      %v6288 = vmax.f32 %v6286, %v6287
      %v6289 = vrot.slane %v6288, 2
      %v6290 = vmax.f32 %v6288, %v6289
      %v6291 = vrot.slane %v6290, 1
      %v6292 = vmax.f32 %v6290, %v6291
      %v6293 = vsel %vm2269, %v5787, -inf
      %v6294 = vrot.slane %v6293, 4
      %v6295 = vmax.f32 %v6293, %v6294
      %v6296 = vrot.slane %v6295, 2
      %v6297 = vmax.f32 %v6295, %v6296
      %v6298 = vrot.slane %v6297, 1
      %v6299 = vmax.f32 %v6297, %v6298
      %v6300 = vsel %vm2269, %v5847, -inf
      %v6301 = vrot.slane %v6300, 4
      %v6302 = vmax.f32 %v6300, %v6301
      %v6303 = vrot.slane %v6302, 2
      %v6304 = vmax.f32 %v6302, %v6303
      %v6305 = vrot.slane %v6304, 1
      %v6306 = vmax.f32 %v6304, %v6305
      %v6307 = vsel %vm2269, %v5848, -inf
      %v6308 = vrot.slane %v6307, 4
      %v6309 = vmax.f32 %v6307, %v6308
      %v6310 = vrot.slane %v6309, 2
      %v6311 = vmax.f32 %v6309, %v6310
      %v6312 = vrot.slane %v6311, 1
      %v6313 = vmax.f32 %v6311, %v6312
      %v6314 = vsel %vm2269, %v5849, -inf
      %v6315 = vrot.slane %v6314, 4
      %v6316 = vmax.f32 %v6314, %v6315
      %v6317 = vrot.slane %v6316, 2
      %v6318 = vmax.f32 %v6316, %v6317
      %v6319 = vrot.slane %v6318, 1
      %v6320 = vmax.f32 %v6318, %v6319
      %v6321 = vsel %vm2269, %v5788, -inf
      %v6322 = vrot.slane %v6321, 4
      %v6323 = vmax.f32 %v6321, %v6322
      %v6324 = vrot.slane %v6323, 2
      %v6325 = vmax.f32 %v6323, %v6324
      %v6326 = vrot.slane %v6325, 1
      %v6327 = vmax.f32 %v6325, %v6326
      %v6328 = vsel %vm2269, %v5850, -inf
      %v6329 = vrot.slane %v6328, 4
      %v6330 = vmax.f32 %v6328, %v6329
      %v6331 = vrot.slane %v6330, 2
      %v6332 = vmax.f32 %v6330, %v6331
      %v6333 = vrot.slane %v6332, 1
      %v6334 = vmax.f32 %v6332, %v6333
      %v6335 = vsel %vm2269, %v5851, -inf
      %v6336 = vrot.slane %v6335, 4
      %v6337 = vmax.f32 %v6335, %v6336
      %v6338 = vrot.slane %v6337, 2
      %v6339 = vmax.f32 %v6337, %v6338
      %v6340 = vrot.slane %v6339, 1
      %v6341 = vmax.f32 %v6339, %v6340
      %v6342 = vsel %vm2269, %v5852, -inf
      %v6343 = vrot.slane %v6342, 4
      %v6344 = vmax.f32 %v6342, %v6343
      %v6345 = vrot.slane %v6344, 2
      %v6346 = vmax.f32 %v6344, %v6345
      %v6347 = vrot.slane %v6346, 1
      %v6348 = vmax.f32 %v6346, %v6347
      %6349 = vxpose.xlu0.b32.start [1/16] %v5741, 128
      %6350 = vxpose.xlu0.b32.cont [2/16] %v5742, 128
      %6351 = vxpose.xlu0.b32.cont [3/16] %v5743, 128
      %6352 = vxpose.xlu0.b32.cont [4/16] %v5744, 128
      %6353 = vxpose.xlu0.b32.cont [5/16] %v5745, 128
      %6354 = vxpose.xlu0.b32.cont [6/16] %v5746, 128
      %6355 = vxpose.xlu0.b32.cont [7/16] %v5747, 128
      %6356 = vxpose.xlu0.b32.cont [8/16] %v5748, 128
      %6357 = vxpose.xlu0.b32.cont [9/16] %v5749, 128
      %6358 = vxpose.xlu0.b32.cont [10/16] %v5750, 128
      %6359 = vxpose.xlu0.b32.cont [11/16] %v5751, 128
      %6360 = vxpose.xlu0.b32.cont [12/16] %v5752, 128
      %6361 = vxpose.xlu0.b32.cont [13/16] %v5753, 128
      %6362 = vxpose.xlu0.b32.cont [14/16] %v5754, 128
      %6363 = vxpose.xlu0.b32.cont [15/16] %v5755, 128
      %6364 = vxpose.xlu0.b32.end [16/16] %v5756, 128
      %v6365 = vpop.trf.xlu0
      %v6366 = vpop.trf.xlu0
      %v6367 = vpop.trf.xlu0
      %v6368 = vpop.trf.xlu0
      %v6369 = vpop.trf.xlu0
      %v6370 = vpop.trf.xlu0
      %v6371 = vpop.trf.xlu0
      %v6372 = vpop.trf.xlu0
      %v6373 = vpop.trf.xlu0
      %v6374 = vpop.trf.xlu0
      %v6375 = vpop.trf.xlu0
      %v6376 = vpop.trf.xlu0
      %v6377 = vpop.trf.xlu0
      %v6378 = vpop.trf.xlu0
      %v6379 = vpop.trf.xlu0
      %v6380 = vpop.trf.xlu0
      %6381 = vxpose.xlu0.b32.start [1/16] %v5757, 128
      %6382 = vxpose.xlu0.b32.cont [2/16] %v5758, 128
      %6383 = vxpose.xlu0.b32.cont [3/16] %v5759, 128
      %6384 = vxpose.xlu0.b32.cont [4/16] %v5760, 128
      %6385 = vxpose.xlu0.b32.cont [5/16] %v5761, 128
      %6386 = vxpose.xlu0.b32.cont [6/16] %v5762, 128
      %6387 = vxpose.xlu0.b32.cont [7/16] %v5763, 128
      %6388 = vxpose.xlu0.b32.cont [8/16] %v5764, 128
      %6389 = vxpose.xlu0.b32.cont [9/16] %v5765, 128
      %6390 = vxpose.xlu0.b32.cont [10/16] %v5766, 128
      %6391 = vxpose.xlu0.b32.cont [11/16] %v5767, 128
      %6392 = vxpose.xlu0.b32.cont [12/16] %v5768, 128
      %6393 = vxpose.xlu0.b32.cont [13/16] %v5769, 128
      %6394 = vxpose.xlu0.b32.cont [14/16] %v5770, 128
      %6395 = vxpose.xlu0.b32.cont [15/16] %v5771, 128
      %6396 = vxpose.xlu0.b32.end [16/16] %v5772, 128
      %v6397 = vpop.trf.xlu0
      %v6398 = vpop.trf.xlu0
      %v6399 = vpop.trf.xlu0
      %v6400 = vpop.trf.xlu0
      %v6401 = vpop.trf.xlu0
      %v6402 = vpop.trf.xlu0
      %v6403 = vpop.trf.xlu0
      %v6404 = vpop.trf.xlu0
      %v6405 = vpop.trf.xlu0
      %v6406 = vpop.trf.xlu0
      %v6407 = vpop.trf.xlu0
      %v6408 = vpop.trf.xlu0
      %v6409 = vpop.trf.xlu0
      %v6410 = vpop.trf.xlu0
      %v6411 = vpop.trf.xlu0
      %v6412 = vpop.trf.xlu0
      %6413 = vst [vmem:[%s313] sm:$0xff] %v6365
      %6414 = vst [vmem:[%s313 + $0x8] sm:$0xff] %v6397
      %6415 = vst [vmem:[%s313 + $0x10] sm:$0xff] %v6366
      %6416 = vst [vmem:[%s313 + $0x18] sm:$0xff] %v6398
      %6417 = vst [vmem:[%s313 + $0x20] sm:$0xff] %v6367
      %6418 = vst [vmem:[%s313 + $0x28] sm:$0xff] %v6399
      %6419 = vst [vmem:[%s313 + $0x30] sm:$0xff] %v6368
      %6420 = vst [vmem:[%s313 + $0x38] sm:$0xff] %v6400
      %vm6485 = vcmask 1041409
      %v6486 = vsel %vm6485, %v5914, %v5907
      %vm6487 = vcmask 1042434
      %v6488 = vsel %vm6487, %v5921, %v6486
      %vm6489 = vcmask 1043459
      %v6490 = vsel %vm6489, %v5928, %v6488
      %vm6491 = vcmask 1044484
      %v6492 = vsel %vm6491, %v5935, %v6490
      %vm6493 = vcmask 1045509
      %v6494 = vsel %vm6493, %v5942, %v6492
      %vm6495 = vcmask 1046534
      %v6496 = vsel %vm6495, %v5949, %v6494
      %vm6497 = vcmask 1047559
      %v6498 = vsel %vm6497, %v5956, %v6496
      %v6499 = vsel %vm6485, %v5970, %v5963
      %v6500 = vsel %vm6487, %v5977, %v6499
      %v6501 = vsel %vm6489, %v5984, %v6500
      %v6502 = vsel %vm6491, %v5991, %v6501
      %v6503 = vsel %vm6493, %v5998, %v6502
      %v6504 = vsel %vm6495, %v6005, %v6503
      %v6505 = vsel %vm6497, %v6012, %v6504
      %v6506 = vsel %vm6485, %v6026, %v6019
      %v6507 = vsel %vm6487, %v6033, %v6506
      %v6508 = vsel %vm6489, %v6040, %v6507
      %v6509 = vsel %vm6491, %v6047, %v6508
      %v6510 = vsel %vm6493, %v6054, %v6509
      %v6511 = vsel %vm6495, %v6061, %v6510
      %v6512 = vsel %vm6497, %v6068, %v6511
      %v6513 = vsel %vm6485, %v6082, %v6075
      %v6514 = vsel %vm6487, %v6089, %v6513
      %v6515 = vsel %vm6489, %v6096, %v6514
      %v6516 = vsel %vm6491, %v6103, %v6515
      %v6517 = vsel %vm6493, %v6110, %v6516
      %v6518 = vsel %vm6495, %v6117, %v6517
      %v6519 = vsel %vm6497, %v6124, %v6518
      %v6520 = vsel %vm6485, %v6138, %v6131
      %v6521 = vsel %vm6487, %v6145, %v6520
      %v6522 = vsel %vm6489, %v6152, %v6521
      %v6523 = vsel %vm6491, %v6159, %v6522
      %v6524 = vsel %vm6493, %v6166, %v6523
      %v6525 = vsel %vm6495, %v6173, %v6524
      %v6526 = vsel %vm6497, %v6180, %v6525
      %v6527 = vsel %vm6485, %v6194, %v6187
      %v6528 = vsel %vm6487, %v6201, %v6527
      %v6529 = vsel %vm6489, %v6208, %v6528
      %v6530 = vsel %vm6491, %v6215, %v6529
      %v6531 = vsel %vm6493, %v6222, %v6530
      %v6532 = vsel %vm6495, %v6229, %v6531
      %v6533 = vsel %vm6497, %v6236, %v6532
      %v6534 = vsel %vm6485, %v6250, %v6243
      %v6535 = vsel %vm6487, %v6257, %v6534
      %v6536 = vsel %vm6489, %v6264, %v6535
      %v6537 = vsel %vm6491, %v6271, %v6536
      %v6538 = vsel %vm6493, %v6278, %v6537
      %v6539 = vsel %vm6495, %v6285, %v6538
      %v6540 = vsel %vm6497, %v6292, %v6539
      %v6541 = vsel %vm6485, %v6306, %v6299
      %v6542 = vsel %vm6487, %v6313, %v6541
      %v6543 = vsel %vm6489, %v6320, %v6542
      %v6544 = vsel %vm6491, %v6327, %v6543
      %v6545 = vsel %vm6493, %v6334, %v6544
      %v6546 = vsel %vm6495, %v6341, %v6545
      %v6547 = vsel %vm6497, %v6348, %v6546
      %6556 = vxpose.xlu0.b32.start [1/16] %v6498, 128
      %6557 = vxpose.xlu0.b32.cont [2/16] %v6505, 128
      %6558 = vxpose.xlu0.b32.cont [3/16] %v6512, 128
      %6559 = vxpose.xlu0.b32.cont [4/16] %v6519, 128
      %6560 = vxpose.xlu0.b32.cont [5/16] %v6526, 128
      %6561 = vxpose.xlu0.b32.cont [6/16] %v6533, 128
      %6562 = vxpose.xlu0.b32.cont [7/16] %v6540, 128
      %6563 = vxpose.xlu0.b32.cont [8/16] %v6547, 128
      %6564 = vxpose.xlu0.b32.cont [9/16] 0.0, 128
      %6565 = vxpose.xlu0.b32.cont [10/16] 0.0, 128
      %6566 = vxpose.xlu0.b32.cont [11/16] 0.0, 128
      %6567 = vxpose.xlu0.b32.cont [12/16] 0.0, 128
      %6568 = vxpose.xlu0.b32.cont [13/16] 0.0, 128
      %6569 = vxpose.xlu0.b32.cont [14/16] 0.0, 128
      %6570 = vxpose.xlu0.b32.cont [15/16] 0.0, 128
      %6571 = vxpose.xlu0.b32.end [16/16] 0.0, 128
      %v6572 = vpop.trf.xlu0
      %v6573 = vpop.trf.xlu0
      %v6574 = vpop.trf.xlu0
      %v6575 = vpop.trf.xlu0
      %v6576 = vpop.trf.xlu0
      %v6577 = vpop.trf.xlu0
      %v6578 = vpop.trf.xlu0
      %v6579 = vpop.trf.xlu0
      %v6580 = vpop.trf.xlu0
      %v6581 = vpop.trf.xlu0
      %v6582 = vpop.trf.xlu0
      %v6583 = vpop.trf.xlu0
      %v6584 = vpop.trf.xlu0
      %v6585 = vpop.trf.xlu0
      %v6586 = vpop.trf.xlu0
      %v6587 = vpop.trf.xlu0
      %6588 = vst.msk [vmem:[%s318] sm:$0xff] %vm3444, %v6572
      %6589 = vst.msk [vmem:[%s318 + $0x8] sm:$0xff] %vm3444, %v6573
      %6590 = vst.msk [vmem:[%s318 + $0x10] sm:$0xff] %vm3444, %v6574
      %6591 = vst.msk [vmem:[%s318 + $0x18] sm:$0xff] %vm3444, %v6575
      %p6592 = scmp.lt.s32.totalorder %s20, 1
      %s6593 = scalar_select %p6592, %s20, 1
      %s6594 = smul.addr %s6593, 8
      %s6595 = smul.addr %s6594, 8
      %s6596 = scalar_lea.vmem %s7, %s6595
      %p6597 = scmp.lt.s32.totalorder %s20, 1
      %s6598 = scalar_select %p6597, %s20, 1
      %s6599 = smul.addr %s6598, 4
      %s6600 = smul.addr %s6599, 8
      %s6601 = scalar_lea.vmem %s8, %s6600
      // Predicated region
      $region49: #{spec_encoder_forward.1} parent=47 // pred_check
        %p6602 = pneg %p190
      $region50: #{spec_encoder_forward.1} parent=47 // pred_check_branch
        %6604 = sbr.rel (%p6602) target = $region52
      $region51: #{spec_encoder_forward.1} parent=47 // pred_region
        _
      $region52: #{spec_encoder_forward.1} parent=47 // pred_fallthru
        _
      // Predicated region
      $region53: #{spec_encoder_forward.1} parent=47 // pred_check
        %p6605 = pneg %p216
      $region54: #{spec_encoder_forward.1} parent=47 // pred_check_branch
        %6607 = sbr.rel (%p6605) target = $region56
      $region55: #{spec_encoder_forward.1} parent=47 // pred_region
        _
      $region56: #{spec_encoder_forward.1} parent=47 // pred_fallthru
        _
    $region48: #{spec_encoder_forward.1} parent=5 // pred_fallthru
      _
    %p6608 = scmp.le.s32.totalorder 2, %s15
    // Predicated region
    $region57: #{spec_encoder_forward.1} parent=5 // pred_check
      %p6609 = pneg %p6608
    $region58: #{spec_encoder_forward.1} parent=5 // pred_check_branch
      %6611 = sbr.rel (%p6609) target = $region60
    $region59: #{spec_encoder_forward.1} parent=5 // pred_region
      %s6612 = ssub.s32 %s15, 2
      // Predicated region
      $region61: #{spec_encoder_forward.1} parent=59 // pred_check
        %p6613 = pneg %p196
      $region62: #{spec_encoder_forward.1} parent=59 // pred_check_branch
        %6615 = sbr.rel (%p6613) target = $region64
      $region63: #{spec_encoder_forward.1} parent=59 // pred_region
        %p6616 = scmp.lt.s32.totalorder %s21, 1
        %s6617 = scalar_select %p6616, %s21, 1
        %s6618 = smul.addr %s6617, 8
        %s6619 = smul.addr %s6618, 8
        %s6620 = scalar_lea.vmem %s7, %s6619
      $region64: #{spec_encoder_forward.1} parent=59 // pred_fallthru
        _
      // Predicated region
      $region65: #{spec_encoder_forward.1} parent=59 // pred_check
        %p6621 = pneg %p222
      $region66: #{spec_encoder_forward.1} parent=59 // pred_check_branch
        %6623 = sbr.rel (%p6621) target = $region68
      $region67: #{spec_encoder_forward.1} parent=59 // pred_region
        %p6624 = scmp.lt.s32.totalorder %s21, 1
        %s6625 = scalar_select %p6624, %s21, 1
        %s6626 = smul.addr %s6625, 4
        %s6627 = smul.addr %s6626, 8
        %s6628 = scalar_lea.vmem %s8, %s6627
      $region68: #{spec_encoder_forward.1} parent=59 // pred_fallthru
        _
    $region60: #{spec_encoder_forward.1} parent=5 // pred_fallthru
      _
  $region6: #{spec_encoder_forward.1} parent=0 // loop_footer
    %s19 = sadd.s32 1, %s15
  $region7: #{spec_encoder_forward.1} parent=0 // loop_footer_branch
    %14 = sbr.rel target = $region3
  $region8: #{spec_encoder_forward.1} parent=0 // loop_exit
    _

</llo_original>
